<compile_context>
chip_gen: v5e
topology: v5e:2x2
jax: 0.10.0
libtpu: 0.0.40
codegen_flags: <defaults>
</compile_context>

<pallas_src>
import functools

import jax
import jax.numpy as jnp
import numpy as np
from jax.experimental import pallas as pl
from jax.experimental.pallas import tpu as pltpu


# ----------------------------------------------------------------------------
# In-kernel helpers (traced inside the single fused kernel)
# ----------------------------------------------------------------------------
def _fold_w(s, Wb, C):
    """(1, Wb*C) -> (1, C): sum the Wb spatial lane-blocks per channel."""
    t = s[:, 0:C]
    for w in range(1, Wb):
        t = t + s[:, w * C:(w + 1) * C]
    return t


def _relu_bn(phases, gamma_l, beta_l, *, Wb, C, eps=1e-5):
    """ReLU + BatchNorm (batch statistics) on a list of (R_i, Wb*C) values.

    Channel c lives at lanes {w*C + c}; stats are taken over every row of every
    value and over the Wb lane blocks (== all B*H*W positions).  gamma_l/beta_l
    are pre-tiled to (1, Wb*C).  Two-pass (mean, then centered variance) to
    match PyTorch training-mode BN numerics.
    """
    acts = [jnp.maximum(p, 0.0) for p in phases]
    n = float(sum(a.shape[0] for a in acts) * Wb)
    s = acts[0].sum(axis=0, keepdims=True)
    for a in acts[1:]:
        s = s + a.sum(axis=0, keepdims=True)
    mean_l = jnp.concatenate([_fold_w(s, Wb, C) / n] * Wb, axis=1)
    v = None
    for a in acts:
        d = a - mean_l
        q = (d * d).sum(axis=0, keepdims=True)
        v = q if v is None else v + q
    inv_l = jnp.concatenate([jax.lax.rsqrt(_fold_w(v, Wb, C) / n + eps)] * Wb,
                            axis=1)
    return [(a - mean_l) * inv_l * gamma_l + beta_l for a in acts]


def _convt_phases(x_scr, m_ref, bias_l, *, Ho2, B):
    """Sub-pixel ConvTranspose2d(k=4, s=2): returns the two row-phase outputs.

    x_scr rows are (padded_row * B + b); lanes are (w_in * Cin + cin).
    m_ref[2*rh + dh] is the W-axis Toeplitz weight (W_in*Cin, W_out*Cout) for
    row phase rh / row tap dh, so each phase is just two MXU matmuls.
    """
    outs = []
    for rh in range(2):
        acc = None
        for dh in range(2):
            off = (rh + dh) * B                       # static row offset
            lhs = x_scr[off:off + Ho2 * B, :]
            y = jnp.dot(lhs, m_ref[2 * rh + dh],
                        preferred_element_type=jnp.float32)
            acc = y if acc is None else acc + y
        outs.append(acc + bias_l)
    return outs


def _interleave_store(dst_ref, phases, *, Ho2, B, pad):
    """Write the two row-phase outputs back in full-resolution row order.

    Full-res row y = 2*i + rh lands at dst rows [(pad + y)*B, (pad + y + 1)*B);
    every store is a static slice (no strided ref access needed).
    """
    for rh in range(2):
        y = phases[rh]
        for i in range(Ho2):
            r = (pad + 2 * i + rh) * B
            dst_ref[r:r + B, :] = y[i * B:(i + 1) * B, :]


# ----------------------------------------------------------------------------
# The single fused kernel
# ----------------------------------------------------------------------------
def _generator_kernel(z_ref, fcw_ref, g1_ref, b1_ref,
                      m1_ref, c1b_ref, g2_ref, b2_ref,
                      m2_ref, c2b_ref, g3_ref, b3_ref,
                      m3_ref, c3b_ref,
                      o_ref,
                      x1_scr, x2_scr, x3_scr, *, dims, B):
    Z_dim, h1, h2, h3, nc = dims

    # Zero the padded activation scratches once (H-direction zero-pad rows).
    x1_scr[...] = jnp.zeros(x1_scr.shape, jnp.float32)
    x2_scr[...] = jnp.zeros(x2_scr.shape, jnp.float32)

    # ---- fc1 (no bias) + ReLU + BN1 -----------------------------------------
    # fcw columns are pre-permuted to (h, w, c) order -> one MXU matmul.
    t = jnp.dot(z_ref[...], fcw_ref[...], preferred_element_type=jnp.float32)
    t = _relu_bn([t], g1_ref[...], b1_ref[...], Wb=16, C=h1)[0]
    # Scatter the 4 spatial rows into the padded conv1 input scratch.
    for h in range(4):
        x1_scr[(h + 1) * B:(h + 2) * B, :] = t[:, h * 4 * h1:(h + 1) * 4 * h1]

    # ---- convt1 (4x4 -> 8x8, pad=1) + ReLU + BN2 ----------------------------
    y = _convt_phases(x1_scr, m1_ref, c1b_ref[...], Ho2=4, B=B)
    y = _relu_bn(y, g2_ref[...], b2_ref[...], Wb=8, C=h2)
    _interleave_store(x2_scr, y, Ho2=4, B=B, pad=1)

    # ---- convt2 (8x8 -> 16x16, pad=1) + ReLU + BN3 --------------------------
    y = _convt_phases(x2_scr, m2_ref, c2b_ref[...], Ho2=8, B=B)
    y = _relu_bn(y, g3_ref[...], b3_ref[...], Wb=16, C=h3)
    _interleave_store(x3_scr, y, Ho2=8, B=B, pad=0)

    # ---- convt3 (16x16 -> 28x28, pad=3) + per-phase tanh --------------------
    y = _convt_phases(x3_scr, m3_ref, c3b_ref[...], Ho2=14, B=B)
    y = [jnp.tanh(p) for p in y]            # elementwise: apply per phase
    _interleave_store(o_ref, y, Ho2=14, B=B, pad=0)


# ----------------------------------------------------------------------------
# Wrapper: one pallas_call for the whole forward
# ----------------------------------------------------------------------------
def generator_forward(prep, z, dims):
    Z_dim, h1, h2, h3, nc = dims
    B = z.shape[0]

    args = (z, prep['fc_w'], prep['g1'], prep['b1'],
            prep['m1'], prep['c1b'], prep['g2'], prep['b2'],
            prep['m2'], prep['c2b'], prep['g3'], prep['b3'],
            prep['m3'], prep['c3b'])

    def full_spec(a):
        return pl.BlockSpec(a.shape, lambda i, _n=a.ndim: (0,) * _n)

    out2d = pl.pallas_call(
        functools.partial(_generator_kernel, dims=dims, B=B),
        out_shape=jax.ShapeDtypeStruct((28 * B, nc * 28), jnp.float32),
        grid=(1,),
        in_specs=[full_spec(a) for a in args],
        out_specs=pl.BlockSpec((28 * B, nc * 28), lambda i: (0, 0)),
        scratch_shapes=[
            pltpu.VMEM((6 * B, 4 * h1), jnp.float32),    # padded 4x4 map
            pltpu.VMEM((10 * B, 8 * h2), jnp.float32),   # padded 8x8 map
            pltpu.VMEM((16 * B, 16 * h3), jnp.float32),  # 16x16 map (no pad)
        ],
        compiler_params=pltpu.CompilerParams(
            dimension_semantics=("arbitrary",),
            vmem_limit_bytes=32 * 1024 * 1024,
        ),
    )(*args)

    # rows = (y, b), lanes = (c, x)  ->  NCHW (B, nc, 28, 28)
    return out2d.reshape(28, B, nc, 28).transpose(1, 2, 0, 3)


# ----------------------------------------------------------------------------
# One-time parameter preparation (all weight reshuffles hoisted here)
# ----------------------------------------------------------------------------
def _toeplitz_weights(w_torch, *, W_in, torch_pad, c_major_out=False):
    """ConvTranspose2d weight (Cin, Cout, 4, 4) -> (4, W_in*Cin, W_out*Cout).

    Index 2*rh + dh selects the row-phase / row-tap matrix; the full W-axis
    convolution (both column phases + taps, and W zero padding) is baked in.
    """
    w = np.asarray(w_torch)
    Cin, Cout, K, _ = w.shape
    wf = np.transpose(w[:, :, ::-1, ::-1], (2, 3, 0, 1))   # (ky, kx, Cin, Cout)
    pad = 3 - torch_pad
    base = 2 - pad // 2
    Wo2 = W_in - 2 + pad
    W_out = 2 * Wo2
    M = np.zeros((2, 2, W_in * Cin, W_out * Cout), np.float32)
    for rh in range(2):
        for dh in range(2):
            for j in range(Wo2):
                for rw in range(2):
                    x = 2 * j + rw
                    for dw in range(2):
                        w_in = j + rw + dw + base - 2
                        if 0 <= w_in < W_in:
                            M[rh, dh,
                              w_in * Cin:(w_in + 1) * Cin,
                              x * Cout:(x + 1) * Cout] += wf[rh + 2 * dh,
                                                             rw + 2 * dw]
    M = M.reshape(4, W_in * Cin, W_out * Cout)
    if c_major_out:
        # reorder output columns from (x, c) to (c, x)
        M = M.reshape(4, W_in * Cin, W_out, Cout).transpose(0, 1, 3, 2)
        M = M.reshape(4, W_in * Cin, Cout * W_out)
    return jnp.asarray(M)


def prepare_params(params, dims):
    Z_dim, h1, h2, h3, nc = dims

    # fc weight -> (Z, 16*h1) with columns ordered (h, w, c)
    fc_w = (params['fc1_w'].reshape(h1, 4, 4, Z_dim)
            .transpose(1, 2, 0, 3).reshape(16 * h1, Z_dim).T)

    def tile_l(v, Wb):                         # per-channel vector -> (1, Wb*C)
        return jnp.tile(v, Wb).reshape(1, Wb * v.shape[0])

    return dict(
        fc_w=fc_w,
        g1=tile_l(params['bn1_g'], 16), b1=tile_l(params['bn1_b'], 16),
        m1=_toeplitz_weights(params['convt1_w'], W_in=4, torch_pad=1),
        c1b=tile_l(params['convt1_b'], 8),
        g2=tile_l(params['bn2_g'], 8), b2=tile_l(params['bn2_b'], 8),
        m2=_toeplitz_weights(params['convt2_w'], W_in=8, torch_pad=1),
        c2b=tile_l(params['convt2_b'], 16),
        g3=tile_l(params['bn3_g'], 16), b3=tile_l(params['bn3_b'], 16),
        m3=_toeplitz_weights(params['convt3_w'], W_in=16, torch_pad=3,
                             c_major_out=True),
        c3b=jnp.repeat(params['convt3_b'], 28).reshape(1, nc * 28),
    )


def init_generator_params(key, Z_dim, h1, h2, h3, n_channels):
    # TODO(synk): `init_layer` is not defined in the reference source; use
    # deterministic synthetic initial values instead.
    ks = jax.random.split(key, 12)
    nrm = lambda k, shape, s=0.05: s * jax.random.normal(k, shape, jnp.float32)
    return dict(
        fc1_w=nrm(ks[0], (h1 * 4 * 4, Z_dim)),          # Linear weight (out, in)
        convt1_w=nrm(ks[1], (h1, h2, 4, 4)),            # ConvT (Cin, Cout, K, K)
        convt1_b=nrm(ks[2], (h2,)),
        convt2_w=nrm(ks[3], (h2, h3, 4, 4)),
        convt2_b=nrm(ks[4], (h3,)),
        convt3_w=nrm(ks[5], (h3, n_channels, 4, 4)),
        convt3_b=nrm(ks[6], (n_channels,)),
        bn1_g=1.0 + nrm(ks[7], (h1,), 0.1), bn1_b=nrm(ks[8], (h1,), 0.1),
        bn2_g=1.0 + nrm(ks[9], (h2,), 0.1), bn2_b=nrm(ks[10], (h2,), 0.1),
        bn3_g=1.0 + nrm(ks[11], (h3,), 0.1), bn3_b=jnp.zeros((h3,), jnp.float32),
    )


# ----------------------------------------------------------------------------
# Pure-JAX reference (NCHW, mirrors PyTorch)
# ----------------------------------------------------------------------------
def reference_forward(params, z, dims):
    Z_dim, h1, h2, h3, nc = dims
    B = z.shape[0]

    def relu_bn(x, g, b):
        x = jnp.maximum(x, 0.0)
        mean = x.mean(axis=(0, 2, 3), keepdims=True)
        var = jnp.square(x - mean).mean(axis=(0, 2, 3), keepdims=True)
        return (x - mean) * jax.lax.rsqrt(var + 1e-5) * g.reshape(1, -1, 1, 1) \
            + b.reshape(1, -1, 1, 1)

    def convt(x, w, b, stride, padding):
        K = w.shape[-1]
        w_conv = jnp.transpose(jnp.flip(w, axis=(2, 3)), (1, 0, 2, 3))  # OIHW
        pad = K - 1 - padding
        out = jax.lax.conv_general_dilated(
            x, w_conv, window_strides=(1, 1),
            padding=((pad, pad), (pad, pad)),
            lhs_dilation=(stride, stride),
            dimension_numbers=('NCHW', 'OIHW', 'NCHW'))
        return out + b.reshape(1, -1, 1, 1)

    t = z @ params['fc1_w'].T
    t = t.reshape(B, h1, 4, 4)
    t = relu_bn(t, params['bn1_g'], params['bn1_b'])
    t = convt(t, params['convt1_w'], params['convt1_b'], 2, 1)
    t = relu_bn(t, params['bn2_g'], params['bn2_b'])
    t = convt(t, params['convt2_w'], params['convt2_b'], 2, 1)
    t = relu_bn(t, params['bn3_g'], params['bn3_b'])
    t = convt(t, params['convt3_w'], params['convt3_b'], 2, 3)
    return jnp.tanh(t)


# ----------------------------------------------------------------------------
if __name__ == "__main__":
    # Small shapes consistent with the module (Z_dim, h1, h2, h3, n_channels).
    dims = (32, 64, 32, 16, 3)
    B = 2
    key = jax.random.PRNGKey(0)
    kp, kz = jax.random.split(key)
    params = init_generator_params(kp, *dims)
    prep = prepare_params(params, dims)          # one-time weight prep (hoisted)
    z = jax.random.normal(kz, (B, dims[0]), jnp.float32)

    fwd = jax.jit(functools.partial(generator_forward, dims=dims))
    out = jax.block_until_ready(fwd(prep, z))
    ref = jax.block_until_ready(reference_forward(params, z, dims))

    assert out.shape == (B, dims[4], 28, 28), out.shape
    err = float(jnp.max(jnp.abs(out - ref)))
    assert err < 5e-4, f"max abs err {err}"
    print("KERNEL_OK")
</pallas_src>

<mosaic_0001>
module attributes {stable_mosaic.version = 11 : i64} {
  func.func @_generator_kernel(%arg0: i32, %arg1: memref<2x32xf32, #tpu.memory_space<vmem>>, %arg2: memref<32x1024xf32, #tpu.memory_space<vmem>>, %arg3: memref<1x1024xf32, #tpu.memory_space<vmem>>, %arg4: memref<1x1024xf32, #tpu.memory_space<vmem>>, %arg5: memref<4x256x256xf32, #tpu.memory_space<vmem>>, %arg6: memref<1x256xf32, #tpu.memory_space<vmem>>, %arg7: memref<1x256xf32, #tpu.memory_space<vmem>>, %arg8: memref<1x256xf32, #tpu.memory_space<vmem>>, %arg9: memref<4x256x256xf32, #tpu.memory_space<vmem>>, %arg10: memref<1x256xf32, #tpu.memory_space<vmem>>, %arg11: memref<1x256xf32, #tpu.memory_space<vmem>>, %arg12: memref<1x256xf32, #tpu.memory_space<vmem>>, %arg13: memref<4x256x84xf32, #tpu.memory_space<vmem>>, %arg14: memref<1x84xf32, #tpu.memory_space<vmem>>, %arg15: memref<56x84xf32, #tpu.memory_space<vmem>>, %arg16: memref<12x256xf32, #tpu.memory_space<vmem>>, %arg17: memref<20x256xf32, #tpu.memory_space<vmem>>, %arg18: memref<32x256xf32, #tpu.memory_space<vmem>>) attributes {dimension_semantics = [#tpu.dimension_semantics<arbitrary>], iteration_bounds = array<i64: 1>, scalar_prefetch = 0 : i64, scratch_operands = 3 : i64, tpu.core_type = #tpu.core_type<tc>, window_params = [{pipeline_mode = #tpu.pipeline_mode<synchronous>, transform_indices = @transform_0, window_bounds = array<i64: 2, 32>}, {pipeline_mode = #tpu.pipeline_mode<synchronous>, transform_indices = @transform_1, window_bounds = array<i64: 32, 1024>}, {pipeline_mode = #tpu.pipeline_mode<synchronous>, transform_indices = @transform_2, window_bounds = array<i64: 1, 1024>}, {pipeline_mode = #tpu.pipeline_mode<synchronous>, transform_indices = @transform_3, window_bounds = array<i64: 1, 1024>}, {pipeline_mode = #tpu.pipeline_mode<synchronous>, transform_indices = @transform_4, window_bounds = array<i64: 4, 256, 256>}, {pipeline_mode = #tpu.pipeline_mode<synchronous>, transform_indices = @transform_5, window_bounds = array<i64: 1, 256>}, {pipeline_mode = #tpu.pipeline_mode<synchronous>, transform_indices = @transform_6, window_bounds = array<i64: 1, 256>}, {pipeline_mode = #tpu.pipeline_mode<synchronous>, transform_indices = @transform_7, window_bounds = array<i64: 1, 256>}, {pipeline_mode = #tpu.pipeline_mode<synchronous>, transform_indices = @transform_8, window_bounds = array<i64: 4, 256, 256>}, {pipeline_mode = #tpu.pipeline_mode<synchronous>, transform_indices = @transform_9, window_bounds = array<i64: 1, 256>}, {pipeline_mode = #tpu.pipeline_mode<synchronous>, transform_indices = @transform_10, window_bounds = array<i64: 1, 256>}, {pipeline_mode = #tpu.pipeline_mode<synchronous>, transform_indices = @transform_11, window_bounds = array<i64: 1, 256>}, {pipeline_mode = #tpu.pipeline_mode<synchronous>, transform_indices = @transform_12, window_bounds = array<i64: 4, 256, 84>}, {pipeline_mode = #tpu.pipeline_mode<synchronous>, transform_indices = @transform_13, window_bounds = array<i64: 1, 84>}, {pipeline_mode = #tpu.pipeline_mode<synchronous>, transform_indices = @transform_14, window_bounds = array<i64: 56, 84>}]} {
    %cst = arith.constant 0.000000e+00 : f32
    %0 = vector.broadcast %cst : f32 to vector<12x256xf32>
    %c0 = arith.constant 0 : index
    %c0_0 = arith.constant 0 : index
    %1 = vector.load %arg16[%c0, %c0_0] : memref<12x256xf32, #tpu.memory_space<vmem>>, vector<12x256xf32>
    tpu.vector_store %arg16[%c0, %c0_0], %0 {strides = array<i32>} : memref<12x256xf32, #tpu.memory_space<vmem>>, vector<12x256xf32>,
    %cst_1 = arith.constant 0.000000e+00 : f32
    %2 = vector.broadcast %cst_1 : f32 to vector<20x256xf32>
    %c0_2 = arith.constant 0 : index
    %c0_3 = arith.constant 0 : index
    %3 = vector.load %arg17[%c0_2, %c0_3] : memref<20x256xf32, #tpu.memory_space<vmem>>, vector<20x256xf32>
    tpu.vector_store %arg17[%c0_2, %c0_3], %2 {strides = array<i32>} : memref<20x256xf32, #tpu.memory_space<vmem>>, vector<20x256xf32>,
    %c0_4 = arith.constant 0 : index
    %c0_5 = arith.constant 0 : index
    %4 = vector.load %arg1[%c0_4, %c0_5] : memref<2x32xf32, #tpu.memory_space<vmem>>, vector<2x32xf32>
    %c0_6 = arith.constant 0 : index
    %c0_7 = arith.constant 0 : index
    %5 = vector.load %arg2[%c0_6, %c0_7] : memref<32x1024xf32, #tpu.memory_space<vmem>>, vector<32x1024xf32>
    %cst_8 = arith.constant dense<0.000000e+00> : vector<2x1024xf32>
    %6 = tpu.matmul %4, %5, %cst_8 {dimension_numbers = #tpu.dot_dimension_numbers<[1], [0], [0], [1], [0, 0, 1, 1], [], []>} : vector<2x32xf32>, vector<32x1024xf32>, vector<2x1024xf32> -> vector<2x1024xf32>
    %c0_9 = arith.constant 0 : index
    %c0_10 = arith.constant 0 : index
    %7 = vector.load %arg3[%c0_9, %c0_10] : memref<1x1024xf32, #tpu.memory_space<vmem>>, vector<1x1024xf32>
    %c0_11 = arith.constant 0 : index
    %c0_12 = arith.constant 0 : index
    %8 = vector.load %arg4[%c0_11, %c0_12] : memref<1x1024xf32, #tpu.memory_space<vmem>>, vector<1x1024xf32>
    %cst_13 = arith.constant 0.000000e+00 : f32
    %9 = vector.broadcast %cst_13 : f32 to vector<2x1024xf32>
    %10 = arith.maximumf %6, %9 : vector<2x1024xf32>
    %cst_14 = arith.constant dense<0.000000e+00> : vector<1024xf32>
    %11 = vector.multi_reduction <add>, %10, %cst_14 [0] : vector<2x1024xf32> to vector<1024xf32>
    %12 = vector.shape_cast %11 : vector<1024xf32> to vector<1x1024xf32>
    %13 = vector.extract_strided_slice %12 {offsets = [0, 0], sizes = [1, 64], strides = [1, 1]} : vector<1x1024xf32> to vector<1x64xf32>
    %14 = vector.extract_strided_slice %12 {offsets = [0, 64], sizes = [1, 64], strides = [1, 1]} : vector<1x1024xf32> to vector<1x64xf32>
    %15 = arith.addf %13, %14 : vector<1x64xf32>
    %16 = vector.extract_strided_slice %12 {offsets = [0, 128], sizes = [1, 64], strides = [1, 1]} : vector<1x1024xf32> to vector<1x64xf32>
    %17 = arith.addf %15, %16 : vector<1x64xf32>
    %18 = vector.extract_strided_slice %12 {offsets = [0, 192], sizes = [1, 64], strides = [1, 1]} : vector<1x1024xf32> to vector<1x64xf32>
    %19 = arith.addf %17, %18 : vector<1x64xf32>
    %20 = vector.extract_strided_slice %12 {offsets = [0, 256], sizes = [1, 64], strides = [1, 1]} : vector<1x1024xf32> to vector<1x64xf32>
    %21 = arith.addf %19, %20 : vector<1x64xf32>
    %22 = vector.extract_strided_slice %12 {offsets = [0, 320], sizes = [1, 64], strides = [1, 1]} : vector<1x1024xf32> to vector<1x64xf32>
    %23 = arith.addf %21, %22 : vector<1x64xf32>
    %24 = vector.extract_strided_slice %12 {offsets = [0, 384], sizes = [1, 64], strides = [1, 1]} : vector<1x1024xf32> to vector<1x64xf32>
    %25 = arith.addf %23, %24 : vector<1x64xf32>
    %26 = vector.extract_strided_slice %12 {offsets = [0, 448], sizes = [1, 64], strides = [1, 1]} : vector<1x1024xf32> to vector<1x64xf32>
    %27 = arith.addf %25, %26 : vector<1x64xf32>
    %28 = vector.extract_strided_slice %12 {offsets = [0, 512], sizes = [1, 64], strides = [1, 1]} : vector<1x1024xf32> to vector<1x64xf32>
    %29 = arith.addf %27, %28 : vector<1x64xf32>
    %30 = vector.extract_strided_slice %12 {offsets = [0, 576], sizes = [1, 64], strides = [1, 1]} : vector<1x1024xf32> to vector<1x64xf32>
    %31 = arith.addf %29, %30 : vector<1x64xf32>
    %32 = vector.extract_strided_slice %12 {offsets = [0, 640], sizes = [1, 64], strides = [1, 1]} : vector<1x1024xf32> to vector<1x64xf32>
    %33 = arith.addf %31, %32 : vector<1x64xf32>
    %34 = vector.extract_strided_slice %12 {offsets = [0, 704], sizes = [1, 64], strides = [1, 1]} : vector<1x1024xf32> to vector<1x64xf32>
    %35 = arith.addf %33, %34 : vector<1x64xf32>
    %36 = vector.extract_strided_slice %12 {offsets = [0, 768], sizes = [1, 64], strides = [1, 1]} : vector<1x1024xf32> to vector<1x64xf32>
    %37 = arith.addf %35, %36 : vector<1x64xf32>
    %38 = vector.extract_strided_slice %12 {offsets = [0, 832], sizes = [1, 64], strides = [1, 1]} : vector<1x1024xf32> to vector<1x64xf32>
    %39 = arith.addf %37, %38 : vector<1x64xf32>
    %40 = vector.extract_strided_slice %12 {offsets = [0, 896], sizes = [1, 64], strides = [1, 1]} : vector<1x1024xf32> to vector<1x64xf32>
    %41 = arith.addf %39, %40 : vector<1x64xf32>
    %42 = vector.extract_strided_slice %12 {offsets = [0, 960], sizes = [1, 64], strides = [1, 1]} : vector<1x1024xf32> to vector<1x64xf32>
    %43 = arith.addf %41, %42 : vector<1x64xf32>
    %cst_15 = arith.constant 3.200000e+01 : f32
    %44 = vector.broadcast %cst_15 : f32 to vector<1x64xf32>
    %45 = arith.divf %43, %44 : vector<1x64xf32>
    %46 = tpu.concatenate %45, %45, %45, %45, %45, %45, %45, %45, %45, %45, %45, %45, %45, %45, %45, %45 in 1 : vector<1x64xf32>, vector<1x64xf32>, vector<1x64xf32>, vector<1x64xf32>, vector<1x64xf32>, vector<1x64xf32>, vector<1x64xf32>, vector<1x64xf32>, vector<1x64xf32>, vector<1x64xf32>, vector<1x64xf32>, vector<1x64xf32>, vector<1x64xf32>, vector<1x64xf32>, vector<1x64xf32>, vector<1x64xf32> -> vector<1x1024xf32>
    %47 = vector.broadcast %46 : vector<1x1024xf32> to vector<2x1024xf32>
    %48 = arith.subf %10, %47 : vector<2x1024xf32>
    %49 = arith.mulf %48, %48 : vector<2x1024xf32>
    %cst_16 = arith.constant dense<0.000000e+00> : vector<1024xf32>
    %50 = vector.multi_reduction <add>, %49, %cst_16 [0] : vector<2x1024xf32> to vector<1024xf32>
    %51 = vector.shape_cast %50 : vector<1024xf32> to vector<1x1024xf32>
    %52 = vector.extract_strided_slice %51 {offsets = [0, 0], sizes = [1, 64], strides = [1, 1]} : vector<1x1024xf32> to vector<1x64xf32>
    %53 = vector.extract_strided_slice %51 {offsets = [0, 64], sizes = [1, 64], strides = [1, 1]} : vector<1x1024xf32> to vector<1x64xf32>
    %54 = arith.addf %52, %53 : vector<1x64xf32>
    %55 = vector.extract_strided_slice %51 {offsets = [0, 128], sizes = [1, 64], strides = [1, 1]} : vector<1x1024xf32> to vector<1x64xf32>
    %56 = arith.addf %54, %55 : vector<1x64xf32>
    %57 = vector.extract_strided_slice %51 {offsets = [0, 192], sizes = [1, 64], strides = [1, 1]} : vector<1x1024xf32> to vector<1x64xf32>
    %58 = arith.addf %56, %57 : vector<1x64xf32>
    %59 = vector.extract_strided_slice %51 {offsets = [0, 256], sizes = [1, 64], strides = [1, 1]} : vector<1x1024xf32> to vector<1x64xf32>
    %60 = arith.addf %58, %59 : vector<1x64xf32>
    %61 = vector.extract_strided_slice %51 {offsets = [0, 320], sizes = [1, 64], strides = [1, 1]} : vector<1x1024xf32> to vector<1x64xf32>
    %62 = arith.addf %60, %61 : vector<1x64xf32>
    %63 = vector.extract_strided_slice %51 {offsets = [0, 384], sizes = [1, 64], strides = [1, 1]} : vector<1x1024xf32> to vector<1x64xf32>
    %64 = arith.addf %62, %63 : vector<1x64xf32>
    %65 = vector.extract_strided_slice %51 {offsets = [0, 448], sizes = [1, 64], strides = [1, 1]} : vector<1x1024xf32> to vector<1x64xf32>
    %66 = arith.addf %64, %65 : vector<1x64xf32>
    %67 = vector.extract_strided_slice %51 {offsets = [0, 512], sizes = [1, 64], strides = [1, 1]} : vector<1x1024xf32> to vector<1x64xf32>
    %68 = arith.addf %66, %67 : vector<1x64xf32>
    %69 = vector.extract_strided_slice %51 {offsets = [0, 576], sizes = [1, 64], strides = [1, 1]} : vector<1x1024xf32> to vector<1x64xf32>
    %70 = arith.addf %68, %69 : vector<1x64xf32>
    %71 = vector.extract_strided_slice %51 {offsets = [0, 640], sizes = [1, 64], strides = [1, 1]} : vector<1x1024xf32> to vector<1x64xf32>
    %72 = arith.addf %70, %71 : vector<1x64xf32>
    %73 = vector.extract_strided_slice %51 {offsets = [0, 704], sizes = [1, 64], strides = [1, 1]} : vector<1x1024xf32> to vector<1x64xf32>
    %74 = arith.addf %72, %73 : vector<1x64xf32>
    %75 = vector.extract_strided_slice %51 {offsets = [0, 768], sizes = [1, 64], strides = [1, 1]} : vector<1x1024xf32> to vector<1x64xf32>
    %76 = arith.addf %74, %75 : vector<1x64xf32>
    %77 = vector.extract_strided_slice %51 {offsets = [0, 832], sizes = [1, 64], strides = [1, 1]} : vector<1x1024xf32> to vector<1x64xf32>
    %78 = arith.addf %76, %77 : vector<1x64xf32>
    %79 = vector.extract_strided_slice %51 {offsets = [0, 896], sizes = [1, 64], strides = [1, 1]} : vector<1x1024xf32> to vector<1x64xf32>
    %80 = arith.addf %78, %79 : vector<1x64xf32>
    %81 = vector.extract_strided_slice %51 {offsets = [0, 960], sizes = [1, 64], strides = [1, 1]} : vector<1x1024xf32> to vector<1x64xf32>
    %82 = arith.addf %80, %81 : vector<1x64xf32>
    %cst_17 = arith.constant 3.200000e+01 : f32
    %83 = vector.broadcast %cst_17 : f32 to vector<1x64xf32>
    %84 = arith.divf %82, %83 : vector<1x64xf32>
    %cst_18 = arith.constant 9.99999974E-6 : f32
    %85 = vector.broadcast %cst_18 : f32 to vector<1x64xf32>
    %86 = arith.addf %84, %85 : vector<1x64xf32>
    %87 = math.rsqrt %86 : vector<1x64xf32>
    %88 = tpu.concatenate %87, %87, %87, %87, %87, %87, %87, %87, %87, %87, %87, %87, %87, %87, %87, %87 in 1 : vector<1x64xf32>, vector<1x64xf32>, vector<1x64xf32>, vector<1x64xf32>, vector<1x64xf32>, vector<1x64xf32>, vector<1x64xf32>, vector<1x64xf32>, vector<1x64xf32>, vector<1x64xf32>, vector<1x64xf32>, vector<1x64xf32>, vector<1x64xf32>, vector<1x64xf32>, vector<1x64xf32>, vector<1x64xf32> -> vector<1x1024xf32>
    %89 = vector.broadcast %46 : vector<1x1024xf32> to vector<2x1024xf32>
    %90 = arith.subf %10, %89 : vector<2x1024xf32>
    %91 = vector.broadcast %88 : vector<1x1024xf32> to vector<2x1024xf32>
    %92 = arith.mulf %90, %91 : vector<2x1024xf32>
    %93 = vector.broadcast %7 : vector<1x1024xf32> to vector<2x1024xf32>
    %94 = arith.mulf %92, %93 : vector<2x1024xf32>
    %95 = vector.broadcast %8 : vector<1x1024xf32> to vector<2x1024xf32>
    %96 = arith.addf %94, %95 : vector<2x1024xf32>
    %97 = vector.extract_strided_slice %96 {offsets = [0, 0], sizes = [2, 256], strides = [1, 1]} : vector<2x1024xf32> to vector<2x256xf32>
    %c2 = arith.constant 2 : index
    %c0_19 = arith.constant 0 : index
    %98 = vector.load %arg16[%c2, %c0_19] : memref<12x256xf32, #tpu.memory_space<vmem>>, vector<2x256xf32>
    tpu.vector_store %arg16[%c2, %c0_19], %97 {strides = array<i32>} : memref<12x256xf32, #tpu.memory_space<vmem>>, vector<2x256xf32>,
    %99 = vector.extract_strided_slice %96 {offsets = [0, 256], sizes = [2, 256], strides = [1, 1]} : vector<2x1024xf32> to vector<2x256xf32>
    %c4 = arith.constant 4 : index
    %c0_20 = arith.constant 0 : index
    %100 = vector.load %arg16[%c4, %c0_20] : memref<12x256xf32, #tpu.memory_space<vmem>>, vector<2x256xf32>
    tpu.vector_store %arg16[%c4, %c0_20], %99 {strides = array<i32>} : memref<12x256xf32, #tpu.memory_space<vmem>>, vector<2x256xf32>,
    %101 = vector.extract_strided_slice %96 {offsets = [0, 512], sizes = [2, 256], strides = [1, 1]} : vector<2x1024xf32> to vector<2x256xf32>
    %c6 = arith.constant 6 : index
    %c0_21 = arith.constant 0 : index
    %102 = vector.load %arg16[%c6, %c0_21] : memref<12x256xf32, #tpu.memory_space<vmem>>, vector<2x256xf32>
    tpu.vector_store %arg16[%c6, %c0_21], %101 {strides = array<i32>} : memref<12x256xf32, #tpu.memory_space<vmem>>, vector<2x256xf32>,
    %103 = vector.extract_strided_slice %96 {offsets = [0, 768], sizes = [2, 256], strides = [1, 1]} : vector<2x1024xf32> to vector<2x256xf32>
    %c8 = arith.constant 8 : index
    %c0_22 = arith.constant 0 : index
    %104 = vector.load %arg16[%c8, %c0_22] : memref<12x256xf32, #tpu.memory_space<vmem>>, vector<2x256xf32>
    tpu.vector_store %arg16[%c8, %c0_22], %103 {strides = array<i32>} : memref<12x256xf32, #tpu.memory_space<vmem>>, vector<2x256xf32>,
    %c0_23 = arith.constant 0 : index
    %c0_24 = arith.constant 0 : index
    %105 = vector.load %arg6[%c0_23, %c0_24] : memref<1x256xf32, #tpu.memory_space<vmem>>, vector<1x256xf32>
    %c0_25 = arith.constant 0 : index
    %c0_26 = arith.constant 0 : index
    %106 = vector.load %arg16[%c0_25, %c0_26] : memref<12x256xf32, #tpu.memory_space<vmem>>, vector<8x256xf32>
    %c0_27 = arith.constant 0 : index
    %c0_28 = arith.constant 0 : index
    %c0_29 = arith.constant 0 : index
    %107 = vector.load %arg5[%c0_27, %c0_28, %c0_29] : memref<4x256x256xf32, #tpu.memory_space<vmem>>, vector<1x256x256xf32>
    %108 = vector.shape_cast %107 : vector<1x256x256xf32> to vector<256x256xf32>
    %cst_30 = arith.constant dense<0.000000e+00> : vector<8x256xf32>
    %109 = tpu.matmul %106, %108, %cst_30 {dimension_numbers = #tpu.dot_dimension_numbers<[1], [0], [0], [1], [0, 0, 1, 1], [], []>} : vector<8x256xf32>, vector<256x256xf32>, vector<8x256xf32> -> vector<8x256xf32>
    %c2_31 = arith.constant 2 : index
    %c0_32 = arith.constant 0 : index
    %110 = vector.load %arg16[%c2_31, %c0_32] : memref<12x256xf32, #tpu.memory_space<vmem>>, vector<8x256xf32>
    %c1 = arith.constant 1 : index
    %c0_33 = arith.constant 0 : index
    %c0_34 = arith.constant 0 : index
    %111 = vector.load %arg5[%c1, %c0_33, %c0_34] : memref<4x256x256xf32, #tpu.memory_space<vmem>>, vector<1x256x256xf32>
    %112 = vector.shape_cast %111 : vector<1x256x256xf32> to vector<256x256xf32>
    %cst_35 = arith.constant dense<0.000000e+00> : vector<8x256xf32>
    %113 = tpu.matmul %110, %112, %cst_35 {dimension_numbers = #tpu.dot_dimension_numbers<[1], [0], [0], [1], [0, 0, 1, 1], [], []>} : vector<8x256xf32>, vector<256x256xf32>, vector<8x256xf32> -> vector<8x256xf32>
    %114 = arith.addf %109, %113 : vector<8x256xf32>
    %115 = vector.broadcast %105 : vector<1x256xf32> to vector<8x256xf32>
    %116 = arith.addf %114, %115 : vector<8x256xf32>
    %c2_36 = arith.constant 2 : index
    %c0_37 = arith.constant 0 : index
    %117 = vector.load %arg16[%c2_36, %c0_37] : memref<12x256xf32, #tpu.memory_space<vmem>>, vector<8x256xf32>
    %c2_38 = arith.constant 2 : index
    %c0_39 = arith.constant 0 : index
    %c0_40 = arith.constant 0 : index
    %118 = vector.load %arg5[%c2_38, %c0_39, %c0_40] : memref<4x256x256xf32, #tpu.memory_space<vmem>>, vector<1x256x256xf32>
    %119 = vector.shape_cast %118 : vector<1x256x256xf32> to vector<256x256xf32>
    %cst_41 = arith.constant dense<0.000000e+00> : vector<8x256xf32>
    %120 = tpu.matmul %117, %119, %cst_41 {dimension_numbers = #tpu.dot_dimension_numbers<[1], [0], [0], [1], [0, 0, 1, 1], [], []>} : vector<8x256xf32>, vector<256x256xf32>, vector<8x256xf32> -> vector<8x256xf32>
    %c4_42 = arith.constant 4 : index
    %c0_43 = arith.constant 0 : index
    %121 = vector.load %arg16[%c4_42, %c0_43] : memref<12x256xf32, #tpu.memory_space<vmem>>, vector<8x256xf32>
    %c3 = arith.constant 3 : index
    %c0_44 = arith.constant 0 : index
    %c0_45 = arith.constant 0 : index
    %122 = vector.load %arg5[%c3, %c0_44, %c0_45] : memref<4x256x256xf32, #tpu.memory_space<vmem>>, vector<1x256x256xf32>
    %123 = vector.shape_cast %122 : vector<1x256x256xf32> to vector<256x256xf32>
    %cst_46 = arith.constant dense<0.000000e+00> : vector<8x256xf32>
    %124 = tpu.matmul %121, %123, %cst_46 {dimension_numbers = #tpu.dot_dimension_numbers<[1], [0], [0], [1], [0, 0, 1, 1], [], []>} : vector<8x256xf32>, vector<256x256xf32>, vector<8x256xf32> -> vector<8x256xf32>
    %125 = arith.addf %120, %124 : vector<8x256xf32>
    %126 = vector.broadcast %105 : vector<1x256xf32> to vector<8x256xf32>
    %127 = arith.addf %125, %126 : vector<8x256xf32>
    %c0_47 = arith.constant 0 : index
    %c0_48 = arith.constant 0 : index
    %128 = vector.load %arg7[%c0_47, %c0_48] : memref<1x256xf32, #tpu.memory_space<vmem>>, vector<1x256xf32>
    %c0_49 = arith.constant 0 : index
    %c0_50 = arith.constant 0 : index
    %129 = vector.load %arg8[%c0_49, %c0_50] : memref<1x256xf32, #tpu.memory_space<vmem>>, vector<1x256xf32>
    %cst_51 = arith.constant 0.000000e+00 : f32
    %130 = vector.broadcast %cst_51 : f32 to vector<8x256xf32>
    %131 = arith.maximumf %116, %130 : vector<8x256xf32>
    %cst_52 = arith.constant 0.000000e+00 : f32
    %132 = vector.broadcast %cst_52 : f32 to vector<8x256xf32>
    %133 = arith.maximumf %127, %132 : vector<8x256xf32>
    %cst_53 = arith.constant dense<0.000000e+00> : vector<256xf32>
    %134 = vector.multi_reduction <add>, %131, %cst_53 [0] : vector<8x256xf32> to vector<256xf32>
    %135 = vector.shape_cast %134 : vector<256xf32> to vector<1x256xf32>
    %cst_54 = arith.constant dense<0.000000e+00> : vector<256xf32>
    %136 = vector.multi_reduction <add>, %133, %cst_54 [0] : vector<8x256xf32> to vector<256xf32>
    %137 = vector.shape_cast %136 : vector<256xf32> to vector<1x256xf32>
    %138 = arith.addf %135, %137 : vector<1x256xf32>
    %139 = vector.extract_strided_slice %138 {offsets = [0, 0], sizes = [1, 32], strides = [1, 1]} : vector<1x256xf32> to vector<1x32xf32>
    %140 = vector.extract_strided_slice %138 {offsets = [0, 32], sizes = [1, 32], strides = [1, 1]} : vector<1x256xf32> to vector<1x32xf32>
    %141 = arith.addf %139, %140 : vector<1x32xf32>
    %142 = vector.extract_strided_slice %138 {offsets = [0, 64], sizes = [1, 32], strides = [1, 1]} : vector<1x256xf32> to vector<1x32xf32>
    %143 = arith.addf %141, %142 : vector<1x32xf32>
    %144 = vector.extract_strided_slice %138 {offsets = [0, 96], sizes = [1, 32], strides = [1, 1]} : vector<1x256xf32> to vector<1x32xf32>
    %145 = arith.addf %143, %144 : vector<1x32xf32>
    %146 = vector.extract_strided_slice %138 {offsets = [0, 128], sizes = [1, 32], strides = [1, 1]} : vector<1x256xf32> to vector<1x32xf32>
    %147 = arith.addf %145, %146 : vector<1x32xf32>
    %148 = vector.extract_strided_slice %138 {offsets = [0, 160], sizes = [1, 32], strides = [1, 1]} : vector<1x256xf32> to vector<1x32xf32>
    %149 = arith.addf %147, %148 : vector<1x32xf32>
    %150 = vector.extract_strided_slice %138 {offsets = [0, 192], sizes = [1, 32], strides = [1, 1]} : vector<1x256xf32> to vector<1x32xf32>
    %151 = arith.addf %149, %150 : vector<1x32xf32>
    %152 = vector.extract_strided_slice %138 {offsets = [0, 224], sizes = [1, 32], strides = [1, 1]} : vector<1x256xf32> to vector<1x32xf32>
    %153 = arith.addf %151, %152 : vector<1x32xf32>
    %cst_55 = arith.constant 1.280000e+02 : f32
    %154 = vector.broadcast %cst_55 : f32 to vector<1x32xf32>
    %155 = arith.divf %153, %154 : vector<1x32xf32>
    %156 = tpu.concatenate %155, %155, %155, %155, %155, %155, %155, %155 in 1 : vector<1x32xf32>, vector<1x32xf32>, vector<1x32xf32>, vector<1x32xf32>, vector<1x32xf32>, vector<1x32xf32>, vector<1x32xf32>, vector<1x32xf32> -> vector<1x256xf32>
    %157 = vector.broadcast %156 : vector<1x256xf32> to vector<8x256xf32>
    %158 = arith.subf %131, %157 : vector<8x256xf32>
    %159 = arith.mulf %158, %158 : vector<8x256xf32>
    %cst_56 = arith.constant dense<0.000000e+00> : vector<256xf32>
    %160 = vector.multi_reduction <add>, %159, %cst_56 [0] : vector<8x256xf32> to vector<256xf32>
    %161 = vector.shape_cast %160 : vector<256xf32> to vector<1x256xf32>
    %162 = vector.broadcast %156 : vector<1x256xf32> to vector<8x256xf32>
    %163 = arith.subf %133, %162 : vector<8x256xf32>
    %164 = arith.mulf %163, %163 : vector<8x256xf32>
    %cst_57 = arith.constant dense<0.000000e+00> : vector<256xf32>
    %165 = vector.multi_reduction <add>, %164, %cst_57 [0] : vector<8x256xf32> to vector<256xf32>
    %166 = vector.shape_cast %165 : vector<256xf32> to vector<1x256xf32>
    %167 = arith.addf %161, %166 : vector<1x256xf32>
    %168 = vector.extract_strided_slice %167 {offsets = [0, 0], sizes = [1, 32], strides = [1, 1]} : vector<1x256xf32> to vector<1x32xf32>
    %169 = vector.extract_strided_slice %167 {offsets = [0, 32], sizes = [1, 32], strides = [1, 1]} : vector<1x256xf32> to vector<1x32xf32>
    %170 = arith.addf %168, %169 : vector<1x32xf32>
    %171 = vector.extract_strided_slice %167 {offsets = [0, 64], sizes = [1, 32], strides = [1, 1]} : vector<1x256xf32> to vector<1x32xf32>
    %172 = arith.addf %170, %171 : vector<1x32xf32>
    %173 = vector.extract_strided_slice %167 {offsets = [0, 96], sizes = [1, 32], strides = [1, 1]} : vector<1x256xf32> to vector<1x32xf32>
    %174 = arith.addf %172, %173 : vector<1x32xf32>
    %175 = vector.extract_strided_slice %167 {offsets = [0, 128], sizes = [1, 32], strides = [1, 1]} : vector<1x256xf32> to vector<1x32xf32>
    %176 = arith.addf %174, %175 : vector<1x32xf32>
    %177 = vector.extract_strided_slice %167 {offsets = [0, 160], sizes = [1, 32], strides = [1, 1]} : vector<1x256xf32> to vector<1x32xf32>
    %178 = arith.addf %176, %177 : vector<1x32xf32>
    %179 = vector.extract_strided_slice %167 {offsets = [0, 192], sizes = [1, 32], strides = [1, 1]} : vector<1x256xf32> to vector<1x32xf32>
    %180 = arith.addf %178, %179 : vector<1x32xf32>
    %181 = vector.extract_strided_slice %167 {offsets = [0, 224], sizes = [1, 32], strides = [1, 1]} : vector<1x256xf32> to vector<1x32xf32>
    %182 = arith.addf %180, %181 : vector<1x32xf32>
    %cst_58 = arith.constant 1.280000e+02 : f32
    %183 = vector.broadcast %cst_58 : f32 to vector<1x32xf32>
    %184 = arith.divf %182, %183 : vector<1x32xf32>
    %cst_59 = arith.constant 9.99999974E-6 : f32
    %185 = vector.broadcast %cst_59 : f32 to vector<1x32xf32>
    %186 = arith.addf %184, %185 : vector<1x32xf32>
    %187 = math.rsqrt %186 : vector<1x32xf32>
    %188 = tpu.concatenate %187, %187, %187, %187, %187, %187, %187, %187 in 1 : vector<1x32xf32>, vector<1x32xf32>, vector<1x32xf32>, vector<1x32xf32>, vector<1x32xf32>, vector<1x32xf32>, vector<1x32xf32>, vector<1x32xf32> -> vector<1x256xf32>
    %189 = vector.broadcast %156 : vector<1x256xf32> to vector<8x256xf32>
    %190 = arith.subf %131, %189 : vector<8x256xf32>
    %191 = vector.broadcast %188 : vector<1x256xf32> to vector<8x256xf32>
    %192 = arith.mulf %190, %191 : vector<8x256xf32>
    %193 = vector.broadcast %128 : vector<1x256xf32> to vector<8x256xf32>
    %194 = arith.mulf %192, %193 : vector<8x256xf32>
    %195 = vector.broadcast %129 : vector<1x256xf32> to vector<8x256xf32>
    %196 = arith.addf %194, %195 : vector<8x256xf32>
    %197 = vector.broadcast %156 : vector<1x256xf32> to vector<8x256xf32>
    %198 = arith.subf %133, %197 : vector<8x256xf32>
    %199 = vector.broadcast %188 : vector<1x256xf32> to vector<8x256xf32>
    %200 = arith.mulf %198, %199 : vector<8x256xf32>
    %201 = vector.broadcast %128 : vector<1x256xf32> to vector<8x256xf32>
    %202 = arith.mulf %200, %201 : vector<8x256xf32>
    %203 = vector.broadcast %129 : vector<1x256xf32> to vector<8x256xf32>
    %204 = arith.addf %202, %203 : vector<8x256xf32>
    %205 = vector.extract_strided_slice %196 {offsets = [0, 0], sizes = [2, 256], strides = [1, 1]} : vector<8x256xf32> to vector<2x256xf32>
    %c2_60 = arith.constant 2 : index
    %c0_61 = arith.constant 0 : index
    %206 = vector.load %arg17[%c2_60, %c0_61] : memref<20x256xf32, #tpu.memory_space<vmem>>, vector<2x256xf32>
    tpu.vector_store %arg17[%c2_60, %c0_61], %205 {strides = array<i32>} : memref<20x256xf32, #tpu.memory_space<vmem>>, vector<2x256xf32>,
    %207 = vector.extract_strided_slice %196 {offsets = [2, 0], sizes = [2, 256], strides = [1, 1]} : vector<8x256xf32> to vector<2x256xf32>
    %c6_62 = arith.constant 6 : index
    %c0_63 = arith.constant 0 : index
    %208 = vector.load %arg17[%c6_62, %c0_63] : memref<20x256xf32, #tpu.memory_space<vmem>>, vector<2x256xf32>
    tpu.vector_store %arg17[%c6_62, %c0_63], %207 {strides = array<i32>} : memref<20x256xf32, #tpu.memory_space<vmem>>, vector<2x256xf32>,
    %209 = vector.extract_strided_slice %196 {offsets = [4, 0], sizes = [2, 256], strides = [1, 1]} : vector<8x256xf32> to vector<2x256xf32>
    %c10 = arith.constant 10 : index
    %c0_64 = arith.constant 0 : index
    %210 = vector.load %arg17[%c10, %c0_64] : memref<20x256xf32, #tpu.memory_space<vmem>>, vector<2x256xf32>
    tpu.vector_store %arg17[%c10, %c0_64], %209 {strides = array<i32>} : memref<20x256xf32, #tpu.memory_space<vmem>>, vector<2x256xf32>,
    %211 = vector.extract_strided_slice %196 {offsets = [6, 0], sizes = [2, 256], strides = [1, 1]} : vector<8x256xf32> to vector<2x256xf32>
    %c14 = arith.constant 14 : index
    %c0_65 = arith.constant 0 : index
    %212 = vector.load %arg17[%c14, %c0_65] : memref<20x256xf32, #tpu.memory_space<vmem>>, vector<2x256xf32>
    tpu.vector_store %arg17[%c14, %c0_65], %211 {strides = array<i32>} : memref<20x256xf32, #tpu.memory_space<vmem>>, vector<2x256xf32>,
    %213 = vector.extract_strided_slice %204 {offsets = [0, 0], sizes = [2, 256], strides = [1, 1]} : vector<8x256xf32> to vector<2x256xf32>
    %c4_66 = arith.constant 4 : index
    %c0_67 = arith.constant 0 : index
    %214 = vector.load %arg17[%c4_66, %c0_67] : memref<20x256xf32, #tpu.memory_space<vmem>>, vector<2x256xf32>
    tpu.vector_store %arg17[%c4_66, %c0_67], %213 {strides = array<i32>} : memref<20x256xf32, #tpu.memory_space<vmem>>, vector<2x256xf32>,
    %215 = vector.extract_strided_slice %204 {offsets = [2, 0], sizes = [2, 256], strides = [1, 1]} : vector<8x256xf32> to vector<2x256xf32>
    %c8_68 = arith.constant 8 : index
    %c0_69 = arith.constant 0 : index
    %216 = vector.load %arg17[%c8_68, %c0_69] : memref<20x256xf32, #tpu.memory_space<vmem>>, vector<2x256xf32>
    tpu.vector_store %arg17[%c8_68, %c0_69], %215 {strides = array<i32>} : memref<20x256xf32, #tpu.memory_space<vmem>>, vector<2x256xf32>,
    %217 = vector.extract_strided_slice %204 {offsets = [4, 0], sizes = [2, 256], strides = [1, 1]} : vector<8x256xf32> to vector<2x256xf32>
    %c12 = arith.constant 12 : index
    %c0_70 = arith.constant 0 : index
    %218 = vector.load %arg17[%c12, %c0_70] : memref<20x256xf32, #tpu.memory_space<vmem>>, vector<2x256xf32>
    tpu.vector_store %arg17[%c12, %c0_70], %217 {strides = array<i32>} : memref<20x256xf32, #tpu.memory_space<vmem>>, vector<2x256xf32>,
    %219 = vector.extract_strided_slice %204 {offsets = [6, 0], sizes = [2, 256], strides = [1, 1]} : vector<8x256xf32> to vector<2x256xf32>
    %c16 = arith.constant 16 : index
    %c0_71 = arith.constant 0 : index
    %220 = vector.load %arg17[%c16, %c0_71] : memref<20x256xf32, #tpu.memory_space<vmem>>, vector<2x256xf32>
    tpu.vector_store %arg17[%c16, %c0_71], %219 {strides = array<i32>} : memref<20x256xf32, #tpu.memory_space<vmem>>, vector<2x256xf32>,
    %c0_72 = arith.constant 0 : index
    %c0_73 = arith.constant 0 : index
    %221 = vector.load %arg10[%c0_72, %c0_73] : memref<1x256xf32, #tpu.memory_space<vmem>>, vector<1x256xf32>
    %c0_74 = arith.constant 0 : index
    %c0_75 = arith.constant 0 : index
    %222 = vector.load %arg17[%c0_74, %c0_75] : memref<20x256xf32, #tpu.memory_space<vmem>>, vector<16x256xf32>
    %c0_76 = arith.constant 0 : index
    %c0_77 = arith.constant 0 : index
    %c0_78 = arith.constant 0 : index
    %223 = vector.load %arg9[%c0_76, %c0_77, %c0_78] : memref<4x256x256xf32, #tpu.memory_space<vmem>>, vector<1x256x256xf32>
    %224 = vector.shape_cast %223 : vector<1x256x256xf32> to vector<256x256xf32>
    %cst_79 = arith.constant dense<0.000000e+00> : vector<16x256xf32>
    %225 = tpu.matmul %222, %224, %cst_79 {dimension_numbers = #tpu.dot_dimension_numbers<[1], [0], [0], [1], [0, 0, 1, 1], [], []>} : vector<16x256xf32>, vector<256x256xf32>, vector<16x256xf32> -> vector<16x256xf32>
    %c2_80 = arith.constant 2 : index
    %c0_81 = arith.constant 0 : index
    %226 = vector.load %arg17[%c2_80, %c0_81] : memref<20x256xf32, #tpu.memory_space<vmem>>, vector<16x256xf32>
    %c1_82 = arith.constant 1 : index
    %c0_83 = arith.constant 0 : index
    %c0_84 = arith.constant 0 : index
    %227 = vector.load %arg9[%c1_82, %c0_83, %c0_84] : memref<4x256x256xf32, #tpu.memory_space<vmem>>, vector<1x256x256xf32>
    %228 = vector.shape_cast %227 : vector<1x256x256xf32> to vector<256x256xf32>
    %cst_85 = arith.constant dense<0.000000e+00> : vector<16x256xf32>
    %229 = tpu.matmul %226, %228, %cst_85 {dimension_numbers = #tpu.dot_dimension_numbers<[1], [0], [0], [1], [0, 0, 1, 1], [], []>} : vector<16x256xf32>, vector<256x256xf32>, vector<16x256xf32> -> vector<16x256xf32>
    %230 = arith.addf %225, %229 : vector<16x256xf32>
    %231 = vector.broadcast %221 : vector<1x256xf32> to vector<16x256xf32>
    %232 = arith.addf %230, %231 : vector<16x256xf32>
    %c2_86 = arith.constant 2 : index
    %c0_87 = arith.constant 0 : index
    %233 = vector.load %arg17[%c2_86, %c0_87] : memref<20x256xf32, #tpu.memory_space<vmem>>, vector<16x256xf32>
    %c2_88 = arith.constant 2 : index
    %c0_89 = arith.constant 0 : index
    %c0_90 = arith.constant 0 : index
    %234 = vector.load %arg9[%c2_88, %c0_89, %c0_90] : memref<4x256x256xf32, #tpu.memory_space<vmem>>, vector<1x256x256xf32>
    %235 = vector.shape_cast %234 : vector<1x256x256xf32> to vector<256x256xf32>
    %cst_91 = arith.constant dense<0.000000e+00> : vector<16x256xf32>
    %236 = tpu.matmul %233, %235, %cst_91 {dimension_numbers = #tpu.dot_dimension_numbers<[1], [0], [0], [1], [0, 0, 1, 1], [], []>} : vector<16x256xf32>, vector<256x256xf32>, vector<16x256xf32> -> vector<16x256xf32>
    %c4_92 = arith.constant 4 : index
    %c0_93 = arith.constant 0 : index
    %237 = vector.load %arg17[%c4_92, %c0_93] : memref<20x256xf32, #tpu.memory_space<vmem>>, vector<16x256xf32>
    %c3_94 = arith.constant 3 : index
    %c0_95 = arith.constant 0 : index
    %c0_96 = arith.constant 0 : index
    %238 = vector.load %arg9[%c3_94, %c0_95, %c0_96] : memref<4x256x256xf32, #tpu.memory_space<vmem>>, vector<1x256x256xf32>
    %239 = vector.shape_cast %238 : vector<1x256x256xf32> to vector<256x256xf32>
    %cst_97 = arith.constant dense<0.000000e+00> : vector<16x256xf32>
    %240 = tpu.matmul %237, %239, %cst_97 {dimension_numbers = #tpu.dot_dimension_numbers<[1], [0], [0], [1], [0, 0, 1, 1], [], []>} : vector<16x256xf32>, vector<256x256xf32>, vector<16x256xf32> -> vector<16x256xf32>
    %241 = arith.addf %236, %240 : vector<16x256xf32>
    %242 = vector.broadcast %221 : vector<1x256xf32> to vector<16x256xf32>
    %243 = arith.addf %241, %242 : vector<16x256xf32>
    %c0_98 = arith.constant 0 : index
    %c0_99 = arith.constant 0 : index
    %244 = vector.load %arg11[%c0_98, %c0_99] : memref<1x256xf32, #tpu.memory_space<vmem>>, vector<1x256xf32>
    %c0_100 = arith.constant 0 : index
    %c0_101 = arith.constant 0 : index
    %245 = vector.load %arg12[%c0_100, %c0_101] : memref<1x256xf32, #tpu.memory_space<vmem>>, vector<1x256xf32>
    %cst_102 = arith.constant 0.000000e+00 : f32
    %246 = vector.broadcast %cst_102 : f32 to vector<16x256xf32>
    %247 = arith.maximumf %232, %246 : vector<16x256xf32>
    %cst_103 = arith.constant 0.000000e+00 : f32
    %248 = vector.broadcast %cst_103 : f32 to vector<16x256xf32>
    %249 = arith.maximumf %243, %248 : vector<16x256xf32>
    %cst_104 = arith.constant dense<0.000000e+00> : vector<256xf32>
    %250 = vector.multi_reduction <add>, %247, %cst_104 [0] : vector<16x256xf32> to vector<256xf32>
    %251 = vector.shape_cast %250 : vector<256xf32> to vector<1x256xf32>
    %cst_105 = arith.constant dense<0.000000e+00> : vector<256xf32>
    %252 = vector.multi_reduction <add>, %249, %cst_105 [0] : vector<16x256xf32> to vector<256xf32>
    %253 = vector.shape_cast %252 : vector<256xf32> to vector<1x256xf32>
    %254 = arith.addf %251, %253 : vector<1x256xf32>
    %255 = vector.extract_strided_slice %254 {offsets = [0, 0], sizes = [1, 16], strides = [1, 1]} : vector<1x256xf32> to vector<1x16xf32>
    %256 = vector.extract_strided_slice %254 {offsets = [0, 16], sizes = [1, 16], strides = [1, 1]} : vector<1x256xf32> to vector<1x16xf32>
    %257 = arith.addf %255, %256 : vector<1x16xf32>
    %258 = vector.extract_strided_slice %254 {offsets = [0, 32], sizes = [1, 16], strides = [1, 1]} : vector<1x256xf32> to vector<1x16xf32>
    %259 = arith.addf %257, %258 : vector<1x16xf32>
    %260 = vector.extract_strided_slice %254 {offsets = [0, 48], sizes = [1, 16], strides = [1, 1]} : vector<1x256xf32> to vector<1x16xf32>
    %261 = arith.addf %259, %260 : vector<1x16xf32>
    %262 = vector.extract_strided_slice %254 {offsets = [0, 64], sizes = [1, 16], strides = [1, 1]} : vector<1x256xf32> to vector<1x16xf32>
    %263 = arith.addf %261, %262 : vector<1x16xf32>
    %264 = vector.extract_strided_slice %254 {offsets = [0, 80], sizes = [1, 16], strides = [1, 1]} : vector<1x256xf32> to vector<1x16xf32>
    %265 = arith.addf %263, %264 : vector<1x16xf32>
    %266 = vector.extract_strided_slice %254 {offsets = [0, 96], sizes = [1, 16], strides = [1, 1]} : vector<1x256xf32> to vector<1x16xf32>
    %267 = arith.addf %265, %266 : vector<1x16xf32>
    %268 = vector.extract_strided_slice %254 {offsets = [0, 112], sizes = [1, 16], strides = [1, 1]} : vector<1x256xf32> to vector<1x16xf32>
    %269 = arith.addf %267, %268 : vector<1x16xf32>
    %270 = vector.extract_strided_slice %254 {offsets = [0, 128], sizes = [1, 16], strides = [1, 1]} : vector<1x256xf32> to vector<1x16xf32>
    %271 = arith.addf %269, %270 : vector<1x16xf32>
    %272 = vector.extract_strided_slice %254 {offsets = [0, 144], sizes = [1, 16], strides = [1, 1]} : vector<1x256xf32> to vector<1x16xf32>
    %273 = arith.addf %271, %272 : vector<1x16xf32>
    %274 = vector.extract_strided_slice %254 {offsets = [0, 160], sizes = [1, 16], strides = [1, 1]} : vector<1x256xf32> to vector<1x16xf32>
    %275 = arith.addf %273, %274 : vector<1x16xf32>
    %276 = vector.extract_strided_slice %254 {offsets = [0, 176], sizes = [1, 16], strides = [1, 1]} : vector<1x256xf32> to vector<1x16xf32>
    %277 = arith.addf %275, %276 : vector<1x16xf32>
    %278 = vector.extract_strided_slice %254 {offsets = [0, 192], sizes = [1, 16], strides = [1, 1]} : vector<1x256xf32> to vector<1x16xf32>
    %279 = arith.addf %277, %278 : vector<1x16xf32>
    %280 = vector.extract_strided_slice %254 {offsets = [0, 208], sizes = [1, 16], strides = [1, 1]} : vector<1x256xf32> to vector<1x16xf32>
    %281 = arith.addf %279, %280 : vector<1x16xf32>
    %282 = vector.extract_strided_slice %254 {offsets = [0, 224], sizes = [1, 16], strides = [1, 1]} : vector<1x256xf32> to vector<1x16xf32>
    %283 = arith.addf %281, %282 : vector<1x16xf32>
    %284 = vector.extract_strided_slice %254 {offsets = [0, 240], sizes = [1, 16], strides = [1, 1]} : vector<1x256xf32> to vector<1x16xf32>
    %285 = arith.addf %283, %284 : vector<1x16xf32>
    %cst_106 = arith.constant 5.120000e+02 : f32
    %286 = vector.broadcast %cst_106 : f32 to vector<1x16xf32>
    %287 = arith.divf %285, %286 : vector<1x16xf32>
    %288 = tpu.concatenate %287, %287, %287, %287, %287, %287, %287, %287, %287, %287, %287, %287, %287, %287, %287, %287 in 1 : vector<1x16xf32>, vector<1x16xf32>, vector<1x16xf32>, vector<1x16xf32>, vector<1x16xf32>, vector<1x16xf32>, vector<1x16xf32>, vector<1x16xf32>, vector<1x16xf32>, vector<1x16xf32>, vector<1x16xf32>, vector<1x16xf32>, vector<1x16xf32>, vector<1x16xf32>, vector<1x16xf32>, vector<1x16xf32> -> vector<1x256xf32>
    %289 = vector.broadcast %288 : vector<1x256xf32> to vector<16x256xf32>
    %290 = arith.subf %247, %289 : vector<16x256xf32>
    %291 = arith.mulf %290, %290 : vector<16x256xf32>
    %cst_107 = arith.constant dense<0.000000e+00> : vector<256xf32>
    %292 = vector.multi_reduction <add>, %291, %cst_107 [0] : vector<16x256xf32> to vector<256xf32>
    %293 = vector.shape_cast %292 : vector<256xf32> to vector<1x256xf32>
    %294 = vector.broadcast %288 : vector<1x256xf32> to vector<16x256xf32>
    %295 = arith.subf %249, %294 : vector<16x256xf32>
    %296 = arith.mulf %295, %295 : vector<16x256xf32>
    %cst_108 = arith.constant dense<0.000000e+00> : vector<256xf32>
    %297 = vector.multi_reduction <add>, %296, %cst_108 [0] : vector<16x256xf32> to vector<256xf32>
    %298 = vector.shape_cast %297 : vector<256xf32> to vector<1x256xf32>
    %299 = arith.addf %293, %298 : vector<1x256xf32>
    %300 = vector.extract_strided_slice %299 {offsets = [0, 0], sizes = [1, 16], strides = [1, 1]} : vector<1x256xf32> to vector<1x16xf32>
    %301 = vector.extract_strided_slice %299 {offsets = [0, 16], sizes = [1, 16], strides = [1, 1]} : vector<1x256xf32> to vector<1x16xf32>
    %302 = arith.addf %300, %301 : vector<1x16xf32>
    %303 = vector.extract_strided_slice %299 {offsets = [0, 32], sizes = [1, 16], strides = [1, 1]} : vector<1x256xf32> to vector<1x16xf32>
    %304 = arith.addf %302, %303 : vector<1x16xf32>
    %305 = vector.extract_strided_slice %299 {offsets = [0, 48], sizes = [1, 16], strides = [1, 1]} : vector<1x256xf32> to vector<1x16xf32>
    %306 = arith.addf %304, %305 : vector<1x16xf32>
    %307 = vector.extract_strided_slice %299 {offsets = [0, 64], sizes = [1, 16], strides = [1, 1]} : vector<1x256xf32> to vector<1x16xf32>
    %308 = arith.addf %306, %307 : vector<1x16xf32>
    %309 = vector.extract_strided_slice %299 {offsets = [0, 80], sizes = [1, 16], strides = [1, 1]} : vector<1x256xf32> to vector<1x16xf32>
    %310 = arith.addf %308, %309 : vector<1x16xf32>
    %311 = vector.extract_strided_slice %299 {offsets = [0, 96], sizes = [1, 16], strides = [1, 1]} : vector<1x256xf32> to vector<1x16xf32>
    %312 = arith.addf %310, %311 : vector<1x16xf32>
    %313 = vector.extract_strided_slice %299 {offsets = [0, 112], sizes = [1, 16], strides = [1, 1]} : vector<1x256xf32> to vector<1x16xf32>
    %314 = arith.addf %312, %313 : vector<1x16xf32>
    %315 = vector.extract_strided_slice %299 {offsets = [0, 128], sizes = [1, 16], strides = [1, 1]} : vector<1x256xf32> to vector<1x16xf32>
    %316 = arith.addf %314, %315 : vector<1x16xf32>
    %317 = vector.extract_strided_slice %299 {offsets = [0, 144], sizes = [1, 16], strides = [1, 1]} : vector<1x256xf32> to vector<1x16xf32>
    %318 = arith.addf %316, %317 : vector<1x16xf32>
    %319 = vector.extract_strided_slice %299 {offsets = [0, 160], sizes = [1, 16], strides = [1, 1]} : vector<1x256xf32> to vector<1x16xf32>
    %320 = arith.addf %318, %319 : vector<1x16xf32>
    %321 = vector.extract_strided_slice %299 {offsets = [0, 176], sizes = [1, 16], strides = [1, 1]} : vector<1x256xf32> to vector<1x16xf32>
    %322 = arith.addf %320, %321 : vector<1x16xf32>
    %323 = vector.extract_strided_slice %299 {offsets = [0, 192], sizes = [1, 16], strides = [1, 1]} : vector<1x256xf32> to vector<1x16xf32>
    %324 = arith.addf %322, %323 : vector<1x16xf32>
    %325 = vector.extract_strided_slice %299 {offsets = [0, 208], sizes = [1, 16], strides = [1, 1]} : vector<1x256xf32> to vector<1x16xf32>
    %326 = arith.addf %324, %325 : vector<1x16xf32>
    %327 = vector.extract_strided_slice %299 {offsets = [0, 224], sizes = [1, 16], strides = [1, 1]} : vector<1x256xf32> to vector<1x16xf32>
    %328 = arith.addf %326, %327 : vector<1x16xf32>
    %329 = vector.extract_strided_slice %299 {offsets = [0, 240], sizes = [1, 16], strides = [1, 1]} : vector<1x256xf32> to vector<1x16xf32>
    %330 = arith.addf %328, %329 : vector<1x16xf32>
    %cst_109 = arith.constant 5.120000e+02 : f32
    %331 = vector.broadcast %cst_109 : f32 to vector<1x16xf32>
    %332 = arith.divf %330, %331 : vector<1x16xf32>
    %cst_110 = arith.constant 9.99999974E-6 : f32
    %333 = vector.broadcast %cst_110 : f32 to vector<1x16xf32>
    %334 = arith.addf %332, %333 : vector<1x16xf32>
    %335 = math.rsqrt %334 : vector<1x16xf32>
    %336 = tpu.concatenate %335, %335, %335, %335, %335, %335, %335, %335, %335, %335, %335, %335, %335, %335, %335, %335 in 1 : vector<1x16xf32>, vector<1x16xf32>, vector<1x16xf32>, vector<1x16xf32>, vector<1x16xf32>, vector<1x16xf32>, vector<1x16xf32>, vector<1x16xf32>, vector<1x16xf32>, vector<1x16xf32>, vector<1x16xf32>, vector<1x16xf32>, vector<1x16xf32>, vector<1x16xf32>, vector<1x16xf32>, vector<1x16xf32> -> vector<1x256xf32>
    %337 = vector.broadcast %288 : vector<1x256xf32> to vector<16x256xf32>
    %338 = arith.subf %247, %337 : vector<16x256xf32>
    %339 = vector.broadcast %336 : vector<1x256xf32> to vector<16x256xf32>
    %340 = arith.mulf %338, %339 : vector<16x256xf32>
    %341 = vector.broadcast %244 : vector<1x256xf32> to vector<16x256xf32>
    %342 = arith.mulf %340, %341 : vector<16x256xf32>
    %343 = vector.broadcast %245 : vector<1x256xf32> to vector<16x256xf32>
    %344 = arith.addf %342, %343 : vector<16x256xf32>
    %345 = vector.broadcast %288 : vector<1x256xf32> to vector<16x256xf32>
    %346 = arith.subf %249, %345 : vector<16x256xf32>
    %347 = vector.broadcast %336 : vector<1x256xf32> to vector<16x256xf32>
    %348 = arith.mulf %346, %347 : vector<16x256xf32>
    %349 = vector.broadcast %244 : vector<1x256xf32> to vector<16x256xf32>
    %350 = arith.mulf %348, %349 : vector<16x256xf32>
    %351 = vector.broadcast %245 : vector<1x256xf32> to vector<16x256xf32>
    %352 = arith.addf %350, %351 : vector<16x256xf32>
    %353 = vector.extract_strided_slice %344 {offsets = [0, 0], sizes = [2, 256], strides = [1, 1]} : vector<16x256xf32> to vector<2x256xf32>
    %c0_111 = arith.constant 0 : index
    %c0_112 = arith.constant 0 : index
    %354 = vector.load %arg18[%c0_111, %c0_112] : memref<32x256xf32, #tpu.memory_space<vmem>>, vector<2x256xf32>
    tpu.vector_store %arg18[%c0_111, %c0_112], %353 {strides = array<i32>} : memref<32x256xf32, #tpu.memory_space<vmem>>, vector<2x256xf32>,
    %355 = vector.extract_strided_slice %344 {offsets = [2, 0], sizes = [2, 256], strides = [1, 1]} : vector<16x256xf32> to vector<2x256xf32>
    %c4_113 = arith.constant 4 : index
    %c0_114 = arith.constant 0 : index
    %356 = vector.load %arg18[%c4_113, %c0_114] : memref<32x256xf32, #tpu.memory_space<vmem>>, vector<2x256xf32>
    tpu.vector_store %arg18[%c4_113, %c0_114], %355 {strides = array<i32>} : memref<32x256xf32, #tpu.memory_space<vmem>>, vector<2x256xf32>,
    %357 = vector.extract_strided_slice %344 {offsets = [4, 0], sizes = [2, 256], strides = [1, 1]} : vector<16x256xf32> to vector<2x256xf32>
    %c8_115 = arith.constant 8 : index
    %c0_116 = arith.constant 0 : index
    %358 = vector.load %arg18[%c8_115, %c0_116] : memref<32x256xf32, #tpu.memory_space<vmem>>, vector<2x256xf32>
    tpu.vector_store %arg18[%c8_115, %c0_116], %357 {strides = array<i32>} : memref<32x256xf32, #tpu.memory_space<vmem>>, vector<2x256xf32>,
    %359 = vector.extract_strided_slice %344 {offsets = [6, 0], sizes = [2, 256], strides = [1, 1]} : vector<16x256xf32> to vector<2x256xf32>
    %c12_117 = arith.constant 12 : index
    %c0_118 = arith.constant 0 : index
    %360 = vector.load %arg18[%c12_117, %c0_118] : memref<32x256xf32, #tpu.memory_space<vmem>>, vector<2x256xf32>
    tpu.vector_store %arg18[%c12_117, %c0_118], %359 {strides = array<i32>} : memref<32x256xf32, #tpu.memory_space<vmem>>, vector<2x256xf32>,
    %361 = vector.extract_strided_slice %344 {offsets = [8, 0], sizes = [2, 256], strides = [1, 1]} : vector<16x256xf32> to vector<2x256xf32>
    %c16_119 = arith.constant 16 : index
    %c0_120 = arith.constant 0 : index
    %362 = vector.load %arg18[%c16_119, %c0_120] : memref<32x256xf32, #tpu.memory_space<vmem>>, vector<2x256xf32>
    tpu.vector_store %arg18[%c16_119, %c0_120], %361 {strides = array<i32>} : memref<32x256xf32, #tpu.memory_space<vmem>>, vector<2x256xf32>,
    %363 = vector.extract_strided_slice %344 {offsets = [10, 0], sizes = [2, 256], strides = [1, 1]} : vector<16x256xf32> to vector<2x256xf32>
    %c20 = arith.constant 20 : index
    %c0_121 = arith.constant 0 : index
    %364 = vector.load %arg18[%c20, %c0_121] : memref<32x256xf32, #tpu.memory_space<vmem>>, vector<2x256xf32>
    tpu.vector_store %arg18[%c20, %c0_121], %363 {strides = array<i32>} : memref<32x256xf32, #tpu.memory_space<vmem>>, vector<2x256xf32>,
    %365 = vector.extract_strided_slice %344 {offsets = [12, 0], sizes = [2, 256], strides = [1, 1]} : vector<16x256xf32> to vector<2x256xf32>
    %c24 = arith.constant 24 : index
    %c0_122 = arith.constant 0 : index
    %366 = vector.load %arg18[%c24, %c0_122] : memref<32x256xf32, #tpu.memory_space<vmem>>, vector<2x256xf32>
    tpu.vector_store %arg18[%c24, %c0_122], %365 {strides = array<i32>} : memref<32x256xf32, #tpu.memory_space<vmem>>, vector<2x256xf32>,
    %367 = vector.extract_strided_slice %344 {offsets = [14, 0], sizes = [2, 256], strides = [1, 1]} : vector<16x256xf32> to vector<2x256xf32>
    %c28 = arith.constant 28 : index
    %c0_123 = arith.constant 0 : index
    %368 = vector.load %arg18[%c28, %c0_123] : memref<32x256xf32, #tpu.memory_space<vmem>>, vector<2x256xf32>
    tpu.vector_store %arg18[%c28, %c0_123], %367 {strides = array<i32>} : memref<32x256xf32, #tpu.memory_space<vmem>>, vector<2x256xf32>,
    %369 = vector.extract_strided_slice %352 {offsets = [0, 0], sizes = [2, 256], strides = [1, 1]} : vector<16x256xf32> to vector<2x256xf32>
    %c2_124 = arith.constant 2 : index
    %c0_125 = arith.constant 0 : index
    %370 = vector.load %arg18[%c2_124, %c0_125] : memref<32x256xf32, #tpu.memory_space<vmem>>, vector<2x256xf32>
    tpu.vector_store %arg18[%c2_124, %c0_125], %369 {strides = array<i32>} : memref<32x256xf32, #tpu.memory_space<vmem>>, vector<2x256xf32>,
    %371 = vector.extract_strided_slice %352 {offsets = [2, 0], sizes = [2, 256], strides = [1, 1]} : vector<16x256xf32> to vector<2x256xf32>
    %c6_126 = arith.constant 6 : index
    %c0_127 = arith.constant 0 : index
    %372 = vector.load %arg18[%c6_126, %c0_127] : memref<32x256xf32, #tpu.memory_space<vmem>>, vector<2x256xf32>
    tpu.vector_store %arg18[%c6_126, %c0_127], %371 {strides = array<i32>} : memref<32x256xf32, #tpu.memory_space<vmem>>, vector<2x256xf32>,
    %373 = vector.extract_strided_slice %352 {offsets = [4, 0], sizes = [2, 256], strides = [1, 1]} : vector<16x256xf32> to vector<2x256xf32>
    %c10_128 = arith.constant 10 : index
    %c0_129 = arith.constant 0 : index
    %374 = vector.load %arg18[%c10_128, %c0_129] : memref<32x256xf32, #tpu.memory_space<vmem>>, vector<2x256xf32>
    tpu.vector_store %arg18[%c10_128, %c0_129], %373 {strides = array<i32>} : memref<32x256xf32, #tpu.memory_space<vmem>>, vector<2x256xf32>,
    %375 = vector.extract_strided_slice %352 {offsets = [6, 0], sizes = [2, 256], strides = [1, 1]} : vector<16x256xf32> to vector<2x256xf32>
    %c14_130 = arith.constant 14 : index
    %c0_131 = arith.constant 0 : index
    %376 = vector.load %arg18[%c14_130, %c0_131] : memref<32x256xf32, #tpu.memory_space<vmem>>, vector<2x256xf32>
    tpu.vector_store %arg18[%c14_130, %c0_131], %375 {strides = array<i32>} : memref<32x256xf32, #tpu.memory_space<vmem>>, vector<2x256xf32>,
    %377 = vector.extract_strided_slice %352 {offsets = [8, 0], sizes = [2, 256], strides = [1, 1]} : vector<16x256xf32> to vector<2x256xf32>
    %c18 = arith.constant 18 : index
    %c0_132 = arith.constant 0 : index
    %378 = vector.load %arg18[%c18, %c0_132] : memref<32x256xf32, #tpu.memory_space<vmem>>, vector<2x256xf32>
    tpu.vector_store %arg18[%c18, %c0_132], %377 {strides = array<i32>} : memref<32x256xf32, #tpu.memory_space<vmem>>, vector<2x256xf32>,
    %379 = vector.extract_strided_slice %352 {offsets = [10, 0], sizes = [2, 256], strides = [1, 1]} : vector<16x256xf32> to vector<2x256xf32>
    %c22 = arith.constant 22 : index
    %c0_133 = arith.constant 0 : index
    %380 = vector.load %arg18[%c22, %c0_133] : memref<32x256xf32, #tpu.memory_space<vmem>>, vector<2x256xf32>
    tpu.vector_store %arg18[%c22, %c0_133], %379 {strides = array<i32>} : memref<32x256xf32, #tpu.memory_space<vmem>>, vector<2x256xf32>,
    %381 = vector.extract_strided_slice %352 {offsets = [12, 0], sizes = [2, 256], strides = [1, 1]} : vector<16x256xf32> to vector<2x256xf32>
    %c26 = arith.constant 26 : index
    %c0_134 = arith.constant 0 : index
    %382 = vector.load %arg18[%c26, %c0_134] : memref<32x256xf32, #tpu.memory_space<vmem>>, vector<2x256xf32>
    tpu.vector_store %arg18[%c26, %c0_134], %381 {strides = array<i32>} : memref<32x256xf32, #tpu.memory_space<vmem>>, vector<2x256xf32>,
    %383 = vector.extract_strided_slice %352 {offsets = [14, 0], sizes = [2, 256], strides = [1, 1]} : vector<16x256xf32> to vector<2x256xf32>
    %c30 = arith.constant 30 : index
    %c0_135 = arith.constant 0 : index
    %384 = vector.load %arg18[%c30, %c0_135] : memref<32x256xf32, #tpu.memory_space<vmem>>, vector<2x256xf32>
    tpu.vector_store %arg18[%c30, %c0_135], %383 {strides = array<i32>} : memref<32x256xf32, #tpu.memory_space<vmem>>, vector<2x256xf32>,
    %c0_136 = arith.constant 0 : index
    %c0_137 = arith.constant 0 : index
    %385 = vector.load %arg14[%c0_136, %c0_137] : memref<1x84xf32, #tpu.memory_space<vmem>>, vector<1x84xf32>
    %c0_138 = arith.constant 0 : index
    %c0_139 = arith.constant 0 : index
    %386 = vector.load %arg18[%c0_138, %c0_139] : memref<32x256xf32, #tpu.memory_space<vmem>>, vector<28x256xf32>
    %c0_140 = arith.constant 0 : index
    %c0_141 = arith.constant 0 : index
    %c0_142 = arith.constant 0 : index
    %387 = vector.load %arg13[%c0_140, %c0_141, %c0_142] : memref<4x256x84xf32, #tpu.memory_space<vmem>>, vector<1x256x84xf32>
    %388 = vector.shape_cast %387 : vector<1x256x84xf32> to vector<256x84xf32>
    %cst_143 = arith.constant dense<0.000000e+00> : vector<28x84xf32>
    %389 = tpu.matmul %386, %388, %cst_143 {dimension_numbers = #tpu.dot_dimension_numbers<[1], [0], [0], [1], [0, 0, 1, 1], [], []>} : vector<28x256xf32>, vector<256x84xf32>, vector<28x84xf32> -> vector<28x84xf32>
    %c2_144 = arith.constant 2 : index
    %c0_145 = arith.constant 0 : index
    %390 = vector.load %arg18[%c2_144, %c0_145] : memref<32x256xf32, #tpu.memory_space<vmem>>, vector<28x256xf32>
    %c1_146 = arith.constant 1 : index
    %c0_147 = arith.constant 0 : index
    %c0_148 = arith.constant 0 : index
    %391 = vector.load %arg13[%c1_146, %c0_147, %c0_148] : memref<4x256x84xf32, #tpu.memory_space<vmem>>, vector<1x256x84xf32>
    %392 = vector.shape_cast %391 : vector<1x256x84xf32> to vector<256x84xf32>
    %cst_149 = arith.constant dense<0.000000e+00> : vector<28x84xf32>
    %393 = tpu.matmul %390, %392, %cst_149 {dimension_numbers = #tpu.dot_dimension_numbers<[1], [0], [0], [1], [0, 0, 1, 1], [], []>} : vector<28x256xf32>, vector<256x84xf32>, vector<28x84xf32> -> vector<28x84xf32>
    %394 = arith.addf %389, %393 : vector<28x84xf32>
    %395 = vector.broadcast %385 : vector<1x84xf32> to vector<28x84xf32>
    %396 = arith.addf %394, %395 : vector<28x84xf32>
    %c2_150 = arith.constant 2 : index
    %c0_151 = arith.constant 0 : index
    %397 = vector.load %arg18[%c2_150, %c0_151] : memref<32x256xf32, #tpu.memory_space<vmem>>, vector<28x256xf32>
    %c2_152 = arith.constant 2 : index
    %c0_153 = arith.constant 0 : index
    %c0_154 = arith.constant 0 : index
    %398 = vector.load %arg13[%c2_152, %c0_153, %c0_154] : memref<4x256x84xf32, #tpu.memory_space<vmem>>, vector<1x256x84xf32>
    %399 = vector.shape_cast %398 : vector<1x256x84xf32> to vector<256x84xf32>
    %cst_155 = arith.constant dense<0.000000e+00> : vector<28x84xf32>
    %400 = tpu.matmul %397, %399, %cst_155 {dimension_numbers = #tpu.dot_dimension_numbers<[1], [0], [0], [1], [0, 0, 1, 1], [], []>} : vector<28x256xf32>, vector<256x84xf32>, vector<28x84xf32> -> vector<28x84xf32>
    %c4_156 = arith.constant 4 : index
    %c0_157 = arith.constant 0 : index
    %401 = vector.load %arg18[%c4_156, %c0_157] : memref<32x256xf32, #tpu.memory_space<vmem>>, vector<28x256xf32>
    %c3_158 = arith.constant 3 : index
    %c0_159 = arith.constant 0 : index
    %c0_160 = arith.constant 0 : index
    %402 = vector.load %arg13[%c3_158, %c0_159, %c0_160] : memref<4x256x84xf32, #tpu.memory_space<vmem>>, vector<1x256x84xf32>
    %403 = vector.shape_cast %402 : vector<1x256x84xf32> to vector<256x84xf32>
    %cst_161 = arith.constant dense<0.000000e+00> : vector<28x84xf32>
    %404 = tpu.matmul %401, %403, %cst_161 {dimension_numbers = #tpu.dot_dimension_numbers<[1], [0], [0], [1], [0, 0, 1, 1], [], []>} : vector<28x256xf32>, vector<256x84xf32>, vector<28x84xf32> -> vector<28x84xf32>
    %405 = arith.addf %400, %404 : vector<28x84xf32>
    %406 = vector.broadcast %385 : vector<1x84xf32> to vector<28x84xf32>
    %407 = arith.addf %405, %406 : vector<28x84xf32>
    %408 = math.tanh %396 : vector<28x84xf32>
    %409 = math.tanh %407 : vector<28x84xf32>
    %410 = vector.extract_strided_slice %408 {offsets = [0, 0], sizes = [2, 84], strides = [1, 1]} : vector<28x84xf32> to vector<2x84xf32>
    %c0_162 = arith.constant 0 : index
    %c0_163 = arith.constant 0 : index
    %411 = vector.load %arg15[%c0_162, %c0_163] : memref<56x84xf32, #tpu.memory_space<vmem>>, vector<2x84xf32>
    tpu.vector_store %arg15[%c0_162, %c0_163], %410 {strides = array<i32>} : memref<56x84xf32, #tpu.memory_space<vmem>>, vector<2x84xf32>,
    %412 = vector.extract_strided_slice %408 {offsets = [2, 0], sizes = [2, 84], strides = [1, 1]} : vector<28x84xf32> to vector<2x84xf32>
    %c4_164 = arith.constant 4 : index
    %c0_165 = arith.constant 0 : index
    %413 = vector.load %arg15[%c4_164, %c0_165] : memref<56x84xf32, #tpu.memory_space<vmem>>, vector<2x84xf32>
    tpu.vector_store %arg15[%c4_164, %c0_165], %412 {strides = array<i32>} : memref<56x84xf32, #tpu.memory_space<vmem>>, vector<2x84xf32>,
    %414 = vector.extract_strided_slice %408 {offsets = [4, 0], sizes = [2, 84], strides = [1, 1]} : vector<28x84xf32> to vector<2x84xf32>
    %c8_166 = arith.constant 8 : index
    %c0_167 = arith.constant 0 : index
    %415 = vector.load %arg15[%c8_166, %c0_167] : memref<56x84xf32, #tpu.memory_space<vmem>>, vector<2x84xf32>
    tpu.vector_store %arg15[%c8_166, %c0_167], %414 {strides = array<i32>} : memref<56x84xf32, #tpu.memory_space<vmem>>, vector<2x84xf32>,
    %416 = vector.extract_strided_slice %408 {offsets = [6, 0], sizes = [2, 84], strides = [1, 1]} : vector<28x84xf32> to vector<2x84xf32>
    %c12_168 = arith.constant 12 : index
    %c0_169 = arith.constant 0 : index
    %417 = vector.load %arg15[%c12_168, %c0_169] : memref<56x84xf32, #tpu.memory_space<vmem>>, vector<2x84xf32>
    tpu.vector_store %arg15[%c12_168, %c0_169], %416 {strides = array<i32>} : memref<56x84xf32, #tpu.memory_space<vmem>>, vector<2x84xf32>,
    %418 = vector.extract_strided_slice %408 {offsets = [8, 0], sizes = [2, 84], strides = [1, 1]} : vector<28x84xf32> to vector<2x84xf32>
    %c16_170 = arith.constant 16 : index
    %c0_171 = arith.constant 0 : index
    %419 = vector.load %arg15[%c16_170, %c0_171] : memref<56x84xf32, #tpu.memory_space<vmem>>, vector<2x84xf32>
    tpu.vector_store %arg15[%c16_170, %c0_171], %418 {strides = array<i32>} : memref<56x84xf32, #tpu.memory_space<vmem>>, vector<2x84xf32>,
    %420 = vector.extract_strided_slice %408 {offsets = [10, 0], sizes = [2, 84], strides = [1, 1]} : vector<28x84xf32> to vector<2x84xf32>
    %c20_172 = arith.constant 20 : index
    %c0_173 = arith.constant 0 : index
    %421 = vector.load %arg15[%c20_172, %c0_173] : memref<56x84xf32, #tpu.memory_space<vmem>>, vector<2x84xf32>
    tpu.vector_store %arg15[%c20_172, %c0_173], %420 {strides = array<i32>} : memref<56x84xf32, #tpu.memory_space<vmem>>, vector<2x84xf32>,
    %422 = vector.extract_strided_slice %408 {offsets = [12, 0], sizes = [2, 84], strides = [1, 1]} : vector<28x84xf32> to vector<2x84xf32>
    %c24_174 = arith.constant 24 : index
    %c0_175 = arith.constant 0 : index
    %423 = vector.load %arg15[%c24_174, %c0_175] : memref<56x84xf32, #tpu.memory_space<vmem>>, vector<2x84xf32>
    tpu.vector_store %arg15[%c24_174, %c0_175], %422 {strides = array<i32>} : memref<56x84xf32, #tpu.memory_space<vmem>>, vector<2x84xf32>,
    %424 = vector.extract_strided_slice %408 {offsets = [14, 0], sizes = [2, 84], strides = [1, 1]} : vector<28x84xf32> to vector<2x84xf32>
    %c28_176 = arith.constant 28 : index
    %c0_177 = arith.constant 0 : index
    %425 = vector.load %arg15[%c28_176, %c0_177] : memref<56x84xf32, #tpu.memory_space<vmem>>, vector<2x84xf32>
    tpu.vector_store %arg15[%c28_176, %c0_177], %424 {strides = array<i32>} : memref<56x84xf32, #tpu.memory_space<vmem>>, vector<2x84xf32>,
    %426 = vector.extract_strided_slice %408 {offsets = [16, 0], sizes = [2, 84], strides = [1, 1]} : vector<28x84xf32> to vector<2x84xf32>
    %c32 = arith.constant 32 : index
    %c0_178 = arith.constant 0 : index
    %427 = vector.load %arg15[%c32, %c0_178] : memref<56x84xf32, #tpu.memory_space<vmem>>, vector<2x84xf32>
    tpu.vector_store %arg15[%c32, %c0_178], %426 {strides = array<i32>} : memref<56x84xf32, #tpu.memory_space<vmem>>, vector<2x84xf32>,
    %428 = vector.extract_strided_slice %408 {offsets = [18, 0], sizes = [2, 84], strides = [1, 1]} : vector<28x84xf32> to vector<2x84xf32>
    %c36 = arith.constant 36 : index
    %c0_179 = arith.constant 0 : index
    %429 = vector.load %arg15[%c36, %c0_179] : memref<56x84xf32, #tpu.memory_space<vmem>>, vector<2x84xf32>
    tpu.vector_store %arg15[%c36, %c0_179], %428 {strides = array<i32>} : memref<56x84xf32, #tpu.memory_space<vmem>>, vector<2x84xf32>,
    %430 = vector.extract_strided_slice %408 {offsets = [20, 0], sizes = [2, 84], strides = [1, 1]} : vector<28x84xf32> to vector<2x84xf32>
    %c40 = arith.constant 40 : index
    %c0_180 = arith.constant 0 : index
    %431 = vector.load %arg15[%c40, %c0_180] : memref<56x84xf32, #tpu.memory_space<vmem>>, vector<2x84xf32>
    tpu.vector_store %arg15[%c40, %c0_180], %430 {strides = array<i32>} : memref<56x84xf32, #tpu.memory_space<vmem>>, vector<2x84xf32>,
    %432 = vector.extract_strided_slice %408 {offsets = [22, 0], sizes = [2, 84], strides = [1, 1]} : vector<28x84xf32> to vector<2x84xf32>
    %c44 = arith.constant 44 : index
    %c0_181 = arith.constant 0 : index
    %433 = vector.load %arg15[%c44, %c0_181] : memref<56x84xf32, #tpu.memory_space<vmem>>, vector<2x84xf32>
    tpu.vector_store %arg15[%c44, %c0_181], %432 {strides = array<i32>} : memref<56x84xf32, #tpu.memory_space<vmem>>, vector<2x84xf32>,
    %434 = vector.extract_strided_slice %408 {offsets = [24, 0], sizes = [2, 84], strides = [1, 1]} : vector<28x84xf32> to vector<2x84xf32>
    %c48 = arith.constant 48 : index
    %c0_182 = arith.constant 0 : index
    %435 = vector.load %arg15[%c48, %c0_182] : memref<56x84xf32, #tpu.memory_space<vmem>>, vector<2x84xf32>
    tpu.vector_store %arg15[%c48, %c0_182], %434 {strides = array<i32>} : memref<56x84xf32, #tpu.memory_space<vmem>>, vector<2x84xf32>,
    %436 = vector.extract_strided_slice %408 {offsets = [26, 0], sizes = [2, 84], strides = [1, 1]} : vector<28x84xf32> to vector<2x84xf32>
    %c52 = arith.constant 52 : index
    %c0_183 = arith.constant 0 : index
    %437 = vector.load %arg15[%c52, %c0_183] : memref<56x84xf32, #tpu.memory_space<vmem>>, vector<2x84xf32>
    tpu.vector_store %arg15[%c52, %c0_183], %436 {strides = array<i32>} : memref<56x84xf32, #tpu.memory_space<vmem>>, vector<2x84xf32>,
    %438 = vector.extract_strided_slice %409 {offsets = [0, 0], sizes = [2, 84], strides = [1, 1]} : vector<28x84xf32> to vector<2x84xf32>
    %c2_184 = arith.constant 2 : index
    %c0_185 = arith.constant 0 : index
    %439 = vector.load %arg15[%c2_184, %c0_185] : memref<56x84xf32, #tpu.memory_space<vmem>>, vector<2x84xf32>
    tpu.vector_store %arg15[%c2_184, %c0_185], %438 {strides = array<i32>} : memref<56x84xf32, #tpu.memory_space<vmem>>, vector<2x84xf32>,
    %440 = vector.extract_strided_slice %409 {offsets = [2, 0], sizes = [2, 84], strides = [1, 1]} : vector<28x84xf32> to vector<2x84xf32>
    %c6_186 = arith.constant 6 : index
    %c0_187 = arith.constant 0 : index
    %441 = vector.load %arg15[%c6_186, %c0_187] : memref<56x84xf32, #tpu.memory_space<vmem>>, vector<2x84xf32>
    tpu.vector_store %arg15[%c6_186, %c0_187], %440 {strides = array<i32>} : memref<56x84xf32, #tpu.memory_space<vmem>>, vector<2x84xf32>,
    %442 = vector.extract_strided_slice %409 {offsets = [4, 0], sizes = [2, 84], strides = [1, 1]} : vector<28x84xf32> to vector<2x84xf32>
    %c10_188 = arith.constant 10 : index
    %c0_189 = arith.constant 0 : index
    %443 = vector.load %arg15[%c10_188, %c0_189] : memref<56x84xf32, #tpu.memory_space<vmem>>, vector<2x84xf32>
    tpu.vector_store %arg15[%c10_188, %c0_189], %442 {strides = array<i32>} : memref<56x84xf32, #tpu.memory_space<vmem>>, vector<2x84xf32>,
    %444 = vector.extract_strided_slice %409 {offsets = [6, 0], sizes = [2, 84], strides = [1, 1]} : vector<28x84xf32> to vector<2x84xf32>
    %c14_190 = arith.constant 14 : index
    %c0_191 = arith.constant 0 : index
    %445 = vector.load %arg15[%c14_190, %c0_191] : memref<56x84xf32, #tpu.memory_space<vmem>>, vector<2x84xf32>
    tpu.vector_store %arg15[%c14_190, %c0_191], %444 {strides = array<i32>} : memref<56x84xf32, #tpu.memory_space<vmem>>, vector<2x84xf32>,
    %446 = vector.extract_strided_slice %409 {offsets = [8, 0], sizes = [2, 84], strides = [1, 1]} : vector<28x84xf32> to vector<2x84xf32>
    %c18_192 = arith.constant 18 : index
    %c0_193 = arith.constant 0 : index
    %447 = vector.load %arg15[%c18_192, %c0_193] : memref<56x84xf32, #tpu.memory_space<vmem>>, vector<2x84xf32>
    tpu.vector_store %arg15[%c18_192, %c0_193], %446 {strides = array<i32>} : memref<56x84xf32, #tpu.memory_space<vmem>>, vector<2x84xf32>,
    %448 = vector.extract_strided_slice %409 {offsets = [10, 0], sizes = [2, 84], strides = [1, 1]} : vector<28x84xf32> to vector<2x84xf32>
    %c22_194 = arith.constant 22 : index
    %c0_195 = arith.constant 0 : index
    %449 = vector.load %arg15[%c22_194, %c0_195] : memref<56x84xf32, #tpu.memory_space<vmem>>, vector<2x84xf32>
    tpu.vector_store %arg15[%c22_194, %c0_195], %448 {strides = array<i32>} : memref<56x84xf32, #tpu.memory_space<vmem>>, vector<2x84xf32>,
    %450 = vector.extract_strided_slice %409 {offsets = [12, 0], sizes = [2, 84], strides = [1, 1]} : vector<28x84xf32> to vector<2x84xf32>
    %c26_196 = arith.constant 26 : index
    %c0_197 = arith.constant 0 : index
    %451 = vector.load %arg15[%c26_196, %c0_197] : memref<56x84xf32, #tpu.memory_space<vmem>>, vector<2x84xf32>
    tpu.vector_store %arg15[%c26_196, %c0_197], %450 {strides = array<i32>} : memref<56x84xf32, #tpu.memory_space<vmem>>, vector<2x84xf32>,
    %452 = vector.extract_strided_slice %409 {offsets = [14, 0], sizes = [2, 84], strides = [1, 1]} : vector<28x84xf32> to vector<2x84xf32>
    %c30_198 = arith.constant 30 : index
    %c0_199 = arith.constant 0 : index
    %453 = vector.load %arg15[%c30_198, %c0_199] : memref<56x84xf32, #tpu.memory_space<vmem>>, vector<2x84xf32>
    tpu.vector_store %arg15[%c30_198, %c0_199], %452 {strides = array<i32>} : memref<56x84xf32, #tpu.memory_space<vmem>>, vector<2x84xf32>,
    %454 = vector.extract_strided_slice %409 {offsets = [16, 0], sizes = [2, 84], strides = [1, 1]} : vector<28x84xf32> to vector<2x84xf32>
    %c34 = arith.constant 34 : index
    %c0_200 = arith.constant 0 : index
    %455 = vector.load %arg15[%c34, %c0_200] : memref<56x84xf32, #tpu.memory_space<vmem>>, vector<2x84xf32>
    tpu.vector_store %arg15[%c34, %c0_200], %454 {strides = array<i32>} : memref<56x84xf32, #tpu.memory_space<vmem>>, vector<2x84xf32>,
    %456 = vector.extract_strided_slice %409 {offsets = [18, 0], sizes = [2, 84], strides = [1, 1]} : vector<28x84xf32> to vector<2x84xf32>
    %c38 = arith.constant 38 : index
    %c0_201 = arith.constant 0 : index
    %457 = vector.load %arg15[%c38, %c0_201] : memref<56x84xf32, #tpu.memory_space<vmem>>, vector<2x84xf32>
    tpu.vector_store %arg15[%c38, %c0_201], %456 {strides = array<i32>} : memref<56x84xf32, #tpu.memory_space<vmem>>, vector<2x84xf32>,
    %458 = vector.extract_strided_slice %409 {offsets = [20, 0], sizes = [2, 84], strides = [1, 1]} : vector<28x84xf32> to vector<2x84xf32>
    %c42 = arith.constant 42 : index
    %c0_202 = arith.constant 0 : index
    %459 = vector.load %arg15[%c42, %c0_202] : memref<56x84xf32, #tpu.memory_space<vmem>>, vector<2x84xf32>
    tpu.vector_store %arg15[%c42, %c0_202], %458 {strides = array<i32>} : memref<56x84xf32, #tpu.memory_space<vmem>>, vector<2x84xf32>,
    %460 = vector.extract_strided_slice %409 {offsets = [22, 0], sizes = [2, 84], strides = [1, 1]} : vector<28x84xf32> to vector<2x84xf32>
    %c46 = arith.constant 46 : index
    %c0_203 = arith.constant 0 : index
    %461 = vector.load %arg15[%c46, %c0_203] : memref<56x84xf32, #tpu.memory_space<vmem>>, vector<2x84xf32>
    tpu.vector_store %arg15[%c46, %c0_203], %460 {strides = array<i32>} : memref<56x84xf32, #tpu.memory_space<vmem>>, vector<2x84xf32>,
    %462 = vector.extract_strided_slice %409 {offsets = [24, 0], sizes = [2, 84], strides = [1, 1]} : vector<28x84xf32> to vector<2x84xf32>
    %c50 = arith.constant 50 : index
    %c0_204 = arith.constant 0 : index
    %463 = vector.load %arg15[%c50, %c0_204] : memref<56x84xf32, #tpu.memory_space<vmem>>, vector<2x84xf32>
    tpu.vector_store %arg15[%c50, %c0_204], %462 {strides = array<i32>} : memref<56x84xf32, #tpu.memory_space<vmem>>, vector<2x84xf32>,
    %464 = vector.extract_strided_slice %409 {offsets = [26, 0], sizes = [2, 84], strides = [1, 1]} : vector<28x84xf32> to vector<2x84xf32>
    %c54 = arith.constant 54 : index
    %c0_205 = arith.constant 0 : index
    %465 = vector.load %arg15[%c54, %c0_205] : memref<56x84xf32, #tpu.memory_space<vmem>>, vector<2x84xf32>
    tpu.vector_store %arg15[%c54, %c0_205], %464 {strides = array<i32>} : memref<56x84xf32, #tpu.memory_space<vmem>>, vector<2x84xf32>,
    return
  }
  func.func @transform_0(%arg0: i32) -> (i32, i32) {
    %c0_i32 = arith.constant 0 : i32
    %c0_i32_0 = arith.constant 0 : i32
    %c0_i32_1 = arith.constant 0 : i32
    return %c0_i32, %c0_i32_0 : i32, i32
  }
  func.func @transform_1(%arg0: i32) -> (i32, i32) {
    %c0_i32 = arith.constant 0 : i32
    %c0_i32_0 = arith.constant 0 : i32
    %c0_i32_1 = arith.constant 0 : i32
    return %c0_i32, %c0_i32_0 : i32, i32
  }
  func.func @transform_2(%arg0: i32) -> (i32, i32) {
    %c0_i32 = arith.constant 0 : i32
    %c0_i32_0 = arith.constant 0 : i32
    %c0_i32_1 = arith.constant 0 : i32
    return %c0_i32, %c0_i32_0 : i32, i32
  }
  func.func @transform_3(%arg0: i32) -> (i32, i32) {
    %c0_i32 = arith.constant 0 : i32
    %c0_i32_0 = arith.constant 0 : i32
    %c0_i32_1 = arith.constant 0 : i32
    return %c0_i32, %c0_i32_0 : i32, i32
  }
  func.func @transform_4(%arg0: i32) -> (i32, i32, i32) {
    %c0_i32 = arith.constant 0 : i32
    %c0_i32_0 = arith.constant 0 : i32
    %c0_i32_1 = arith.constant 0 : i32
    %c0_i32_2 = arith.constant 0 : i32
    return %c0_i32, %c0_i32_0, %c0_i32_1 : i32, i32, i32
  }
  func.func @transform_5(%arg0: i32) -> (i32, i32) {
    %c0_i32 = arith.constant 0 : i32
    %c0_i32_0 = arith.constant 0 : i32
    %c0_i32_1 = arith.constant 0 : i32
    return %c0_i32, %c0_i32_0 : i32, i32
  }
  func.func @transform_6(%arg0: i32) -> (i32, i32) {
    %c0_i32 = arith.constant 0 : i32
    %c0_i32_0 = arith.constant 0 : i32
    %c0_i32_1 = arith.constant 0 : i32
    return %c0_i32, %c0_i32_0 : i32, i32
  }
  func.func @transform_7(%arg0: i32) -> (i32, i32) {
    %c0_i32 = arith.constant 0 : i32
    %c0_i32_0 = arith.constant 0 : i32
    %c0_i32_1 = arith.constant 0 : i32
    return %c0_i32, %c0_i32_0 : i32, i32
  }
  func.func @transform_8(%arg0: i32) -> (i32, i32, i32) {
    %c0_i32 = arith.constant 0 : i32
    %c0_i32_0 = arith.constant 0 : i32
    %c0_i32_1 = arith.constant 0 : i32
    %c0_i32_2 = arith.constant 0 : i32
    return %c0_i32, %c0_i32_0, %c0_i32_1 : i32, i32, i32
  }
  func.func @transform_9(%arg0: i32) -> (i32, i32) {
    %c0_i32 = arith.constant 0 : i32
    %c0_i32_0 = arith.constant 0 : i32
    %c0_i32_1 = arith.constant 0 : i32
    return %c0_i32, %c0_i32_0 : i32, i32
  }
  func.func @transform_10(%arg0: i32) -> (i32, i32) {
    %c0_i32 = arith.constant 0 : i32
    %c0_i32_0 = arith.constant 0 : i32
    %c0_i32_1 = arith.constant 0 : i32
    return %c0_i32, %c0_i32_0 : i32, i32
  }
  func.func @transform_11(%arg0: i32) -> (i32, i32) {
    %c0_i32 = arith.constant 0 : i32
    %c0_i32_0 = arith.constant 0 : i32
    %c0_i32_1 = arith.constant 0 : i32
    return %c0_i32, %c0_i32_0 : i32, i32
  }
  func.func @transform_12(%arg0: i32) -> (i32, i32, i32) {
    %c0_i32 = arith.constant 0 : i32
    %c0_i32_0 = arith.constant 0 : i32
    %c0_i32_1 = arith.constant 0 : i32
    %c0_i32_2 = arith.constant 0 : i32
    return %c0_i32, %c0_i32_0, %c0_i32_1 : i32, i32, i32
  }
  func.func @transform_13(%arg0: i32) -> (i32, i32) {
    %c0_i32 = arith.constant 0 : i32
    %c0_i32_0 = arith.constant 0 : i32
    %c0_i32_1 = arith.constant 0 : i32
    return %c0_i32, %c0_i32_0 : i32, i32
  }
  func.func @transform_14(%arg0: i32) -> (i32, i32) {
    %c0_i32 = arith.constant 0 : i32
    %c0_i32_0 = arith.constant 0 : i32
    %c0_i32_1 = arith.constant 0 : i32
    return %c0_i32, %c0_i32_0 : i32, i32
  }
}

</mosaic_0001>

<llo_original>
// kernel: generator_forward.1
$region0: #{generator_forward.1}
  #allocation0 [shape = 'u32[]', space=smem, size = 0x4, offset = 0x4, fixed_abs, tag = 'smem constant byte address 0x4 - core index']
  #allocation1 [shape = 'u32[72,128]{1,0:T(1,128)}', space=vmem, size = 0x9000, scoped, tag = 'internal scratch']
  #allocation2 [shape = 'f32[12,256]{1,0:T(8,128)}', space=vmem, size = 0x4000, scoped, tag = 'scratch operand']
  #allocation3 [shape = 'f32[20,256]{1,0:T(8,128)}', space=vmem, size = 0x6000, scoped, tag = 'scratch operand']
  #allocation4 [shape = 'f32[32,256]{1,0:T(8,128)}', space=vmem, size = 0x8000, scoped, tag = 'scratch operand']
  %s0 = inlined_call_operand.vmem [shape: f32[2,32], index: 0, kind: input, shape index: {}]
  %s1 = inlined_call_operand.vmem [shape: f32[32,1024], index: 1, kind: input, shape index: {}]
  %s2 = inlined_call_operand.vmem [shape: f32[1,1024], index: 2, kind: input, shape index: {}]
  %s3 = inlined_call_operand.vmem [shape: f32[1,1024], index: 3, kind: input, shape index: {}]
  %s4 = inlined_call_operand.hbm [shape: f32[4,256,256], index: 4, kind: input, shape index: {}]
  %s5 = inlined_call_operand.vmem [shape: f32[1,256], index: 5, kind: input, shape index: {}]
  %s6 = inlined_call_operand.vmem [shape: f32[1,256], index: 6, kind: input, shape index: {}]
  %s7 = inlined_call_operand.vmem [shape: f32[1,256], index: 7, kind: input, shape index: {}]
  %s8 = inlined_call_operand.hbm [shape: f32[4,256,256], index: 8, kind: input, shape index: {}]
  %s9 = inlined_call_operand.vmem [shape: f32[1,256], index: 9, kind: input, shape index: {}]
  %s10 = inlined_call_operand.vmem [shape: f32[1,256], index: 10, kind: input, shape index: {}]
  %s11 = inlined_call_operand.vmem [shape: f32[1,256], index: 11, kind: input, shape index: {}]
  %s12 = inlined_call_operand.vmem [shape: f32[4,256,84], index: 12, kind: input, shape index: {}]
  %s13 = inlined_call_operand.vmem [shape: f32[1,84], index: 13, kind: input, shape index: {}]
  %s14 = inlined_call_operand.vmem [shape: f32[56,84], index: 14, kind: output, shape index: {}]
  %s15 = sld [smem:[#allocation0]]
  $region74: #{generator_forward.1} parent=0
    _
  %s17 = ssub.s32 1, %s15
  %s18 = scalar_select 0, %s17, %s15
  $region1: #{generator_forward.1} parent=0
    #allocation5 [shape = 'u8[1048576]{0}', space=vmem, size = 0x100000, scoped, tag = 'input window, operand 4, single buffered']
    #allocation6 [shape = 's32[1]{0}', space=sflag, size = 0x4, scoped, tag = 'scoped memory for generator_forward.1']
    #allocation7 [shape = 'u8[1048576]{0}', space=vmem, size = 0x100000, scoped, tag = 'input window, operand 8, single buffered']
    #allocation8 [shape = 's32[1]{0}', space=sflag, size = 0x4, scoped, tag = 'scoped memory for generator_forward.1']
    %19 = vsyncpa [#allocation6], 0
    %20 = vsyncpa [#allocation8], 0
    // Predicated region
    $region2: #{generator_forward.1} parent=1 // pred_check
      _
    $region3: #{generator_forward.1} parent=1 // pred_check_branch
      %22 = sbr.rel (0) target = $region5
    $region4: #{generator_forward.1} parent=1 // pred_region
      _
    $region5: #{generator_forward.1} parent=1 // pred_fallthru
      _
    // Predicated region
    $region6: #{generator_forward.1} parent=1 // pred_check
      _
    $region7: #{generator_forward.1} parent=1 // pred_check_branch
      %24 = sbr.rel (0) target = $region9
    $region8: #{generator_forward.1} parent=1 // pred_region
      _
    $region9: #{generator_forward.1} parent=1 // pred_fallthru
      _
    // Predicated region
    $region10: #{generator_forward.1} parent=1 // pred_check
      _
    $region11: #{generator_forward.1} parent=1 // pred_check_branch
      %26 = sbr.rel (0) target = $region13
    $region12: #{generator_forward.1} parent=1 // pred_region
      _
    $region13: #{generator_forward.1} parent=1 // pred_fallthru
      _
    // Predicated region
    $region14: #{generator_forward.1} parent=1 // pred_check
      _
    $region15: #{generator_forward.1} parent=1 // pred_check_branch
      %28 = sbr.rel (0) target = $region17
    $region16: #{generator_forward.1} parent=1 // pred_region
      _
    $region17: #{generator_forward.1} parent=1 // pred_fallthru
      _
    // Predicated region
    $region18: #{generator_forward.1} parent=1 // pred_check
      _
    $region19: #{generator_forward.1} parent=1 // pred_check_branch
      %30 = sbr.rel (0) target = $region21
    $region20: #{generator_forward.1} parent=1 // pred_region
      %32 = vsyncadd [#allocation6], 0
      %s33 = sshll.u32 %s4, 4
      %s34 = int_to_ptr.hbm [resolvable:$true] %s33
      %s35 = sshll.u32 [#allocation5], 4
      %s36 = int_to_ptr.vmem [resolvable:$true] %s35
      %41 = dma.hbm_to_vmem [thread:$0]  %s34, 32768, %s36, [#allocation6], 256, 256, 16
    $region21: #{generator_forward.1} parent=1 // pred_fallthru
      _
    // Predicated region
    $region22: #{generator_forward.1} parent=1 // pred_check
      _
    $region23: #{generator_forward.1} parent=1 // pred_check_branch
      %43 = sbr.rel (0) target = $region25
    $region24: #{generator_forward.1} parent=1 // pred_region
      _
    $region25: #{generator_forward.1} parent=1 // pred_fallthru
      _
    // Predicated region
    $region26: #{generator_forward.1} parent=1 // pred_check
      _
    $region27: #{generator_forward.1} parent=1 // pred_check_branch
      %45 = sbr.rel (0) target = $region29
    $region28: #{generator_forward.1} parent=1 // pred_region
      _
    $region29: #{generator_forward.1} parent=1 // pred_fallthru
      _
    // Predicated region
    $region30: #{generator_forward.1} parent=1 // pred_check
      _
    $region31: #{generator_forward.1} parent=1 // pred_check_branch
      %47 = sbr.rel (0) target = $region33
    $region32: #{generator_forward.1} parent=1 // pred_region
      _
    $region33: #{generator_forward.1} parent=1 // pred_fallthru
      _
    // Predicated region
    $region34: #{generator_forward.1} parent=1 // pred_check
      _
    $region35: #{generator_forward.1} parent=1 // pred_check_branch
      %49 = sbr.rel (0) target = $region37
    $region36: #{generator_forward.1} parent=1 // pred_region
      %51 = vsyncadd [#allocation8], 0
      %s52 = sshll.u32 %s8, 4
      %s53 = int_to_ptr.hbm [resolvable:$true] %s52
      %s54 = sshll.u32 [#allocation7], 4
      %s55 = int_to_ptr.vmem [resolvable:$true] %s54
      %60 = dma.hbm_to_vmem [thread:$0]  %s53, 32768, %s55, [#allocation8], 256, 256, 16
    $region37: #{generator_forward.1} parent=1 // pred_fallthru
      _
    // Predicated region
    $region38: #{generator_forward.1} parent=1 // pred_check
      _
    $region39: #{generator_forward.1} parent=1 // pred_check_branch
      %62 = sbr.rel (0) target = $region41
    $region40: #{generator_forward.1} parent=1 // pred_region
      _
    $region41: #{generator_forward.1} parent=1 // pred_fallthru
      _
    // Predicated region
    $region42: #{generator_forward.1} parent=1 // pred_check
      _
    $region43: #{generator_forward.1} parent=1 // pred_check_branch
      %64 = sbr.rel (0) target = $region45
    $region44: #{generator_forward.1} parent=1 // pred_region
      _
    $region45: #{generator_forward.1} parent=1 // pred_fallthru
      _
    // Predicated region
    $region46: #{generator_forward.1} parent=1 // pred_check
      _
    $region47: #{generator_forward.1} parent=1 // pred_check_branch
      %66 = sbr.rel (0) target = $region49
    $region48: #{generator_forward.1} parent=1 // pred_region
      _
    $region49: #{generator_forward.1} parent=1 // pred_fallthru
      _
    // Predicated region
    $region50: #{generator_forward.1} parent=1 // pred_check
      _
    $region51: #{generator_forward.1} parent=1 // pred_check_branch
      %68 = sbr.rel (0) target = $region53
    $region52: #{generator_forward.1} parent=1 // pred_region
      _
    $region53: #{generator_forward.1} parent=1 // pred_fallthru
      _
    // Predicated region
    $region54: #{generator_forward.1} parent=1 // pred_check
      _
    $region55: #{generator_forward.1} parent=1 // pred_check_branch
      %70 = sbr.rel (0) target = $region57
    $region56: #{generator_forward.1} parent=1 // pred_region
      _
    $region57: #{generator_forward.1} parent=1 // pred_fallthru
      _
    // Predicated region
    $region58: #{generator_forward.1} parent=1 // pred_check
      _
    $region59: #{generator_forward.1} parent=1 // pred_check_branch
      %72 = sbr.rel (0) target = $region61
    $region60: #{generator_forward.1} parent=1 // pred_region
      %74 = dma.done [#allocation6], 32768
    $region61: #{generator_forward.1} parent=1 // pred_fallthru
      _
    // Predicated region
    $region62: #{generator_forward.1} parent=1 // pred_check
      _
    $region63: #{generator_forward.1} parent=1 // pred_check_branch
      %76 = sbr.rel (0) target = $region65
    $region64: #{generator_forward.1} parent=1 // pred_region
      %78 = dma.done [#allocation8], 32768
    $region65: #{generator_forward.1} parent=1 // pred_fallthru
      _
    %79 = vst [vmem:[#allocation2] sm:$0xff] 0.0
    %80 = vst [vmem:[#allocation2 + $0x8] sm:$0xff] 0.0
    %81 = vst [vmem:[#allocation2 + $0x10] sm:$0xf] 0.0
    %82 = vst [vmem:[#allocation2 + $0x18] sm:$0xf] 0.0
    %83 = vst [vmem:[#allocation3] sm:$0xff] 0.0
    %84 = vst [vmem:[#allocation3 + $0x8] sm:$0xff] 0.0
    %85 = vst [vmem:[#allocation3 + $0x10] sm:$0xff] 0.0
    %86 = vst [vmem:[#allocation3 + $0x18] sm:$0xff] 0.0
    %87 = vst [vmem:[#allocation3 + $0x20] sm:$0xf] 0.0
    %88 = vst [vmem:[#allocation3 + $0x28] sm:$0xf] 0.0
    %v89 = vld [vmem:[%s0] sm:$0x3]
    %v90 = vld [vmem:[%s1] sm:$0xff]
    %v91 = vld [vmem:[%s1 + $0x8] sm:$0xff]
    %v92 = vld [vmem:[%s1 + $0x10] sm:$0xff]
    %v93 = vld [vmem:[%s1 + $0x18] sm:$0xff]
    %v94 = vld [vmem:[%s1 + $0x20] sm:$0xff]
    %v95 = vld [vmem:[%s1 + $0x28] sm:$0xff]
    %v96 = vld [vmem:[%s1 + $0x30] sm:$0xff]
    %v97 = vld [vmem:[%s1 + $0x38] sm:$0xff]
    %v98 = vld [vmem:[%s1 + $0x40] sm:$0xff]
    %v99 = vld [vmem:[%s1 + $0x48] sm:$0xff]
    %v100 = vld [vmem:[%s1 + $0x50] sm:$0xff]
    %v101 = vld [vmem:[%s1 + $0x58] sm:$0xff]
    %v102 = vld [vmem:[%s1 + $0x60] sm:$0xff]
    %v103 = vld [vmem:[%s1 + $0x68] sm:$0xff]
    %v104 = vld [vmem:[%s1 + $0x70] sm:$0xff]
    %v105 = vld [vmem:[%s1 + $0x78] sm:$0xff]
    %v106 = vld [vmem:[%s1 + $0x80] sm:$0xff]
    %v107 = vld [vmem:[%s1 + $0x88] sm:$0xff]
    %v108 = vld [vmem:[%s1 + $0x90] sm:$0xff]
    %v109 = vld [vmem:[%s1 + $0x98] sm:$0xff]
    %v110 = vld [vmem:[%s1 + $0xa0] sm:$0xff]
    %v111 = vld [vmem:[%s1 + $0xa8] sm:$0xff]
    %v112 = vld [vmem:[%s1 + $0xb0] sm:$0xff]
    %v113 = vld [vmem:[%s1 + $0xb8] sm:$0xff]
    %v114 = vld [vmem:[%s1 + $0xc0] sm:$0xff]
    %v115 = vld [vmem:[%s1 + $0xc8] sm:$0xff]
    %v116 = vld [vmem:[%s1 + $0xd0] sm:$0xff]
    %v117 = vld [vmem:[%s1 + $0xd8] sm:$0xff]
    %v118 = vld [vmem:[%s1 + $0xe0] sm:$0xff]
    %v119 = vld [vmem:[%s1 + $0xe8] sm:$0xff]
    %v120 = vld [vmem:[%s1 + $0xf0] sm:$0xff]
    %v121 = vld [vmem:[%s1 + $0xf8] sm:$0xff]
    %vm122 = vcmask 261120
    %v124 = vsel %vm122, %v89, 0
    %126 = vmatpush.msra.mxu0 0.0
    %127 = vmatpush.msra.mxu0 0.0
    %128 = vmatpush.msra.mxu0 0.0
    %129 = vmatpush.msra.mxu0 0.0
    %130 = vmatpush.msra.mxu0 0.0
    %131 = vmatpush.msra.mxu0 0.0
    %132 = vmatpush.msra.mxu0 0.0
    %133 = vmatpush.msra.mxu0 0.0
    %134 = vmatpush.msra.mxu0 0.0
    %135 = vmatpush.msra.mxu0 0.0
    %136 = vmatpush.msra.mxu0 0.0
    %137 = vmatpush.msra.mxu0 0.0
    %138 = vmatpush.msra.mxu0 %v114
    %139 = vmatpush.msra.mxu0 %v106
    %140 = vmatpush.msra.mxu0 %v98
    %141 = vmatpush.msra.mxu0 %v90
    %142 = vmatmul.f32.gmra.mxu0 %v124
    %v143 = vpop.f32.mrf.mxu0
    %v144 = vadd.f32 0.0, %v143
    %145 = vdwg.mxu0
    %146 = vmatpush.msra.mxu0 0.0
    %147 = vmatpush.msra.mxu0 0.0
    %148 = vmatpush.msra.mxu0 0.0
    %149 = vmatpush.msra.mxu0 0.0
    %150 = vmatpush.msra.mxu0 0.0
    %151 = vmatpush.msra.mxu0 0.0
    %152 = vmatpush.msra.mxu0 0.0
    %153 = vmatpush.msra.mxu0 0.0
    %154 = vmatpush.msra.mxu0 0.0
    %155 = vmatpush.msra.mxu0 0.0
    %156 = vmatpush.msra.mxu0 0.0
    %157 = vmatpush.msra.mxu0 0.0
    %158 = vmatpush.msra.mxu0 %v115
    %159 = vmatpush.msra.mxu0 %v107
    %160 = vmatpush.msra.mxu0 %v99
    %161 = vmatpush.msra.mxu0 %v91
    %162 = vmatmul.f32.gmra.mxu0 %v124
    %v163 = vpop.f32.mrf.mxu0
    %v164 = vadd.f32 0.0, %v163
    %165 = vdwg.mxu0
    %166 = vmatpush.msra.mxu0 0.0
    %167 = vmatpush.msra.mxu0 0.0
    %168 = vmatpush.msra.mxu0 0.0
    %169 = vmatpush.msra.mxu0 0.0
    %170 = vmatpush.msra.mxu0 0.0
    %171 = vmatpush.msra.mxu0 0.0
    %172 = vmatpush.msra.mxu0 0.0
    %173 = vmatpush.msra.mxu0 0.0
    %174 = vmatpush.msra.mxu0 0.0
    %175 = vmatpush.msra.mxu0 0.0
    %176 = vmatpush.msra.mxu0 0.0
    %177 = vmatpush.msra.mxu0 0.0
    %178 = vmatpush.msra.mxu0 %v116
    %179 = vmatpush.msra.mxu0 %v108
    %180 = vmatpush.msra.mxu0 %v100
    %181 = vmatpush.msra.mxu0 %v92
    %182 = vmatmul.f32.gmra.mxu0 %v124
    %v183 = vpop.f32.mrf.mxu0
    %v184 = vadd.f32 0.0, %v183
    %185 = vdwg.mxu0
    %186 = vmatpush.msra.mxu0 0.0
    %187 = vmatpush.msra.mxu0 0.0
    %188 = vmatpush.msra.mxu0 0.0
    %189 = vmatpush.msra.mxu0 0.0
    %190 = vmatpush.msra.mxu0 0.0
    %191 = vmatpush.msra.mxu0 0.0
    %192 = vmatpush.msra.mxu0 0.0
    %193 = vmatpush.msra.mxu0 0.0
    %194 = vmatpush.msra.mxu0 0.0
    %195 = vmatpush.msra.mxu0 0.0
    %196 = vmatpush.msra.mxu0 0.0
    %197 = vmatpush.msra.mxu0 0.0
    %198 = vmatpush.msra.mxu0 %v117
    %199 = vmatpush.msra.mxu0 %v109
    %200 = vmatpush.msra.mxu0 %v101
    %201 = vmatpush.msra.mxu0 %v93
    %202 = vmatmul.f32.gmra.mxu0 %v124
    %v203 = vpop.f32.mrf.mxu0
    %v204 = vadd.f32 0.0, %v203
    %205 = vdwg.mxu0
    %206 = vmatpush.msra.mxu0 0.0
    %207 = vmatpush.msra.mxu0 0.0
    %208 = vmatpush.msra.mxu0 0.0
    %209 = vmatpush.msra.mxu0 0.0
    %210 = vmatpush.msra.mxu0 0.0
    %211 = vmatpush.msra.mxu0 0.0
    %212 = vmatpush.msra.mxu0 0.0
    %213 = vmatpush.msra.mxu0 0.0
    %214 = vmatpush.msra.mxu0 0.0
    %215 = vmatpush.msra.mxu0 0.0
    %216 = vmatpush.msra.mxu0 0.0
    %217 = vmatpush.msra.mxu0 0.0
    %218 = vmatpush.msra.mxu0 %v118
    %219 = vmatpush.msra.mxu0 %v110
    %220 = vmatpush.msra.mxu0 %v102
    %221 = vmatpush.msra.mxu0 %v94
    %222 = vmatmul.f32.gmra.mxu0 %v124
    %v223 = vpop.f32.mrf.mxu0
    %v224 = vadd.f32 0.0, %v223
    %225 = vdwg.mxu0
    %226 = vmatpush.msra.mxu0 0.0
    %227 = vmatpush.msra.mxu0 0.0
    %228 = vmatpush.msra.mxu0 0.0
    %229 = vmatpush.msra.mxu0 0.0
    %230 = vmatpush.msra.mxu0 0.0
    %231 = vmatpush.msra.mxu0 0.0
    %232 = vmatpush.msra.mxu0 0.0
    %233 = vmatpush.msra.mxu0 0.0
    %234 = vmatpush.msra.mxu0 0.0
    %235 = vmatpush.msra.mxu0 0.0
    %236 = vmatpush.msra.mxu0 0.0
    %237 = vmatpush.msra.mxu0 0.0
    %238 = vmatpush.msra.mxu0 %v119
    %239 = vmatpush.msra.mxu0 %v111
    %240 = vmatpush.msra.mxu0 %v103
    %241 = vmatpush.msra.mxu0 %v95
    %242 = vmatmul.f32.gmra.mxu0 %v124
    %v243 = vpop.f32.mrf.mxu0
    %v244 = vadd.f32 0.0, %v243
    %245 = vdwg.mxu0
    %246 = vmatpush.msra.mxu0 0.0
    %247 = vmatpush.msra.mxu0 0.0
    %248 = vmatpush.msra.mxu0 0.0
    %249 = vmatpush.msra.mxu0 0.0
    %250 = vmatpush.msra.mxu0 0.0
    %251 = vmatpush.msra.mxu0 0.0
    %252 = vmatpush.msra.mxu0 0.0
    %253 = vmatpush.msra.mxu0 0.0
    %254 = vmatpush.msra.mxu0 0.0
    %255 = vmatpush.msra.mxu0 0.0
    %256 = vmatpush.msra.mxu0 0.0
    %257 = vmatpush.msra.mxu0 0.0
    %258 = vmatpush.msra.mxu0 %v120
    %259 = vmatpush.msra.mxu0 %v112
    %260 = vmatpush.msra.mxu0 %v104
    %261 = vmatpush.msra.mxu0 %v96
    %262 = vmatmul.f32.gmra.mxu0 %v124
    %v263 = vpop.f32.mrf.mxu0
    %v264 = vadd.f32 0.0, %v263
    %265 = vdwg.mxu0
    %266 = vmatpush.msra.mxu0 0.0
    %267 = vmatpush.msra.mxu0 0.0
    %268 = vmatpush.msra.mxu0 0.0
    %269 = vmatpush.msra.mxu0 0.0
    %270 = vmatpush.msra.mxu0 0.0
    %271 = vmatpush.msra.mxu0 0.0
    %272 = vmatpush.msra.mxu0 0.0
    %273 = vmatpush.msra.mxu0 0.0
    %274 = vmatpush.msra.mxu0 0.0
    %275 = vmatpush.msra.mxu0 0.0
    %276 = vmatpush.msra.mxu0 0.0
    %277 = vmatpush.msra.mxu0 0.0
    %278 = vmatpush.msra.mxu0 %v121
    %279 = vmatpush.msra.mxu0 %v113
    %280 = vmatpush.msra.mxu0 %v105
    %281 = vmatpush.msra.mxu0 %v97
    %282 = vmatmul.f32.gmra.mxu0 %v124
    %v283 = vpop.f32.mrf.mxu0
    %v284 = vadd.f32 0.0, %v283
    %285 = vdwg.mxu0
    %v286 = vld [vmem:[%s2] sm:$0xff]
    %v287 = vld [vmem:[%s3] sm:$0xff]
    %v288 = vmax.f32 %v144, 0.0
    %v289 = vmax.f32 %v164, 0.0
    %v290 = vmax.f32 %v184, 0.0
    %v291 = vmax.f32 %v204, 0.0
    %v292 = vmax.f32 %v224, 0.0
    %v293 = vmax.f32 %v244, 0.0
    %v294 = vmax.f32 %v264, 0.0
    %v295 = vmax.f32 %v284, 0.0
    %vm296 = vcmask 1041408
    %v297 = vsel %vm296, %v288, 0.0
    %v298 = vrot.slane %v297, 4
    %v299 = vadd.f32 %v297, %v298
    %v300 = vrot.slane %v299, 2
    %v301 = vadd.f32 %v299, %v300
    %v302 = vrot.slane %v301, 1
    %v303 = vadd.f32 %v301, %v302
    %v304 = vsel %vm296, %v289, 0.0
    %v305 = vrot.slane %v304, 4
    %v306 = vadd.f32 %v304, %v305
    %v307 = vrot.slane %v306, 2
    %v308 = vadd.f32 %v306, %v307
    %v309 = vrot.slane %v308, 1
    %v310 = vadd.f32 %v308, %v309
    %v311 = vsel %vm296, %v290, 0.0
    %v312 = vrot.slane %v311, 4
    %v313 = vadd.f32 %v311, %v312
    %v314 = vrot.slane %v313, 2
    %v315 = vadd.f32 %v313, %v314
    %v316 = vrot.slane %v315, 1
    %v317 = vadd.f32 %v315, %v316
    %v318 = vsel %vm296, %v291, 0.0
    %v319 = vrot.slane %v318, 4
    %v320 = vadd.f32 %v318, %v319
    %v321 = vrot.slane %v320, 2
    %v322 = vadd.f32 %v320, %v321
    %v323 = vrot.slane %v322, 1
    %v324 = vadd.f32 %v322, %v323
    %v325 = vsel %vm296, %v292, 0.0
    %v326 = vrot.slane %v325, 4
    %v327 = vadd.f32 %v325, %v326
    %v328 = vrot.slane %v327, 2
    %v329 = vadd.f32 %v327, %v328
    %v330 = vrot.slane %v329, 1
    %v331 = vadd.f32 %v329, %v330
    %v332 = vsel %vm296, %v293, 0.0
    %v333 = vrot.slane %v332, 4
    %v334 = vadd.f32 %v332, %v333
    %v335 = vrot.slane %v334, 2
    %v336 = vadd.f32 %v334, %v335
    %v337 = vrot.slane %v336, 1
    %v338 = vadd.f32 %v336, %v337
    %v339 = vsel %vm296, %v294, 0.0
    %v340 = vrot.slane %v339, 4
    %v341 = vadd.f32 %v339, %v340
    %v342 = vrot.slane %v341, 2
    %v343 = vadd.f32 %v341, %v342
    %v344 = vrot.slane %v343, 1
    %v345 = vadd.f32 %v343, %v344
    %v346 = vsel %vm296, %v295, 0.0
    %v347 = vrot.slane %v346, 4
    %v348 = vadd.f32 %v346, %v347
    %v349 = vrot.slane %v348, 2
    %v350 = vadd.f32 %v348, %v349
    %v351 = vrot.slane %v350, 1
    %v352 = vadd.f32 %v350, %v351
    %354 = vrot.lane.b32.xlu0 %v303, 64
    %v355 = vpop.permute.xlu0 %354
    %v357 = vadd.f32 %v303, %v355
    %v358 = vadd.f32 %v357, %v310
    %360 = vrot.lane.b32.xlu0 %v310, 64
    %v361 = vpop.permute.xlu0 %360
    %v363 = vadd.f32 %v358, %v361
    %v364 = vadd.f32 %v363, %v317
    %366 = vrot.lane.b32.xlu0 %v317, 64
    %v367 = vpop.permute.xlu0 %366
    %v369 = vadd.f32 %v364, %v367
    %v370 = vadd.f32 %v369, %v324
    %372 = vrot.lane.b32.xlu0 %v324, 64
    %v373 = vpop.permute.xlu0 %372
    %v375 = vadd.f32 %v370, %v373
    %v376 = vadd.f32 %v375, %v331
    %378 = vrot.lane.b32.xlu0 %v331, 64
    %v379 = vpop.permute.xlu0 %378
    %v381 = vadd.f32 %v376, %v379
    %v382 = vadd.f32 %v381, %v338
    %384 = vrot.lane.b32.xlu0 %v338, 64
    %v385 = vpop.permute.xlu0 %384
    %v387 = vadd.f32 %v382, %v385
    %v388 = vadd.f32 %v387, %v345
    %390 = vrot.lane.b32.xlu0 %v345, 64
    %v391 = vpop.permute.xlu0 %390
    %v393 = vadd.f32 %v388, %v391
    %v394 = vadd.f32 %v393, %v352
    %396 = vrot.lane.b32.xlu0 %v352, 64
    %v397 = vpop.permute.xlu0 %396
    %v399 = vadd.f32 %v394, %v397
    %v400 = vrcp.pop 32.0
    %v401 = vmul.f32 32.0, %v400
    %v402 = vsub.f32 1.0, %v401
    %v403 = vmul.f32 %v400, %v402
    %v404 = vadd.f32 %v400, %v403
    %vm405 = vweird.f32 %v400
    %v406 = vsel %vm405, %v400, %v404
    %v407 = vmul.f32 %v399, %v406
    %409 = vrot.lane.b32.xlu0 %v407, 64
    %v410 = vpop.permute.xlu0 %409
    %vm412 = vcmask 523264
    %v413 = vsel %vm412, %v407, %v410
    %v414 = vperm.slane %v413, 0
    %v415 = vsub.f32 %v288, %v414
    %v416 = vsub.f32 %v289, %v414
    %v417 = vsub.f32 %v290, %v414
    %v418 = vsub.f32 %v291, %v414
    %v419 = vsub.f32 %v292, %v414
    %v420 = vsub.f32 %v293, %v414
    %v421 = vsub.f32 %v294, %v414
    %v422 = vsub.f32 %v295, %v414
    %v423 = vmul.f32 %v415, %v415
    %v424 = vmul.f32 %v416, %v416
    %v425 = vmul.f32 %v417, %v417
    %v426 = vmul.f32 %v418, %v418
    %v427 = vmul.f32 %v419, %v419
    %v428 = vmul.f32 %v420, %v420
    %v429 = vmul.f32 %v421, %v421
    %v430 = vmul.f32 %v422, %v422
    %v431 = vsel %vm296, %v423, 0.0
    %v432 = vrot.slane %v431, 4
    %v433 = vadd.f32 %v431, %v432
    %v434 = vrot.slane %v433, 2
    %v435 = vadd.f32 %v433, %v434
    %v436 = vrot.slane %v435, 1
    %v437 = vadd.f32 %v435, %v436
    %v438 = vsel %vm296, %v424, 0.0
    %v439 = vrot.slane %v438, 4
    %v440 = vadd.f32 %v438, %v439
    %v441 = vrot.slane %v440, 2
    %v442 = vadd.f32 %v440, %v441
    %v443 = vrot.slane %v442, 1
    %v444 = vadd.f32 %v442, %v443
    %v445 = vsel %vm296, %v425, 0.0
    %v446 = vrot.slane %v445, 4
    %v447 = vadd.f32 %v445, %v446
    %v448 = vrot.slane %v447, 2
    %v449 = vadd.f32 %v447, %v448
    %v450 = vrot.slane %v449, 1
    %v451 = vadd.f32 %v449, %v450
    %v452 = vsel %vm296, %v426, 0.0
    %v453 = vrot.slane %v452, 4
    %v454 = vadd.f32 %v452, %v453
    %v455 = vrot.slane %v454, 2
    %v456 = vadd.f32 %v454, %v455
    %v457 = vrot.slane %v456, 1
    %v458 = vadd.f32 %v456, %v457
    %v459 = vsel %vm296, %v427, 0.0
    %v460 = vrot.slane %v459, 4
    %v461 = vadd.f32 %v459, %v460
    %v462 = vrot.slane %v461, 2
    %v463 = vadd.f32 %v461, %v462
    %v464 = vrot.slane %v463, 1
    %v465 = vadd.f32 %v463, %v464
    %v466 = vsel %vm296, %v428, 0.0
    %v467 = vrot.slane %v466, 4
    %v468 = vadd.f32 %v466, %v467
    %v469 = vrot.slane %v468, 2
    %v470 = vadd.f32 %v468, %v469
    %v471 = vrot.slane %v470, 1
    %v472 = vadd.f32 %v470, %v471
    %v473 = vsel %vm296, %v429, 0.0
    %v474 = vrot.slane %v473, 4
    %v475 = vadd.f32 %v473, %v474
    %v476 = vrot.slane %v475, 2
    %v477 = vadd.f32 %v475, %v476
    %v478 = vrot.slane %v477, 1
    %v479 = vadd.f32 %v477, %v478
    %v480 = vsel %vm296, %v430, 0.0
    %v481 = vrot.slane %v480, 4
    %v482 = vadd.f32 %v480, %v481
    %v483 = vrot.slane %v482, 2
    %v484 = vadd.f32 %v482, %v483
    %v485 = vrot.slane %v484, 1
    %v486 = vadd.f32 %v484, %v485
    %488 = vrot.lane.b32.xlu0 %v437, 64
    %v489 = vpop.permute.xlu0 %488
    %v491 = vadd.f32 %v437, %v489
    %v492 = vadd.f32 %v491, %v444
    %494 = vrot.lane.b32.xlu0 %v444, 64
    %v495 = vpop.permute.xlu0 %494
    %v497 = vadd.f32 %v492, %v495
    %v498 = vadd.f32 %v497, %v451
    %500 = vrot.lane.b32.xlu0 %v451, 64
    %v501 = vpop.permute.xlu0 %500
    %v503 = vadd.f32 %v498, %v501
    %v504 = vadd.f32 %v503, %v458
    %506 = vrot.lane.b32.xlu0 %v458, 64
    %v507 = vpop.permute.xlu0 %506
    %v509 = vadd.f32 %v504, %v507
    %v510 = vadd.f32 %v509, %v465
    %512 = vrot.lane.b32.xlu0 %v465, 64
    %v513 = vpop.permute.xlu0 %512
    %v515 = vadd.f32 %v510, %v513
    %v516 = vadd.f32 %v515, %v472
    %518 = vrot.lane.b32.xlu0 %v472, 64
    %v519 = vpop.permute.xlu0 %518
    %v521 = vadd.f32 %v516, %v519
    %v522 = vadd.f32 %v521, %v479
    %524 = vrot.lane.b32.xlu0 %v479, 64
    %v525 = vpop.permute.xlu0 %524
    %v527 = vadd.f32 %v522, %v525
    %v528 = vadd.f32 %v527, %v486
    %530 = vrot.lane.b32.xlu0 %v486, 64
    %v531 = vpop.permute.xlu0 %530
    %v533 = vadd.f32 %v528, %v531
    %v534 = vmul.f32 %v533, %v406
    %v535 = vadd.f32 %v534, 1e-05
    %v536 = vrsqrt.pop %v535
    %v537 = vmul.f32 %v536, %v535
    %v538 = vmul.f32 %v537, %v536
    %v539 = vmul.f32 0.5, %v538
    %v540 = vsub.f32 1.5, %v539
    %v541 = vmul.f32 %v536, %v540
    %vm542 = vweird.f32 %v535
    %vm543 = vweird.f32 %v536
    %vm544 = vmor %vm542, %vm543
    %v545 = vsel %vm544, %v536, %v541
    %547 = vrot.lane.b32.xlu0 %v545, 64
    %v548 = vpop.permute.xlu0 %547
    %v550 = vsel %vm412, %v545, %v548
    %v551 = vperm.slane %v550, 0
    %v552 = vmul.f32 %v415, %v551
    %v553 = vmul.f32 %v416, %v551
    %v554 = vmul.f32 %v417, %v551
    %v555 = vmul.f32 %v418, %v551
    %v556 = vmul.f32 %v419, %v551
    %v557 = vmul.f32 %v420, %v551
    %v558 = vmul.f32 %v421, %v551
    %v559 = vmul.f32 %v422, %v551
    %v561 = vperm.slane %v286, 0
    %v562 = vperm.slane %v286, 1
    %v563 = vperm.slane %v286, 2
    %v564 = vperm.slane %v286, 3
    %v565 = vperm.slane %v286, 4
    %v566 = vperm.slane %v286, 5
    %v567 = vperm.slane %v286, 6
    %v568 = vperm.slane %v286, 7
    %v577 = vmul.f32 %v552, %v561
    %v578 = vmul.f32 %v553, %v562
    %v579 = vmul.f32 %v554, %v563
    %v580 = vmul.f32 %v555, %v564
    %v581 = vmul.f32 %v556, %v565
    %v582 = vmul.f32 %v557, %v566
    %v583 = vmul.f32 %v558, %v567
    %v584 = vmul.f32 %v559, %v568
    %v586 = vperm.slane %v287, 0
    %v587 = vperm.slane %v287, 1
    %v588 = vperm.slane %v287, 2
    %v589 = vperm.slane %v287, 3
    %v590 = vperm.slane %v287, 4
    %v591 = vperm.slane %v287, 5
    %v592 = vperm.slane %v287, 6
    %v593 = vperm.slane %v287, 7
    %v602 = vadd.f32 %v577, %v586
    %v603 = vadd.f32 %v578, %v587
    %v604 = vadd.f32 %v579, %v588
    %v605 = vadd.f32 %v580, %v589
    %v606 = vadd.f32 %v581, %v590
    %v607 = vadd.f32 %v582, %v591
    %v608 = vadd.f32 %v583, %v592
    %v609 = vadd.f32 %v584, %v593
    %v612 = vrot.slane %v602, 6
    %v613 = vrot.slane %v603, 6
    %616 = vst [vmem:[#allocation2] sm:$0xc] %v612
    %617 = vst [vmem:[#allocation2 + $0x8] sm:$0xc] %v613
    %v620 = vrot.slane %v604, 4
    %v621 = vrot.slane %v605, 4
    %624 = vst [vmem:[#allocation2] sm:$0x30] %v620
    %625 = vst [vmem:[#allocation2 + $0x8] sm:$0x30] %v621
    %v628 = vrot.slane %v606, 2
    %v629 = vrot.slane %v607, 2
    %632 = vst [vmem:[#allocation2] sm:$0xc0] %v628
    %633 = vst [vmem:[#allocation2 + $0x8] sm:$0xc0] %v629
    %634 = vst [vmem:[#allocation2 + $0x10] sm:$0x3] %v608
    %635 = vst [vmem:[#allocation2 + $0x18] sm:$0x3] %v609
    %v636 = vld [vmem:[%s5] sm:$0x3]
    %v637 = vld [vmem:[#allocation2] sm:$0xff]
    %v638 = vld [vmem:[#allocation2 + $0x8] sm:$0xff]
    %v639 = vld [vmem:[#allocation5] sm:$0xff]
    %v640 = vld [vmem:[#allocation5 + $0x8] sm:$0xff]
    %v641 = vld [vmem:[#allocation5 + $0x10] sm:$0xff]
    %v642 = vld [vmem:[#allocation5 + $0x18] sm:$0xff]
    %v643 = vld [vmem:[#allocation5 + $0x20] sm:$0xff]
    %v644 = vld [vmem:[#allocation5 + $0x28] sm:$0xff]
    %v645 = vld [vmem:[#allocation5 + $0x30] sm:$0xff]
    %v646 = vld [vmem:[#allocation5 + $0x38] sm:$0xff]
    %v647 = vld [vmem:[#allocation5 + $0x40] sm:$0xff]
    %v648 = vld [vmem:[#allocation5 + $0x48] sm:$0xff]
    %v649 = vld [vmem:[#allocation5 + $0x50] sm:$0xff]
    %v650 = vld [vmem:[#allocation5 + $0x58] sm:$0xff]
    %v651 = vld [vmem:[#allocation5 + $0x60] sm:$0xff]
    %v652 = vld [vmem:[#allocation5 + $0x68] sm:$0xff]
    %v653 = vld [vmem:[#allocation5 + $0x70] sm:$0xff]
    %v654 = vld [vmem:[#allocation5 + $0x78] sm:$0xff]
    %v655 = vld [vmem:[#allocation5 + $0x80] sm:$0xff]
    %v656 = vld [vmem:[#allocation5 + $0x88] sm:$0xff]
    %v657 = vld [vmem:[#allocation5 + $0x90] sm:$0xff]
    %v658 = vld [vmem:[#allocation5 + $0x98] sm:$0xff]
    %v659 = vld [vmem:[#allocation5 + $0xa0] sm:$0xff]
    %v660 = vld [vmem:[#allocation5 + $0xa8] sm:$0xff]
    %v661 = vld [vmem:[#allocation5 + $0xb0] sm:$0xff]
    %v662 = vld [vmem:[#allocation5 + $0xb8] sm:$0xff]
    %v663 = vld [vmem:[#allocation5 + $0xc0] sm:$0xff]
    %v664 = vld [vmem:[#allocation5 + $0xc8] sm:$0xff]
    %v665 = vld [vmem:[#allocation5 + $0xd0] sm:$0xff]
    %v666 = vld [vmem:[#allocation5 + $0xd8] sm:$0xff]
    %v667 = vld [vmem:[#allocation5 + $0xe0] sm:$0xff]
    %v668 = vld [vmem:[#allocation5 + $0xe8] sm:$0xff]
    %v669 = vld [vmem:[#allocation5 + $0xf0] sm:$0xff]
    %v670 = vld [vmem:[#allocation5 + $0xf8] sm:$0xff]
    %v671 = vld [vmem:[#allocation5 + $0x100] sm:$0xff]
    %v672 = vld [vmem:[#allocation5 + $0x108] sm:$0xff]
    %v673 = vld [vmem:[#allocation5 + $0x110] sm:$0xff]
    %v674 = vld [vmem:[#allocation5 + $0x118] sm:$0xff]
    %v675 = vld [vmem:[#allocation5 + $0x120] sm:$0xff]
    %v676 = vld [vmem:[#allocation5 + $0x128] sm:$0xff]
    %v677 = vld [vmem:[#allocation5 + $0x130] sm:$0xff]
    %v678 = vld [vmem:[#allocation5 + $0x138] sm:$0xff]
    %v679 = vld [vmem:[#allocation5 + $0x140] sm:$0xff]
    %v680 = vld [vmem:[#allocation5 + $0x148] sm:$0xff]
    %v681 = vld [vmem:[#allocation5 + $0x150] sm:$0xff]
    %v682 = vld [vmem:[#allocation5 + $0x158] sm:$0xff]
    %v683 = vld [vmem:[#allocation5 + $0x160] sm:$0xff]
    %v684 = vld [vmem:[#allocation5 + $0x168] sm:$0xff]
    %v685 = vld [vmem:[#allocation5 + $0x170] sm:$0xff]
    %v686 = vld [vmem:[#allocation5 + $0x178] sm:$0xff]
    %v687 = vld [vmem:[#allocation5 + $0x180] sm:$0xff]
    %v688 = vld [vmem:[#allocation5 + $0x188] sm:$0xff]
    %v689 = vld [vmem:[#allocation5 + $0x190] sm:$0xff]
    %v690 = vld [vmem:[#allocation5 + $0x198] sm:$0xff]
    %v691 = vld [vmem:[#allocation5 + $0x1a0] sm:$0xff]
    %v692 = vld [vmem:[#allocation5 + $0x1a8] sm:$0xff]
    %v693 = vld [vmem:[#allocation5 + $0x1b0] sm:$0xff]
    %v694 = vld [vmem:[#allocation5 + $0x1b8] sm:$0xff]
    %v695 = vld [vmem:[#allocation5 + $0x1c0] sm:$0xff]
    %v696 = vld [vmem:[#allocation5 + $0x1c8] sm:$0xff]
    %v697 = vld [vmem:[#allocation5 + $0x1d0] sm:$0xff]
    %v698 = vld [vmem:[#allocation5 + $0x1d8] sm:$0xff]
    %v699 = vld [vmem:[#allocation5 + $0x1e0] sm:$0xff]
    %v700 = vld [vmem:[#allocation5 + $0x1e8] sm:$0xff]
    %v701 = vld [vmem:[#allocation5 + $0x1f0] sm:$0xff]
    %v702 = vld [vmem:[#allocation5 + $0x1f8] sm:$0xff]
    %v703 = vld [vmem:[#allocation2] sm:$0xfc]
    %v704 = vld [vmem:[#allocation2 + $0x8] sm:$0xfc]
    %v705 = vld [vmem:[#allocation2 + $0x10] sm:$0x3]
    %v706 = vld [vmem:[#allocation2 + $0x18] sm:$0x3]
    %s707 = scalar_lea.vmem [#allocation5], 512
    %v708 = vld [vmem:[%s707] sm:$0xff]
    %v709 = vld [vmem:[%s707 + $0x8] sm:$0xff]
    %v710 = vld [vmem:[%s707 + $0x10] sm:$0xff]
    %v711 = vld [vmem:[%s707 + $0x18] sm:$0xff]
    %v712 = vld [vmem:[%s707 + $0x20] sm:$0xff]
    %v713 = vld [vmem:[%s707 + $0x28] sm:$0xff]
    %v714 = vld [vmem:[%s707 + $0x30] sm:$0xff]
    %v715 = vld [vmem:[%s707 + $0x38] sm:$0xff]
    %v716 = vld [vmem:[%s707 + $0x40] sm:$0xff]
    %v717 = vld [vmem:[%s707 + $0x48] sm:$0xff]
    %v718 = vld [vmem:[%s707 + $0x50] sm:$0xff]
    %v719 = vld [vmem:[%s707 + $0x58] sm:$0xff]
    %v720 = vld [vmem:[%s707 + $0x60] sm:$0xff]
    %v721 = vld [vmem:[%s707 + $0x68] sm:$0xff]
    %v722 = vld [vmem:[%s707 + $0x70] sm:$0xff]
    %v723 = vld [vmem:[%s707 + $0x78] sm:$0xff]
    %v724 = vld [vmem:[%s707 + $0x80] sm:$0xff]
    %v725 = vld [vmem:[%s707 + $0x88] sm:$0xff]
    %v726 = vld [vmem:[%s707 + $0x90] sm:$0xff]
    %v727 = vld [vmem:[%s707 + $0x98] sm:$0xff]
    %v728 = vld [vmem:[%s707 + $0xa0] sm:$0xff]
    %v729 = vld [vmem:[%s707 + $0xa8] sm:$0xff]
    %v730 = vld [vmem:[%s707 + $0xb0] sm:$0xff]
    %v731 = vld [vmem:[%s707 + $0xb8] sm:$0xff]
    %v732 = vld [vmem:[%s707 + $0xc0] sm:$0xff]
    %v733 = vld [vmem:[%s707 + $0xc8] sm:$0xff]
    %v734 = vld [vmem:[%s707 + $0xd0] sm:$0xff]
    %v735 = vld [vmem:[%s707 + $0xd8] sm:$0xff]
    %v736 = vld [vmem:[%s707 + $0xe0] sm:$0xff]
    %v737 = vld [vmem:[%s707 + $0xe8] sm:$0xff]
    %v738 = vld [vmem:[%s707 + $0xf0] sm:$0xff]
    %v739 = vld [vmem:[%s707 + $0xf8] sm:$0xff]
    %v740 = vld [vmem:[%s707 + $0x100] sm:$0xff]
    %v741 = vld [vmem:[%s707 + $0x108] sm:$0xff]
    %v742 = vld [vmem:[%s707 + $0x110] sm:$0xff]
    %v743 = vld [vmem:[%s707 + $0x118] sm:$0xff]
    %v744 = vld [vmem:[%s707 + $0x120] sm:$0xff]
    %v745 = vld [vmem:[%s707 + $0x128] sm:$0xff]
    %v746 = vld [vmem:[%s707 + $0x130] sm:$0xff]
    %v747 = vld [vmem:[%s707 + $0x138] sm:$0xff]
    %v748 = vld [vmem:[%s707 + $0x140] sm:$0xff]
    %v749 = vld [vmem:[%s707 + $0x148] sm:$0xff]
    %v750 = vld [vmem:[%s707 + $0x150] sm:$0xff]
    %v751 = vld [vmem:[%s707 + $0x158] sm:$0xff]
    %v752 = vld [vmem:[%s707 + $0x160] sm:$0xff]
    %v753 = vld [vmem:[%s707 + $0x168] sm:$0xff]
    %v754 = vld [vmem:[%s707 + $0x170] sm:$0xff]
    %v755 = vld [vmem:[%s707 + $0x178] sm:$0xff]
    %v756 = vld [vmem:[%s707 + $0x180] sm:$0xff]
    %v757 = vld [vmem:[%s707 + $0x188] sm:$0xff]
    %v758 = vld [vmem:[%s707 + $0x190] sm:$0xff]
    %v759 = vld [vmem:[%s707 + $0x198] sm:$0xff]
    %v760 = vld [vmem:[%s707 + $0x1a0] sm:$0xff]
    %v761 = vld [vmem:[%s707 + $0x1a8] sm:$0xff]
    %v762 = vld [vmem:[%s707 + $0x1b0] sm:$0xff]
    %v763 = vld [vmem:[%s707 + $0x1b8] sm:$0xff]
    %v764 = vld [vmem:[%s707 + $0x1c0] sm:$0xff]
    %v765 = vld [vmem:[%s707 + $0x1c8] sm:$0xff]
    %v766 = vld [vmem:[%s707 + $0x1d0] sm:$0xff]
    %v767 = vld [vmem:[%s707 + $0x1d8] sm:$0xff]
    %v768 = vld [vmem:[%s707 + $0x1e0] sm:$0xff]
    %v769 = vld [vmem:[%s707 + $0x1e8] sm:$0xff]
    %v770 = vld [vmem:[%s707 + $0x1f0] sm:$0xff]
    %v771 = vld [vmem:[%s707 + $0x1f8] sm:$0xff]
    %vm776 = vcmask 1045504
    %v777 = vrot.slane %v703, 2
    %v778 = vrot.slane %v705, 2
    %v779 = vsel %vm776, %v777, %v778
    %v780 = vrot.slane %v704, 2
    %v781 = vrot.slane %v706, 2
    %v782 = vsel %vm776, %v780, %v781
    %785 = vmatpush.msra.mxu0 %v738
    %786 = vmatpush.msra.mxu0 %v736
    %787 = vmatpush.msra.mxu0 %v734
    %788 = vmatpush.msra.mxu0 %v732
    %789 = vmatpush.msra.mxu0 %v730
    %790 = vmatpush.msra.mxu0 %v728
    %791 = vmatpush.msra.mxu0 %v726
    %792 = vmatpush.msra.mxu0 %v724
    %793 = vmatpush.msra.mxu0 %v722
    %794 = vmatpush.msra.mxu0 %v720
    %795 = vmatpush.msra.mxu0 %v718
    %796 = vmatpush.msra.mxu0 %v716
    %797 = vmatpush.msra.mxu0 %v714
    %798 = vmatpush.msra.mxu0 %v712
    %799 = vmatpush.msra.mxu0 %v710
    %800 = vmatpush.msra.mxu0 %v708
    %801 = vmatmul.f32.gmra.mxu0 %v779
    %v802 = vpop.f32.mrf.mxu0
    %v803 = vadd.f32 0.0, %v802
    %804 = vdwg.mxu0
    %805 = vmatpush.msra.mxu0 %v770
    %806 = vmatpush.msra.mxu0 %v768
    %807 = vmatpush.msra.mxu0 %v766
    %808 = vmatpush.msra.mxu0 %v764
    %809 = vmatpush.msra.mxu0 %v762
    %810 = vmatpush.msra.mxu0 %v760
    %811 = vmatpush.msra.mxu0 %v758
    %812 = vmatpush.msra.mxu0 %v756
    %813 = vmatpush.msra.mxu0 %v754
    %814 = vmatpush.msra.mxu0 %v752
    %815 = vmatpush.msra.mxu0 %v750
    %816 = vmatpush.msra.mxu0 %v748
    %817 = vmatpush.msra.mxu0 %v746
    %818 = vmatpush.msra.mxu0 %v744
    %819 = vmatpush.msra.mxu0 %v742
    %820 = vmatpush.msra.mxu0 %v740
    %821 = vmatmul.f32.gmra.mxu0 %v782
    %v822 = vpop.f32.mrf.mxu0
    %v823 = vadd.f32 %v803, %v822
    %824 = vdwg.mxu0
    %825 = vmatpush.msra.mxu0 %v739
    %826 = vmatpush.msra.mxu0 %v737
    %827 = vmatpush.msra.mxu0 %v735
    %828 = vmatpush.msra.mxu0 %v733
    %829 = vmatpush.msra.mxu0 %v731
    %830 = vmatpush.msra.mxu0 %v729
    %831 = vmatpush.msra.mxu0 %v727
    %832 = vmatpush.msra.mxu0 %v725
    %833 = vmatpush.msra.mxu0 %v723
    %834 = vmatpush.msra.mxu0 %v721
    %835 = vmatpush.msra.mxu0 %v719
    %836 = vmatpush.msra.mxu0 %v717
    %837 = vmatpush.msra.mxu0 %v715
    %838 = vmatpush.msra.mxu0 %v713
    %839 = vmatpush.msra.mxu0 %v711
    %840 = vmatpush.msra.mxu0 %v709
    %841 = vmatmul.f32.gmra.mxu0 %v779
    %v842 = vpop.f32.mrf.mxu0
    %v843 = vadd.f32 0.0, %v842
    %844 = vdwg.mxu0
    %845 = vmatpush.msra.mxu0 %v771
    %846 = vmatpush.msra.mxu0 %v769
    %847 = vmatpush.msra.mxu0 %v767
    %848 = vmatpush.msra.mxu0 %v765
    %849 = vmatpush.msra.mxu0 %v763
    %850 = vmatpush.msra.mxu0 %v761
    %851 = vmatpush.msra.mxu0 %v759
    %852 = vmatpush.msra.mxu0 %v757
    %853 = vmatpush.msra.mxu0 %v755
    %854 = vmatpush.msra.mxu0 %v753
    %855 = vmatpush.msra.mxu0 %v751
    %856 = vmatpush.msra.mxu0 %v749
    %857 = vmatpush.msra.mxu0 %v747
    %858 = vmatpush.msra.mxu0 %v745
    %859 = vmatpush.msra.mxu0 %v743
    %860 = vmatpush.msra.mxu0 %v741
    %861 = vmatmul.f32.gmra.mxu0 %v782
    %v862 = vpop.f32.mrf.mxu0
    %v863 = vadd.f32 %v843, %v862
    %864 = vdwg.mxu0
    %865 = vmatpush.msra.mxu0 %v669
    %866 = vmatpush.msra.mxu0 %v667
    %867 = vmatpush.msra.mxu0 %v665
    %868 = vmatpush.msra.mxu0 %v663
    %869 = vmatpush.msra.mxu0 %v661
    %870 = vmatpush.msra.mxu0 %v659
    %871 = vmatpush.msra.mxu0 %v657
    %872 = vmatpush.msra.mxu0 %v655
    %873 = vmatpush.msra.mxu0 %v653
    %874 = vmatpush.msra.mxu0 %v651
    %875 = vmatpush.msra.mxu0 %v649
    %876 = vmatpush.msra.mxu0 %v647
    %877 = vmatpush.msra.mxu0 %v645
    %878 = vmatpush.msra.mxu0 %v643
    %879 = vmatpush.msra.mxu0 %v641
    %880 = vmatpush.msra.mxu0 %v639
    %881 = vmatmul.f32.gmra.mxu0 %v637
    %v882 = vpop.f32.mrf.mxu0
    %v883 = vadd.f32 %v823, %v882
    %884 = vdwg.mxu0
    %885 = vmatpush.msra.mxu0 %v701
    %886 = vmatpush.msra.mxu0 %v699
    %887 = vmatpush.msra.mxu0 %v697
    %888 = vmatpush.msra.mxu0 %v695
    %889 = vmatpush.msra.mxu0 %v693
    %890 = vmatpush.msra.mxu0 %v691
    %891 = vmatpush.msra.mxu0 %v689
    %892 = vmatpush.msra.mxu0 %v687
    %893 = vmatpush.msra.mxu0 %v685
    %894 = vmatpush.msra.mxu0 %v683
    %895 = vmatpush.msra.mxu0 %v681
    %896 = vmatpush.msra.mxu0 %v679
    %897 = vmatpush.msra.mxu0 %v677
    %898 = vmatpush.msra.mxu0 %v675
    %899 = vmatpush.msra.mxu0 %v673
    %900 = vmatpush.msra.mxu0 %v671
    %901 = vmatmul.f32.gmra.mxu0 %v638
    %v902 = vpop.f32.mrf.mxu0
    %v903 = vadd.f32 %v883, %v902
    %904 = vdwg.mxu0
    %905 = vmatpush.msra.mxu0 %v670
    %906 = vmatpush.msra.mxu0 %v668
    %907 = vmatpush.msra.mxu0 %v666
    %908 = vmatpush.msra.mxu0 %v664
    %909 = vmatpush.msra.mxu0 %v662
    %910 = vmatpush.msra.mxu0 %v660
    %911 = vmatpush.msra.mxu0 %v658
    %912 = vmatpush.msra.mxu0 %v656
    %913 = vmatpush.msra.mxu0 %v654
    %914 = vmatpush.msra.mxu0 %v652
    %915 = vmatpush.msra.mxu0 %v650
    %916 = vmatpush.msra.mxu0 %v648
    %917 = vmatpush.msra.mxu0 %v646
    %918 = vmatpush.msra.mxu0 %v644
    %919 = vmatpush.msra.mxu0 %v642
    %920 = vmatpush.msra.mxu0 %v640
    %921 = vmatmul.f32.gmra.mxu0 %v637
    %v922 = vpop.f32.mrf.mxu0
    %v923 = vadd.f32 %v863, %v922
    %924 = vdwg.mxu0
    %925 = vmatpush.msra.mxu0 %v702
    %926 = vmatpush.msra.mxu0 %v700
    %927 = vmatpush.msra.mxu0 %v698
    %928 = vmatpush.msra.mxu0 %v696
    %929 = vmatpush.msra.mxu0 %v694
    %930 = vmatpush.msra.mxu0 %v692
    %931 = vmatpush.msra.mxu0 %v690
    %932 = vmatpush.msra.mxu0 %v688
    %933 = vmatpush.msra.mxu0 %v686
    %934 = vmatpush.msra.mxu0 %v684
    %935 = vmatpush.msra.mxu0 %v682
    %936 = vmatpush.msra.mxu0 %v680
    %937 = vmatpush.msra.mxu0 %v678
    %938 = vmatpush.msra.mxu0 %v676
    %939 = vmatpush.msra.mxu0 %v674
    %940 = vmatpush.msra.mxu0 %v672
    %941 = vmatmul.f32.gmra.mxu0 %v638
    %v942 = vpop.f32.mrf.mxu0
    %v943 = vadd.f32 %v923, %v942
    %944 = vdwg.mxu0
    %v946 = vperm.slane %v636, 0
    %v947 = vperm.slane %v636, 1
    %v950 = vadd.f32 %v903, %v946
    %v951 = vadd.f32 %v943, %v947
    %s952 = scalar_lea.vmem [#allocation5], 1024
    %v953 = vld [vmem:[%s952] sm:$0xff]
    %v954 = vld [vmem:[%s952 + $0x8] sm:$0xff]
    %v955 = vld [vmem:[%s952 + $0x10] sm:$0xff]
    %v956 = vld [vmem:[%s952 + $0x18] sm:$0xff]
    %v957 = vld [vmem:[%s952 + $0x20] sm:$0xff]
    %v958 = vld [vmem:[%s952 + $0x28] sm:$0xff]
    %v959 = vld [vmem:[%s952 + $0x30] sm:$0xff]
    %v960 = vld [vmem:[%s952 + $0x38] sm:$0xff]
    %v961 = vld [vmem:[%s952 + $0x40] sm:$0xff]
    %v962 = vld [vmem:[%s952 + $0x48] sm:$0xff]
    %v963 = vld [vmem:[%s952 + $0x50] sm:$0xff]
    %v964 = vld [vmem:[%s952 + $0x58] sm:$0xff]
    %v965 = vld [vmem:[%s952 + $0x60] sm:$0xff]
    %v966 = vld [vmem:[%s952 + $0x68] sm:$0xff]
    %v967 = vld [vmem:[%s952 + $0x70] sm:$0xff]
    %v968 = vld [vmem:[%s952 + $0x78] sm:$0xff]
    %v969 = vld [vmem:[%s952 + $0x80] sm:$0xff]
    %v970 = vld [vmem:[%s952 + $0x88] sm:$0xff]
    %v971 = vld [vmem:[%s952 + $0x90] sm:$0xff]
    %v972 = vld [vmem:[%s952 + $0x98] sm:$0xff]
    %v973 = vld [vmem:[%s952 + $0xa0] sm:$0xff]
    %v974 = vld [vmem:[%s952 + $0xa8] sm:$0xff]
    %v975 = vld [vmem:[%s952 + $0xb0] sm:$0xff]
    %v976 = vld [vmem:[%s952 + $0xb8] sm:$0xff]
    %v977 = vld [vmem:[%s952 + $0xc0] sm:$0xff]
    %v978 = vld [vmem:[%s952 + $0xc8] sm:$0xff]
    %v979 = vld [vmem:[%s952 + $0xd0] sm:$0xff]
    %v980 = vld [vmem:[%s952 + $0xd8] sm:$0xff]
    %v981 = vld [vmem:[%s952 + $0xe0] sm:$0xff]
    %v982 = vld [vmem:[%s952 + $0xe8] sm:$0xff]
    %v983 = vld [vmem:[%s952 + $0xf0] sm:$0xff]
    %v984 = vld [vmem:[%s952 + $0xf8] sm:$0xff]
    %v985 = vld [vmem:[%s952 + $0x100] sm:$0xff]
    %v986 = vld [vmem:[%s952 + $0x108] sm:$0xff]
    %v987 = vld [vmem:[%s952 + $0x110] sm:$0xff]
    %v988 = vld [vmem:[%s952 + $0x118] sm:$0xff]
    %v989 = vld [vmem:[%s952 + $0x120] sm:$0xff]
    %v990 = vld [vmem:[%s952 + $0x128] sm:$0xff]
    %v991 = vld [vmem:[%s952 + $0x130] sm:$0xff]
    %v992 = vld [vmem:[%s952 + $0x138] sm:$0xff]
    %v993 = vld [vmem:[%s952 + $0x140] sm:$0xff]
    %v994 = vld [vmem:[%s952 + $0x148] sm:$0xff]
    %v995 = vld [vmem:[%s952 + $0x150] sm:$0xff]
    %v996 = vld [vmem:[%s952 + $0x158] sm:$0xff]
    %v997 = vld [vmem:[%s952 + $0x160] sm:$0xff]
    %v998 = vld [vmem:[%s952 + $0x168] sm:$0xff]
    %v999 = vld [vmem:[%s952 + $0x170] sm:$0xff]
    %v1000 = vld [vmem:[%s952 + $0x178] sm:$0xff]
    %v1001 = vld [vmem:[%s952 + $0x180] sm:$0xff]
    %v1002 = vld [vmem:[%s952 + $0x188] sm:$0xff]
    %v1003 = vld [vmem:[%s952 + $0x190] sm:$0xff]
    %v1004 = vld [vmem:[%s952 + $0x198] sm:$0xff]
    %v1005 = vld [vmem:[%s952 + $0x1a0] sm:$0xff]
    %v1006 = vld [vmem:[%s952 + $0x1a8] sm:$0xff]
    %v1007 = vld [vmem:[%s952 + $0x1b0] sm:$0xff]
    %v1008 = vld [vmem:[%s952 + $0x1b8] sm:$0xff]
    %v1009 = vld [vmem:[%s952 + $0x1c0] sm:$0xff]
    %v1010 = vld [vmem:[%s952 + $0x1c8] sm:$0xff]
    %v1011 = vld [vmem:[%s952 + $0x1d0] sm:$0xff]
    %v1012 = vld [vmem:[%s952 + $0x1d8] sm:$0xff]
    %v1013 = vld [vmem:[%s952 + $0x1e0] sm:$0xff]
    %v1014 = vld [vmem:[%s952 + $0x1e8] sm:$0xff]
    %v1015 = vld [vmem:[%s952 + $0x1f0] sm:$0xff]
    %v1016 = vld [vmem:[%s952 + $0x1f8] sm:$0xff]
    %v1017 = vld [vmem:[#allocation2] sm:$0xf0]
    %v1018 = vld [vmem:[#allocation2 + $0x8] sm:$0xf0]
    %v1019 = vld [vmem:[#allocation2 + $0x10] sm:$0xf]
    %v1020 = vld [vmem:[#allocation2 + $0x18] sm:$0xf]
    %s1021 = scalar_lea.vmem [#allocation5], 1536
    %v1022 = vld [vmem:[%s1021] sm:$0xff]
    %v1023 = vld [vmem:[%s1021 + $0x8] sm:$0xff]
    %v1024 = vld [vmem:[%s1021 + $0x10] sm:$0xff]
    %v1025 = vld [vmem:[%s1021 + $0x18] sm:$0xff]
    %v1026 = vld [vmem:[%s1021 + $0x20] sm:$0xff]
    %v1027 = vld [vmem:[%s1021 + $0x28] sm:$0xff]
    %v1028 = vld [vmem:[%s1021 + $0x30] sm:$0xff]
    %v1029 = vld [vmem:[%s1021 + $0x38] sm:$0xff]
    %v1030 = vld [vmem:[%s1021 + $0x40] sm:$0xff]
    %v1031 = vld [vmem:[%s1021 + $0x48] sm:$0xff]
    %v1032 = vld [vmem:[%s1021 + $0x50] sm:$0xff]
    %v1033 = vld [vmem:[%s1021 + $0x58] sm:$0xff]
    %v1034 = vld [vmem:[%s1021 + $0x60] sm:$0xff]
    %v1035 = vld [vmem:[%s1021 + $0x68] sm:$0xff]
    %v1036 = vld [vmem:[%s1021 + $0x70] sm:$0xff]
    %v1037 = vld [vmem:[%s1021 + $0x78] sm:$0xff]
    %v1038 = vld [vmem:[%s1021 + $0x80] sm:$0xff]
    %v1039 = vld [vmem:[%s1021 + $0x88] sm:$0xff]
    %v1040 = vld [vmem:[%s1021 + $0x90] sm:$0xff]
    %v1041 = vld [vmem:[%s1021 + $0x98] sm:$0xff]
    %v1042 = vld [vmem:[%s1021 + $0xa0] sm:$0xff]
    %v1043 = vld [vmem:[%s1021 + $0xa8] sm:$0xff]
    %v1044 = vld [vmem:[%s1021 + $0xb0] sm:$0xff]
    %v1045 = vld [vmem:[%s1021 + $0xb8] sm:$0xff]
    %v1046 = vld [vmem:[%s1021 + $0xc0] sm:$0xff]
    %v1047 = vld [vmem:[%s1021 + $0xc8] sm:$0xff]
    %v1048 = vld [vmem:[%s1021 + $0xd0] sm:$0xff]
    %v1049 = vld [vmem:[%s1021 + $0xd8] sm:$0xff]
    %v1050 = vld [vmem:[%s1021 + $0xe0] sm:$0xff]
    %v1051 = vld [vmem:[%s1021 + $0xe8] sm:$0xff]
    %v1052 = vld [vmem:[%s1021 + $0xf0] sm:$0xff]
    %v1053 = vld [vmem:[%s1021 + $0xf8] sm:$0xff]
    %v1054 = vld [vmem:[%s1021 + $0x100] sm:$0xff]
    %v1055 = vld [vmem:[%s1021 + $0x108] sm:$0xff]
    %v1056 = vld [vmem:[%s1021 + $0x110] sm:$0xff]
    %v1057 = vld [vmem:[%s1021 + $0x118] sm:$0xff]
    %v1058 = vld [vmem:[%s1021 + $0x120] sm:$0xff]
    %v1059 = vld [vmem:[%s1021 + $0x128] sm:$0xff]
    %v1060 = vld [vmem:[%s1021 + $0x130] sm:$0xff]
    %v1061 = vld [vmem:[%s1021 + $0x138] sm:$0xff]
    %v1062 = vld [vmem:[%s1021 + $0x140] sm:$0xff]
    %v1063 = vld [vmem:[%s1021 + $0x148] sm:$0xff]
    %v1064 = vld [vmem:[%s1021 + $0x150] sm:$0xff]
    %v1065 = vld [vmem:[%s1021 + $0x158] sm:$0xff]
    %v1066 = vld [vmem:[%s1021 + $0x160] sm:$0xff]
    %v1067 = vld [vmem:[%s1021 + $0x168] sm:$0xff]
    %v1068 = vld [vmem:[%s1021 + $0x170] sm:$0xff]
    %v1069 = vld [vmem:[%s1021 + $0x178] sm:$0xff]
    %v1070 = vld [vmem:[%s1021 + $0x180] sm:$0xff]
    %v1071 = vld [vmem:[%s1021 + $0x188] sm:$0xff]
    %v1072 = vld [vmem:[%s1021 + $0x190] sm:$0xff]
    %v1073 = vld [vmem:[%s1021 + $0x198] sm:$0xff]
    %v1074 = vld [vmem:[%s1021 + $0x1a0] sm:$0xff]
    %v1075 = vld [vmem:[%s1021 + $0x1a8] sm:$0xff]
    %v1076 = vld [vmem:[%s1021 + $0x1b0] sm:$0xff]
    %v1077 = vld [vmem:[%s1021 + $0x1b8] sm:$0xff]
    %v1078 = vld [vmem:[%s1021 + $0x1c0] sm:$0xff]
    %v1079 = vld [vmem:[%s1021 + $0x1c8] sm:$0xff]
    %v1080 = vld [vmem:[%s1021 + $0x1d0] sm:$0xff]
    %v1081 = vld [vmem:[%s1021 + $0x1d8] sm:$0xff]
    %v1082 = vld [vmem:[%s1021 + $0x1e0] sm:$0xff]
    %v1083 = vld [vmem:[%s1021 + $0x1e8] sm:$0xff]
    %v1084 = vld [vmem:[%s1021 + $0x1f0] sm:$0xff]
    %v1085 = vld [vmem:[%s1021 + $0x1f8] sm:$0xff]
    %vm1090 = vcmask 1043456
    %v1091 = vrot.slane %v1017, 4
    %v1092 = vrot.slane %v1019, 4
    %v1093 = vsel %vm1090, %v1091, %v1092
    %v1094 = vrot.slane %v1018, 4
    %v1095 = vrot.slane %v1020, 4
    %v1096 = vsel %vm1090, %v1094, %v1095
    %1099 = vmatpush.msra.mxu0 %v1052
    %1100 = vmatpush.msra.mxu0 %v1050
    %1101 = vmatpush.msra.mxu0 %v1048
    %1102 = vmatpush.msra.mxu0 %v1046
    %1103 = vmatpush.msra.mxu0 %v1044
    %1104 = vmatpush.msra.mxu0 %v1042
    %1105 = vmatpush.msra.mxu0 %v1040
    %1106 = vmatpush.msra.mxu0 %v1038
    %1107 = vmatpush.msra.mxu0 %v1036
    %1108 = vmatpush.msra.mxu0 %v1034
    %1109 = vmatpush.msra.mxu0 %v1032
    %1110 = vmatpush.msra.mxu0 %v1030
    %1111 = vmatpush.msra.mxu0 %v1028
    %1112 = vmatpush.msra.mxu0 %v1026
    %1113 = vmatpush.msra.mxu0 %v1024
    %1114 = vmatpush.msra.mxu0 %v1022
    %1115 = vmatmul.f32.gmra.mxu0 %v1093
    %v1116 = vpop.f32.mrf.mxu0
    %v1117 = vadd.f32 0.0, %v1116
    %1118 = vdwg.mxu0
    %1119 = vmatpush.msra.mxu0 %v1084
    %1120 = vmatpush.msra.mxu0 %v1082
    %1121 = vmatpush.msra.mxu0 %v1080
    %1122 = vmatpush.msra.mxu0 %v1078
    %1123 = vmatpush.msra.mxu0 %v1076
    %1124 = vmatpush.msra.mxu0 %v1074
    %1125 = vmatpush.msra.mxu0 %v1072
    %1126 = vmatpush.msra.mxu0 %v1070
    %1127 = vmatpush.msra.mxu0 %v1068
    %1128 = vmatpush.msra.mxu0 %v1066
    %1129 = vmatpush.msra.mxu0 %v1064
    %1130 = vmatpush.msra.mxu0 %v1062
    %1131 = vmatpush.msra.mxu0 %v1060
    %1132 = vmatpush.msra.mxu0 %v1058
    %1133 = vmatpush.msra.mxu0 %v1056
    %1134 = vmatpush.msra.mxu0 %v1054
    %1135 = vmatmul.f32.gmra.mxu0 %v1096
    %v1136 = vpop.f32.mrf.mxu0
    %v1137 = vadd.f32 %v1117, %v1136
    %1138 = vdwg.mxu0
    %1139 = vmatpush.msra.mxu0 %v1053
    %1140 = vmatpush.msra.mxu0 %v1051
    %1141 = vmatpush.msra.mxu0 %v1049
    %1142 = vmatpush.msra.mxu0 %v1047
    %1143 = vmatpush.msra.mxu0 %v1045
    %1144 = vmatpush.msra.mxu0 %v1043
    %1145 = vmatpush.msra.mxu0 %v1041
    %1146 = vmatpush.msra.mxu0 %v1039
    %1147 = vmatpush.msra.mxu0 %v1037
    %1148 = vmatpush.msra.mxu0 %v1035
    %1149 = vmatpush.msra.mxu0 %v1033
    %1150 = vmatpush.msra.mxu0 %v1031
    %1151 = vmatpush.msra.mxu0 %v1029
    %1152 = vmatpush.msra.mxu0 %v1027
    %1153 = vmatpush.msra.mxu0 %v1025
    %1154 = vmatpush.msra.mxu0 %v1023
    %1155 = vmatmul.f32.gmra.mxu0 %v1093
    %v1156 = vpop.f32.mrf.mxu0
    %v1157 = vadd.f32 0.0, %v1156
    %1158 = vdwg.mxu0
    %1159 = vmatpush.msra.mxu0 %v1085
    %1160 = vmatpush.msra.mxu0 %v1083
    %1161 = vmatpush.msra.mxu0 %v1081
    %1162 = vmatpush.msra.mxu0 %v1079
    %1163 = vmatpush.msra.mxu0 %v1077
    %1164 = vmatpush.msra.mxu0 %v1075
    %1165 = vmatpush.msra.mxu0 %v1073
    %1166 = vmatpush.msra.mxu0 %v1071
    %1167 = vmatpush.msra.mxu0 %v1069
    %1168 = vmatpush.msra.mxu0 %v1067
    %1169 = vmatpush.msra.mxu0 %v1065
    %1170 = vmatpush.msra.mxu0 %v1063
    %1171 = vmatpush.msra.mxu0 %v1061
    %1172 = vmatpush.msra.mxu0 %v1059
    %1173 = vmatpush.msra.mxu0 %v1057
    %1174 = vmatpush.msra.mxu0 %v1055
    %1175 = vmatmul.f32.gmra.mxu0 %v1096
    %v1176 = vpop.f32.mrf.mxu0
    %v1177 = vadd.f32 %v1157, %v1176
    %1178 = vdwg.mxu0
    %1179 = vmatpush.msra.mxu0 %v983
    %1180 = vmatpush.msra.mxu0 %v981
    %1181 = vmatpush.msra.mxu0 %v979
    %1182 = vmatpush.msra.mxu0 %v977
    %1183 = vmatpush.msra.mxu0 %v975
    %1184 = vmatpush.msra.mxu0 %v973
    %1185 = vmatpush.msra.mxu0 %v971
    %1186 = vmatpush.msra.mxu0 %v969
    %1187 = vmatpush.msra.mxu0 %v967
    %1188 = vmatpush.msra.mxu0 %v965
    %1189 = vmatpush.msra.mxu0 %v963
    %1190 = vmatpush.msra.mxu0 %v961
    %1191 = vmatpush.msra.mxu0 %v959
    %1192 = vmatpush.msra.mxu0 %v957
    %1193 = vmatpush.msra.mxu0 %v955
    %1194 = vmatpush.msra.mxu0 %v953
    %1195 = vmatmul.f32.gmra.mxu0 %v779
    %v1196 = vpop.f32.mrf.mxu0
    %v1197 = vadd.f32 %v1137, %v1196
    %1198 = vdwg.mxu0
    %1199 = vmatpush.msra.mxu0 %v1015
    %1200 = vmatpush.msra.mxu0 %v1013
    %1201 = vmatpush.msra.mxu0 %v1011
    %1202 = vmatpush.msra.mxu0 %v1009
    %1203 = vmatpush.msra.mxu0 %v1007
    %1204 = vmatpush.msra.mxu0 %v1005
    %1205 = vmatpush.msra.mxu0 %v1003
    %1206 = vmatpush.msra.mxu0 %v1001
    %1207 = vmatpush.msra.mxu0 %v999
    %1208 = vmatpush.msra.mxu0 %v997
    %1209 = vmatpush.msra.mxu0 %v995
    %1210 = vmatpush.msra.mxu0 %v993
    %1211 = vmatpush.msra.mxu0 %v991
    %1212 = vmatpush.msra.mxu0 %v989
    %1213 = vmatpush.msra.mxu0 %v987
    %1214 = vmatpush.msra.mxu0 %v985
    %1215 = vmatmul.f32.gmra.mxu0 %v782
    %v1216 = vpop.f32.mrf.mxu0
    %v1217 = vadd.f32 %v1197, %v1216
    %1218 = vdwg.mxu0
    %1219 = vmatpush.msra.mxu0 %v984
    %1220 = vmatpush.msra.mxu0 %v982
    %1221 = vmatpush.msra.mxu0 %v980
    %1222 = vmatpush.msra.mxu0 %v978
    %1223 = vmatpush.msra.mxu0 %v976
    %1224 = vmatpush.msra.mxu0 %v974
    %1225 = vmatpush.msra.mxu0 %v972
    %1226 = vmatpush.msra.mxu0 %v970
    %1227 = vmatpush.msra.mxu0 %v968
    %1228 = vmatpush.msra.mxu0 %v966
    %1229 = vmatpush.msra.mxu0 %v964
    %1230 = vmatpush.msra.mxu0 %v962
    %1231 = vmatpush.msra.mxu0 %v960
    %1232 = vmatpush.msra.mxu0 %v958
    %1233 = vmatpush.msra.mxu0 %v956
    %1234 = vmatpush.msra.mxu0 %v954
    %1235 = vmatmul.f32.gmra.mxu0 %v779
    %v1236 = vpop.f32.mrf.mxu0
    %v1237 = vadd.f32 %v1177, %v1236
    %1238 = vdwg.mxu0
    %1239 = vmatpush.msra.mxu0 %v1016
    %1240 = vmatpush.msra.mxu0 %v1014
    %1241 = vmatpush.msra.mxu0 %v1012
    %1242 = vmatpush.msra.mxu0 %v1010
    %1243 = vmatpush.msra.mxu0 %v1008
    %1244 = vmatpush.msra.mxu0 %v1006
    %1245 = vmatpush.msra.mxu0 %v1004
    %1246 = vmatpush.msra.mxu0 %v1002
    %1247 = vmatpush.msra.mxu0 %v1000
    %1248 = vmatpush.msra.mxu0 %v998
    %1249 = vmatpush.msra.mxu0 %v996
    %1250 = vmatpush.msra.mxu0 %v994
    %1251 = vmatpush.msra.mxu0 %v992
    %1252 = vmatpush.msra.mxu0 %v990
    %1253 = vmatpush.msra.mxu0 %v988
    %1254 = vmatpush.msra.mxu0 %v986
    %1255 = vmatmul.f32.gmra.mxu0 %v782
    %v1256 = vpop.f32.mrf.mxu0
    %v1257 = vadd.f32 %v1237, %v1256
    %1258 = vdwg.mxu0
    %v1259 = vadd.f32 %v1217, %v946
    %v1260 = vadd.f32 %v1257, %v947
    %v1261 = vld [vmem:[%s6] sm:$0x3]
    %v1262 = vld [vmem:[%s7] sm:$0x3]
    %v1263 = vmax.f32 %v950, 0.0
    %v1264 = vmax.f32 %v951, 0.0
    %v1265 = vmax.f32 %v1259, 0.0
    %v1266 = vmax.f32 %v1260, 0.0
    %v1267 = vrot.slane %v1263, 4
    %v1268 = vadd.f32 %v1263, %v1267
    %v1269 = vrot.slane %v1268, 2
    %v1270 = vadd.f32 %v1268, %v1269
    %v1271 = vrot.slane %v1270, 1
    %v1272 = vadd.f32 %v1270, %v1271
    %v1273 = vrot.slane %v1264, 4
    %v1274 = vadd.f32 %v1264, %v1273
    %v1275 = vrot.slane %v1274, 2
    %v1276 = vadd.f32 %v1274, %v1275
    %v1277 = vrot.slane %v1276, 1
    %v1278 = vadd.f32 %v1276, %v1277
    %v1279 = vrot.slane %v1265, 4
    %v1280 = vadd.f32 %v1265, %v1279
    %v1281 = vrot.slane %v1280, 2
    %v1282 = vadd.f32 %v1280, %v1281
    %v1283 = vrot.slane %v1282, 1
    %v1284 = vadd.f32 %v1282, %v1283
    %v1285 = vrot.slane %v1266, 4
    %v1286 = vadd.f32 %v1266, %v1285
    %v1287 = vrot.slane %v1286, 2
    %v1288 = vadd.f32 %v1286, %v1287
    %v1289 = vrot.slane %v1288, 1
    %v1290 = vadd.f32 %v1288, %v1289
    %v1291 = vadd.f32 %v1272, %v1284
    %v1292 = vadd.f32 %v1278, %v1290
    %1294 = vrot.lane.b32.xlu0 %v1291, 96
    %v1295 = vpop.permute.xlu0 %1294
    %v1297 = vadd.f32 %v1291, %v1295
    %1298 = vrot.lane.b32.xlu0 %v1291, 64
    %v1299 = vpop.permute.xlu0 %1298
    %v1301 = vadd.f32 %v1297, %v1299
    %1302 = vrot.lane.b32.xlu0 %v1291, 32
    %v1303 = vpop.permute.xlu0 %1302
    %v1305 = vadd.f32 %v1301, %v1303
    %v1306 = vadd.f32 %v1305, %v1292
    %1308 = vrot.lane.b32.xlu0 %v1292, 96
    %v1309 = vpop.permute.xlu0 %1308
    %v1311 = vadd.f32 %v1306, %v1309
    %1312 = vrot.lane.b32.xlu0 %v1292, 64
    %v1313 = vpop.permute.xlu0 %1312
    %v1315 = vadd.f32 %v1311, %v1313
    %1316 = vrot.lane.b32.xlu0 %v1292, 32
    %v1317 = vpop.permute.xlu0 %1316
    %v1319 = vadd.f32 %v1315, %v1317
    %v1320 = vrcp.pop 128.0
    %v1321 = vmul.f32 128.0, %v1320
    %v1322 = vsub.f32 1.0, %v1321
    %v1323 = vmul.f32 %v1320, %v1322
    %v1324 = vadd.f32 %v1320, %v1323
    %vm1325 = vweird.f32 %v1320
    %v1326 = vsel %vm1325, %v1320, %v1324
    %v1327 = vmul.f32 %v1319, %v1326
    %1329 = vrot.lane.b32.xlu0 %v1327, 32
    %v1330 = vpop.permute.xlu0 %1329
    %1332 = vrot.lane.b32.xlu0 %v1327, 64
    %v1333 = vpop.permute.xlu0 %1332
    %1335 = vrot.lane.b32.xlu0 %v1327, 96
    %v1336 = vpop.permute.xlu0 %1335
    %v1338 = vsel %vm122, %v1327, %v1330
    %v1339 = vsel %vm412, %v1338, %v1333
    %vm1340 = vcmask 785408
    %v1341 = vsel %vm1340, %v1339, %v1336
    %v1342 = vperm.slane %v1341, 0
    %v1343 = vsub.f32 %v1263, %v1342
    %v1344 = vsub.f32 %v1264, %v1342
    %v1345 = vmul.f32 %v1343, %v1343
    %v1346 = vmul.f32 %v1344, %v1344
    %v1347 = vrot.slane %v1345, 4
    %v1348 = vadd.f32 %v1345, %v1347
    %v1349 = vrot.slane %v1348, 2
    %v1350 = vadd.f32 %v1348, %v1349
    %v1351 = vrot.slane %v1350, 1
    %v1352 = vadd.f32 %v1350, %v1351
    %v1353 = vrot.slane %v1346, 4
    %v1354 = vadd.f32 %v1346, %v1353
    %v1355 = vrot.slane %v1354, 2
    %v1356 = vadd.f32 %v1354, %v1355
    %v1357 = vrot.slane %v1356, 1
    %v1358 = vadd.f32 %v1356, %v1357
    %v1359 = vsub.f32 %v1265, %v1342
    %v1360 = vsub.f32 %v1266, %v1342
    %v1361 = vmul.f32 %v1359, %v1359
    %v1362 = vmul.f32 %v1360, %v1360
    %v1363 = vrot.slane %v1361, 4
    %v1364 = vadd.f32 %v1361, %v1363
    %v1365 = vrot.slane %v1364, 2
    %v1366 = vadd.f32 %v1364, %v1365
    %v1367 = vrot.slane %v1366, 1
    %v1368 = vadd.f32 %v1366, %v1367
    %v1369 = vrot.slane %v1362, 4
    %v1370 = vadd.f32 %v1362, %v1369
    %v1371 = vrot.slane %v1370, 2
    %v1372 = vadd.f32 %v1370, %v1371
    %v1373 = vrot.slane %v1372, 1
    %v1374 = vadd.f32 %v1372, %v1373
    %v1375 = vadd.f32 %v1352, %v1368
    %v1376 = vadd.f32 %v1358, %v1374
    %1378 = vrot.lane.b32.xlu0 %v1375, 96
    %v1379 = vpop.permute.xlu0 %1378
    %v1381 = vadd.f32 %v1375, %v1379
    %1382 = vrot.lane.b32.xlu0 %v1375, 64
    %v1383 = vpop.permute.xlu0 %1382
    %v1385 = vadd.f32 %v1381, %v1383
    %1386 = vrot.lane.b32.xlu0 %v1375, 32
    %v1387 = vpop.permute.xlu0 %1386
    %v1389 = vadd.f32 %v1385, %v1387
    %v1390 = vadd.f32 %v1389, %v1376
    %1392 = vrot.lane.b32.xlu0 %v1376, 96
    %v1393 = vpop.permute.xlu0 %1392
    %v1395 = vadd.f32 %v1390, %v1393
    %1396 = vrot.lane.b32.xlu0 %v1376, 64
    %v1397 = vpop.permute.xlu0 %1396
    %v1399 = vadd.f32 %v1395, %v1397
    %1400 = vrot.lane.b32.xlu0 %v1376, 32
    %v1401 = vpop.permute.xlu0 %1400
    %v1403 = vadd.f32 %v1399, %v1401
    %v1404 = vmul.f32 %v1403, %v1326
    %v1405 = vadd.f32 %v1404, 1e-05
    %v1406 = vrsqrt.pop %v1405
    %v1407 = vmul.f32 %v1406, %v1405
    %v1408 = vmul.f32 %v1407, %v1406
    %v1409 = vmul.f32 0.5, %v1408
    %v1410 = vsub.f32 1.5, %v1409
    %v1411 = vmul.f32 %v1406, %v1410
    %vm1412 = vweird.f32 %v1405
    %vm1413 = vweird.f32 %v1406
    %vm1414 = vmor %vm1412, %vm1413
    %v1415 = vsel %vm1414, %v1406, %v1411
    %1417 = vrot.lane.b32.xlu0 %v1415, 32
    %v1418 = vpop.permute.xlu0 %1417
    %1420 = vrot.lane.b32.xlu0 %v1415, 64
    %v1421 = vpop.permute.xlu0 %1420
    %1423 = vrot.lane.b32.xlu0 %v1415, 96
    %v1424 = vpop.permute.xlu0 %1423
    %v1426 = vsel %vm122, %v1415, %v1418
    %v1427 = vsel %vm412, %v1426, %v1421
    %v1428 = vsel %vm1340, %v1427, %v1424
    %v1429 = vperm.slane %v1428, 0
    %v1430 = vmul.f32 %v1343, %v1429
    %v1431 = vmul.f32 %v1344, %v1429
    %v1433 = vperm.slane %v1261, 0
    %v1434 = vperm.slane %v1261, 1
    %v1437 = vmul.f32 %v1430, %v1433
    %v1438 = vmul.f32 %v1431, %v1434
    %v1440 = vperm.slane %v1262, 0
    %v1441 = vperm.slane %v1262, 1
    %v1444 = vadd.f32 %v1437, %v1440
    %v1445 = vadd.f32 %v1438, %v1441
    %v1446 = vmul.f32 %v1359, %v1429
    %v1447 = vmul.f32 %v1360, %v1429
    %v1448 = vmul.f32 %v1446, %v1433
    %v1449 = vmul.f32 %v1447, %v1434
    %v1450 = vadd.f32 %v1448, %v1440
    %v1451 = vadd.f32 %v1449, %v1441
    %v1454 = vrot.slane %v1444, 6
    %v1455 = vrot.slane %v1445, 6
    %1458 = vst [vmem:[#allocation3] sm:$0xc] %v1454
    %1459 = vst [vmem:[#allocation3 + $0x8] sm:$0xc] %v1455
    %v1460 = vrot.slane %v1444, 4
    %v1461 = vrot.slane %v1445, 4
    %1464 = vst [vmem:[#allocation3] sm:$0xc0] %v1460
    %1465 = vst [vmem:[#allocation3 + $0x8] sm:$0xc0] %v1461
    %v1466 = vrot.slane %v1444, 2
    %v1467 = vrot.slane %v1445, 2
    %1470 = vst [vmem:[#allocation3 + $0x10] sm:$0xc] %v1466
    %1471 = vst [vmem:[#allocation3 + $0x18] sm:$0xc] %v1467
    %1472 = vst [vmem:[#allocation3 + $0x10] sm:$0xc0] %v1444
    %1473 = vst [vmem:[#allocation3 + $0x18] sm:$0xc0] %v1445
    %v1476 = vrot.slane %v1450, 4
    %v1477 = vrot.slane %v1451, 4
    %1480 = vst [vmem:[#allocation3] sm:$0x30] %v1476
    %1481 = vst [vmem:[#allocation3 + $0x8] sm:$0x30] %v1477
    %v1482 = vrot.slane %v1450, 2
    %v1483 = vrot.slane %v1451, 2
    %1486 = vst [vmem:[#allocation3 + $0x10] sm:$0x3] %v1482
    %1487 = vst [vmem:[#allocation3 + $0x18] sm:$0x3] %v1483
    %1488 = vst [vmem:[#allocation3 + $0x10] sm:$0x30] %v1450
    %1489 = vst [vmem:[#allocation3 + $0x18] sm:$0x30] %v1451
    %v1490 = vrot.slane %v1450, 6
    %v1491 = vrot.slane %v1451, 6
    %1494 = vst [vmem:[#allocation3 + $0x20] sm:$0x3] %v1490
    %1495 = vst [vmem:[#allocation3 + $0x28] sm:$0x3] %v1491
    %v1496 = vld [vmem:[%s9] sm:$0x3]
    %v1497 = vld [vmem:[#allocation3] sm:$0xff]
    %v1498 = vld [vmem:[#allocation3 + $0x8] sm:$0xff]
    %v1499 = vld [vmem:[#allocation3 + $0x10] sm:$0xff]
    %v1500 = vld [vmem:[#allocation3 + $0x18] sm:$0xff]
    %v1501 = vld [vmem:[#allocation7] sm:$0xff]
    %v1502 = vld [vmem:[#allocation7 + $0x8] sm:$0xff]
    %v1503 = vld [vmem:[#allocation7 + $0x10] sm:$0xff]
    %v1504 = vld [vmem:[#allocation7 + $0x18] sm:$0xff]
    %v1505 = vld [vmem:[#allocation7 + $0x20] sm:$0xff]
    %v1506 = vld [vmem:[#allocation7 + $0x28] sm:$0xff]
    %v1507 = vld [vmem:[#allocation7 + $0x30] sm:$0xff]
    %v1508 = vld [vmem:[#allocation7 + $0x38] sm:$0xff]
    %v1509 = vld [vmem:[#allocation7 + $0x40] sm:$0xff]
    %v1510 = vld [vmem:[#allocation7 + $0x48] sm:$0xff]
    %v1511 = vld [vmem:[#allocation7 + $0x50] sm:$0xff]
    %v1512 = vld [vmem:[#allocation7 + $0x58] sm:$0xff]
    %v1513 = vld [vmem:[#allocation7 + $0x60] sm:$0xff]
    %v1514 = vld [vmem:[#allocation7 + $0x68] sm:$0xff]
    %v1515 = vld [vmem:[#allocation7 + $0x70] sm:$0xff]
    %v1516 = vld [vmem:[#allocation7 + $0x78] sm:$0xff]
    %v1517 = vld [vmem:[#allocation7 + $0x80] sm:$0xff]
    %v1518 = vld [vmem:[#allocation7 + $0x88] sm:$0xff]
    %v1519 = vld [vmem:[#allocation7 + $0x90] sm:$0xff]
    %v1520 = vld [vmem:[#allocation7 + $0x98] sm:$0xff]
    %v1521 = vld [vmem:[#allocation7 + $0xa0] sm:$0xff]
    %v1522 = vld [vmem:[#allocation7 + $0xa8] sm:$0xff]
    %v1523 = vld [vmem:[#allocation7 + $0xb0] sm:$0xff]
    %v1524 = vld [vmem:[#allocation7 + $0xb8] sm:$0xff]
    %v1525 = vld [vmem:[#allocation7 + $0xc0] sm:$0xff]
    %v1526 = vld [vmem:[#allocation7 + $0xc8] sm:$0xff]
    %v1527 = vld [vmem:[#allocation7 + $0xd0] sm:$0xff]
    %v1528 = vld [vmem:[#allocation7 + $0xd8] sm:$0xff]
    %v1529 = vld [vmem:[#allocation7 + $0xe0] sm:$0xff]
    %v1530 = vld [vmem:[#allocation7 + $0xe8] sm:$0xff]
    %v1531 = vld [vmem:[#allocation7 + $0xf0] sm:$0xff]
    %v1532 = vld [vmem:[#allocation7 + $0xf8] sm:$0xff]
    %v1533 = vld [vmem:[#allocation7 + $0x100] sm:$0xff]
    %v1534 = vld [vmem:[#allocation7 + $0x108] sm:$0xff]
    %v1535 = vld [vmem:[#allocation7 + $0x110] sm:$0xff]
    %v1536 = vld [vmem:[#allocation7 + $0x118] sm:$0xff]
    %v1537 = vld [vmem:[#allocation7 + $0x120] sm:$0xff]
    %v1538 = vld [vmem:[#allocation7 + $0x128] sm:$0xff]
    %v1539 = vld [vmem:[#allocation7 + $0x130] sm:$0xff]
    %v1540 = vld [vmem:[#allocation7 + $0x138] sm:$0xff]
    %v1541 = vld [vmem:[#allocation7 + $0x140] sm:$0xff]
    %v1542 = vld [vmem:[#allocation7 + $0x148] sm:$0xff]
    %v1543 = vld [vmem:[#allocation7 + $0x150] sm:$0xff]
    %v1544 = vld [vmem:[#allocation7 + $0x158] sm:$0xff]
    %v1545 = vld [vmem:[#allocation7 + $0x160] sm:$0xff]
    %v1546 = vld [vmem:[#allocation7 + $0x168] sm:$0xff]
    %v1547 = vld [vmem:[#allocation7 + $0x170] sm:$0xff]
    %v1548 = vld [vmem:[#allocation7 + $0x178] sm:$0xff]
    %v1549 = vld [vmem:[#allocation7 + $0x180] sm:$0xff]
    %v1550 = vld [vmem:[#allocation7 + $0x188] sm:$0xff]
    %v1551 = vld [vmem:[#allocation7 + $0x190] sm:$0xff]
    %v1552 = vld [vmem:[#allocation7 + $0x198] sm:$0xff]
    %v1553 = vld [vmem:[#allocation7 + $0x1a0] sm:$0xff]
    %v1554 = vld [vmem:[#allocation7 + $0x1a8] sm:$0xff]
    %v1555 = vld [vmem:[#allocation7 + $0x1b0] sm:$0xff]
    %v1556 = vld [vmem:[#allocation7 + $0x1b8] sm:$0xff]
    %v1557 = vld [vmem:[#allocation7 + $0x1c0] sm:$0xff]
    %v1558 = vld [vmem:[#allocation7 + $0x1c8] sm:$0xff]
    %v1559 = vld [vmem:[#allocation7 + $0x1d0] sm:$0xff]
    %v1560 = vld [vmem:[#allocation7 + $0x1d8] sm:$0xff]
    %v1561 = vld [vmem:[#allocation7 + $0x1e0] sm:$0xff]
    %v1562 = vld [vmem:[#allocation7 + $0x1e8] sm:$0xff]
    %v1563 = vld [vmem:[#allocation7 + $0x1f0] sm:$0xff]
    %v1564 = vld [vmem:[#allocation7 + $0x1f8] sm:$0xff]
    %v1565 = vld [vmem:[#allocation3] sm:$0xfc]
    %v1566 = vld [vmem:[#allocation3 + $0x8] sm:$0xfc]
    %v1567 = vld [vmem:[#allocation3 + $0x20] sm:$0x3]
    %v1568 = vld [vmem:[#allocation3 + $0x28] sm:$0x3]
    %s1569 = scalar_lea.vmem [#allocation7], 512
    %v1570 = vld [vmem:[%s1569] sm:$0xff]
    %v1571 = vld [vmem:[%s1569 + $0x8] sm:$0xff]
    %v1572 = vld [vmem:[%s1569 + $0x10] sm:$0xff]
    %v1573 = vld [vmem:[%s1569 + $0x18] sm:$0xff]
    %v1574 = vld [vmem:[%s1569 + $0x20] sm:$0xff]
    %v1575 = vld [vmem:[%s1569 + $0x28] sm:$0xff]
    %v1576 = vld [vmem:[%s1569 + $0x30] sm:$0xff]
    %v1577 = vld [vmem:[%s1569 + $0x38] sm:$0xff]
    %v1578 = vld [vmem:[%s1569 + $0x40] sm:$0xff]
    %v1579 = vld [vmem:[%s1569 + $0x48] sm:$0xff]
    %v1580 = vld [vmem:[%s1569 + $0x50] sm:$0xff]
    %v1581 = vld [vmem:[%s1569 + $0x58] sm:$0xff]
    %v1582 = vld [vmem:[%s1569 + $0x60] sm:$0xff]
    %v1583 = vld [vmem:[%s1569 + $0x68] sm:$0xff]
    %v1584 = vld [vmem:[%s1569 + $0x70] sm:$0xff]
    %v1585 = vld [vmem:[%s1569 + $0x78] sm:$0xff]
    %v1586 = vld [vmem:[%s1569 + $0x80] sm:$0xff]
    %v1587 = vld [vmem:[%s1569 + $0x88] sm:$0xff]
    %v1588 = vld [vmem:[%s1569 + $0x90] sm:$0xff]
    %v1589 = vld [vmem:[%s1569 + $0x98] sm:$0xff]
    %v1590 = vld [vmem:[%s1569 + $0xa0] sm:$0xff]
    %v1591 = vld [vmem:[%s1569 + $0xa8] sm:$0xff]
    %v1592 = vld [vmem:[%s1569 + $0xb0] sm:$0xff]
    %v1593 = vld [vmem:[%s1569 + $0xb8] sm:$0xff]
    %v1594 = vld [vmem:[%s1569 + $0xc0] sm:$0xff]
    %v1595 = vld [vmem:[%s1569 + $0xc8] sm:$0xff]
    %v1596 = vld [vmem:[%s1569 + $0xd0] sm:$0xff]
    %v1597 = vld [vmem:[%s1569 + $0xd8] sm:$0xff]
    %v1598 = vld [vmem:[%s1569 + $0xe0] sm:$0xff]
    %v1599 = vld [vmem:[%s1569 + $0xe8] sm:$0xff]
    %v1600 = vld [vmem:[%s1569 + $0xf0] sm:$0xff]
    %v1601 = vld [vmem:[%s1569 + $0xf8] sm:$0xff]
    %v1602 = vld [vmem:[%s1569 + $0x100] sm:$0xff]
    %v1603 = vld [vmem:[%s1569 + $0x108] sm:$0xff]
    %v1604 = vld [vmem:[%s1569 + $0x110] sm:$0xff]
    %v1605 = vld [vmem:[%s1569 + $0x118] sm:$0xff]
    %v1606 = vld [vmem:[%s1569 + $0x120] sm:$0xff]
    %v1607 = vld [vmem:[%s1569 + $0x128] sm:$0xff]
    %v1608 = vld [vmem:[%s1569 + $0x130] sm:$0xff]
    %v1609 = vld [vmem:[%s1569 + $0x138] sm:$0xff]
    %v1610 = vld [vmem:[%s1569 + $0x140] sm:$0xff]
    %v1611 = vld [vmem:[%s1569 + $0x148] sm:$0xff]
    %v1612 = vld [vmem:[%s1569 + $0x150] sm:$0xff]
    %v1613 = vld [vmem:[%s1569 + $0x158] sm:$0xff]
    %v1614 = vld [vmem:[%s1569 + $0x160] sm:$0xff]
    %v1615 = vld [vmem:[%s1569 + $0x168] sm:$0xff]
    %v1616 = vld [vmem:[%s1569 + $0x170] sm:$0xff]
    %v1617 = vld [vmem:[%s1569 + $0x178] sm:$0xff]
    %v1618 = vld [vmem:[%s1569 + $0x180] sm:$0xff]
    %v1619 = vld [vmem:[%s1569 + $0x188] sm:$0xff]
    %v1620 = vld [vmem:[%s1569 + $0x190] sm:$0xff]
    %v1621 = vld [vmem:[%s1569 + $0x198] sm:$0xff]
    %v1622 = vld [vmem:[%s1569 + $0x1a0] sm:$0xff]
    %v1623 = vld [vmem:[%s1569 + $0x1a8] sm:$0xff]
    %v1624 = vld [vmem:[%s1569 + $0x1b0] sm:$0xff]
    %v1625 = vld [vmem:[%s1569 + $0x1b8] sm:$0xff]
    %v1626 = vld [vmem:[%s1569 + $0x1c0] sm:$0xff]
    %v1627 = vld [vmem:[%s1569 + $0x1c8] sm:$0xff]
    %v1628 = vld [vmem:[%s1569 + $0x1d0] sm:$0xff]
    %v1629 = vld [vmem:[%s1569 + $0x1d8] sm:$0xff]
    %v1630 = vld [vmem:[%s1569 + $0x1e0] sm:$0xff]
    %v1631 = vld [vmem:[%s1569 + $0x1e8] sm:$0xff]
    %v1632 = vld [vmem:[%s1569 + $0x1f0] sm:$0xff]
    %v1633 = vld [vmem:[%s1569 + $0x1f8] sm:$0xff]
    %v1640 = vrot.slane %v1565, 2
    %v1641 = vrot.slane %v1499, 2
    %v1642 = vsel %vm776, %v1640, %v1641
    %v1643 = vrot.slane %v1566, 2
    %v1644 = vrot.slane %v1500, 2
    %v1645 = vsel %vm776, %v1643, %v1644
    %v1646 = vrot.slane %v1567, 2
    %v1647 = vsel %vm776, %v1641, %v1646
    %v1648 = vrot.slane %v1568, 2
    %v1649 = vsel %vm776, %v1644, %v1648
    %1654 = vmatpush.msra.mxu0 %v1600
    %1655 = vmatpush.msra.mxu0 %v1598
    %1656 = vmatpush.msra.mxu0 %v1596
    %1657 = vmatpush.msra.mxu0 %v1594
    %1658 = vmatpush.msra.mxu0 %v1592
    %1659 = vmatpush.msra.mxu0 %v1590
    %1660 = vmatpush.msra.mxu0 %v1588
    %1661 = vmatpush.msra.mxu0 %v1586
    %1662 = vmatpush.msra.mxu0 %v1584
    %1663 = vmatpush.msra.mxu0 %v1582
    %1664 = vmatpush.msra.mxu0 %v1580
    %1665 = vmatpush.msra.mxu0 %v1578
    %1666 = vmatpush.msra.mxu0 %v1576
    %1667 = vmatpush.msra.mxu0 %v1574
    %1668 = vmatpush.msra.mxu0 %v1572
    %1669 = vmatpush.msra.mxu0 %v1570
    %1670 = vmatmul.f32.gmra.mxu0 %v1642
    %v1671 = vpop.f32.mrf.mxu0
    %v1672 = vadd.f32 0.0, %v1671
    %1673 = vmatmul.f32.gmra.mxu0 %v1647
    %v1674 = vpop.f32.mrf.mxu0
    %v1675 = vadd.f32 0.0, %v1674
    %1676 = vdwg.mxu0
    %1677 = vmatpush.msra.mxu0 %v1632
    %1678 = vmatpush.msra.mxu0 %v1630
    %1679 = vmatpush.msra.mxu0 %v1628
    %1680 = vmatpush.msra.mxu0 %v1626
    %1681 = vmatpush.msra.mxu0 %v1624
    %1682 = vmatpush.msra.mxu0 %v1622
    %1683 = vmatpush.msra.mxu0 %v1620
    %1684 = vmatpush.msra.mxu0 %v1618
    %1685 = vmatpush.msra.mxu0 %v1616
    %1686 = vmatpush.msra.mxu0 %v1614
    %1687 = vmatpush.msra.mxu0 %v1612
    %1688 = vmatpush.msra.mxu0 %v1610
    %1689 = vmatpush.msra.mxu0 %v1608
    %1690 = vmatpush.msra.mxu0 %v1606
    %1691 = vmatpush.msra.mxu0 %v1604
    %1692 = vmatpush.msra.mxu0 %v1602
    %1693 = vmatmul.f32.gmra.mxu0 %v1645
    %v1694 = vpop.f32.mrf.mxu0
    %v1695 = vadd.f32 %v1672, %v1694
    %1696 = vmatmul.f32.gmra.mxu0 %v1649
    %v1697 = vpop.f32.mrf.mxu0
    %v1698 = vadd.f32 %v1675, %v1697
    %1699 = vdwg.mxu0
    %1700 = vmatpush.msra.mxu0 %v1601
    %1701 = vmatpush.msra.mxu0 %v1599
    %1702 = vmatpush.msra.mxu0 %v1597
    %1703 = vmatpush.msra.mxu0 %v1595
    %1704 = vmatpush.msra.mxu0 %v1593
    %1705 = vmatpush.msra.mxu0 %v1591
    %1706 = vmatpush.msra.mxu0 %v1589
    %1707 = vmatpush.msra.mxu0 %v1587
    %1708 = vmatpush.msra.mxu0 %v1585
    %1709 = vmatpush.msra.mxu0 %v1583
    %1710 = vmatpush.msra.mxu0 %v1581
    %1711 = vmatpush.msra.mxu0 %v1579
    %1712 = vmatpush.msra.mxu0 %v1577
    %1713 = vmatpush.msra.mxu0 %v1575
    %1714 = vmatpush.msra.mxu0 %v1573
    %1715 = vmatpush.msra.mxu0 %v1571
    %1716 = vmatmul.f32.gmra.mxu0 %v1642
    %v1717 = vpop.f32.mrf.mxu0
    %v1718 = vadd.f32 0.0, %v1717
    %1719 = vmatmul.f32.gmra.mxu0 %v1647
    %v1720 = vpop.f32.mrf.mxu0
    %v1721 = vadd.f32 0.0, %v1720
    %1722 = vdwg.mxu0
    %1723 = vmatpush.msra.mxu0 %v1633
    %1724 = vmatpush.msra.mxu0 %v1631
    %1725 = vmatpush.msra.mxu0 %v1629
    %1726 = vmatpush.msra.mxu0 %v1627
    %1727 = vmatpush.msra.mxu0 %v1625
    %1728 = vmatpush.msra.mxu0 %v1623
    %1729 = vmatpush.msra.mxu0 %v1621
    %1730 = vmatpush.msra.mxu0 %v1619
    %1731 = vmatpush.msra.mxu0 %v1617
    %1732 = vmatpush.msra.mxu0 %v1615
    %1733 = vmatpush.msra.mxu0 %v1613
    %1734 = vmatpush.msra.mxu0 %v1611
    %1735 = vmatpush.msra.mxu0 %v1609
    %1736 = vmatpush.msra.mxu0 %v1607
    %1737 = vmatpush.msra.mxu0 %v1605
    %1738 = vmatpush.msra.mxu0 %v1603
    %1739 = vmatmul.f32.gmra.mxu0 %v1645
    %v1740 = vpop.f32.mrf.mxu0
    %v1741 = vadd.f32 %v1718, %v1740
    %1742 = vmatmul.f32.gmra.mxu0 %v1649
    %v1743 = vpop.f32.mrf.mxu0
    %v1744 = vadd.f32 %v1721, %v1743
    %1745 = vdwg.mxu0
    %1746 = vmatpush.msra.mxu0 %v1531
    %1747 = vmatpush.msra.mxu0 %v1529
    %1748 = vmatpush.msra.mxu0 %v1527
    %1749 = vmatpush.msra.mxu0 %v1525
    %1750 = vmatpush.msra.mxu0 %v1523
    %1751 = vmatpush.msra.mxu0 %v1521
    %1752 = vmatpush.msra.mxu0 %v1519
    %1753 = vmatpush.msra.mxu0 %v1517
    %1754 = vmatpush.msra.mxu0 %v1515
    %1755 = vmatpush.msra.mxu0 %v1513
    %1756 = vmatpush.msra.mxu0 %v1511
    %1757 = vmatpush.msra.mxu0 %v1509
    %1758 = vmatpush.msra.mxu0 %v1507
    %1759 = vmatpush.msra.mxu0 %v1505
    %1760 = vmatpush.msra.mxu0 %v1503
    %1761 = vmatpush.msra.mxu0 %v1501
    %1762 = vmatmul.f32.gmra.mxu0 %v1497
    %v1763 = vpop.f32.mrf.mxu0
    %v1764 = vadd.f32 %v1695, %v1763
    %1765 = vmatmul.f32.gmra.mxu0 %v1499
    %v1766 = vpop.f32.mrf.mxu0
    %v1767 = vadd.f32 %v1698, %v1766
    %1768 = vdwg.mxu0
    %1769 = vmatpush.msra.mxu0 %v1563
    %1770 = vmatpush.msra.mxu0 %v1561
    %1771 = vmatpush.msra.mxu0 %v1559
    %1772 = vmatpush.msra.mxu0 %v1557
    %1773 = vmatpush.msra.mxu0 %v1555
    %1774 = vmatpush.msra.mxu0 %v1553
    %1775 = vmatpush.msra.mxu0 %v1551
    %1776 = vmatpush.msra.mxu0 %v1549
    %1777 = vmatpush.msra.mxu0 %v1547
    %1778 = vmatpush.msra.mxu0 %v1545
    %1779 = vmatpush.msra.mxu0 %v1543
    %1780 = vmatpush.msra.mxu0 %v1541
    %1781 = vmatpush.msra.mxu0 %v1539
    %1782 = vmatpush.msra.mxu0 %v1537
    %1783 = vmatpush.msra.mxu0 %v1535
    %1784 = vmatpush.msra.mxu0 %v1533
    %1785 = vmatmul.f32.gmra.mxu0 %v1498
    %v1786 = vpop.f32.mrf.mxu0
    %v1787 = vadd.f32 %v1764, %v1786
    %1788 = vmatmul.f32.gmra.mxu0 %v1500
    %v1789 = vpop.f32.mrf.mxu0
    %v1790 = vadd.f32 %v1767, %v1789
    %1791 = vdwg.mxu0
    %1792 = vmatpush.msra.mxu0 %v1532
    %1793 = vmatpush.msra.mxu0 %v1530
    %1794 = vmatpush.msra.mxu0 %v1528
    %1795 = vmatpush.msra.mxu0 %v1526
    %1796 = vmatpush.msra.mxu0 %v1524
    %1797 = vmatpush.msra.mxu0 %v1522
    %1798 = vmatpush.msra.mxu0 %v1520
    %1799 = vmatpush.msra.mxu0 %v1518
    %1800 = vmatpush.msra.mxu0 %v1516
    %1801 = vmatpush.msra.mxu0 %v1514
    %1802 = vmatpush.msra.mxu0 %v1512
    %1803 = vmatpush.msra.mxu0 %v1510
    %1804 = vmatpush.msra.mxu0 %v1508
    %1805 = vmatpush.msra.mxu0 %v1506
    %1806 = vmatpush.msra.mxu0 %v1504
    %1807 = vmatpush.msra.mxu0 %v1502
    %1808 = vmatmul.f32.gmra.mxu0 %v1497
    %v1809 = vpop.f32.mrf.mxu0
    %v1810 = vadd.f32 %v1741, %v1809
    %1811 = vmatmul.f32.gmra.mxu0 %v1499
    %v1812 = vpop.f32.mrf.mxu0
    %v1813 = vadd.f32 %v1744, %v1812
    %1814 = vdwg.mxu0
    %1815 = vmatpush.msra.mxu0 %v1564
    %1816 = vmatpush.msra.mxu0 %v1562
    %1817 = vmatpush.msra.mxu0 %v1560
    %1818 = vmatpush.msra.mxu0 %v1558
    %1819 = vmatpush.msra.mxu0 %v1556
    %1820 = vmatpush.msra.mxu0 %v1554
    %1821 = vmatpush.msra.mxu0 %v1552
    %1822 = vmatpush.msra.mxu0 %v1550
    %1823 = vmatpush.msra.mxu0 %v1548
    %1824 = vmatpush.msra.mxu0 %v1546
    %1825 = vmatpush.msra.mxu0 %v1544
    %1826 = vmatpush.msra.mxu0 %v1542
    %1827 = vmatpush.msra.mxu0 %v1540
    %1828 = vmatpush.msra.mxu0 %v1538
    %1829 = vmatpush.msra.mxu0 %v1536
    %1830 = vmatpush.msra.mxu0 %v1534
    %1831 = vmatmul.f32.gmra.mxu0 %v1498
    %v1832 = vpop.f32.mrf.mxu0
    %v1833 = vadd.f32 %v1810, %v1832
    %1834 = vmatmul.f32.gmra.mxu0 %v1500
    %v1835 = vpop.f32.mrf.mxu0
    %v1836 = vadd.f32 %v1813, %v1835
    %1837 = vdwg.mxu0
    %v1839 = vperm.slane %v1496, 0
    %v1840 = vperm.slane %v1496, 1
    %v1843 = vadd.f32 %v1787, %v1839
    %v1844 = vadd.f32 %v1833, %v1840
    %v1845 = vadd.f32 %v1790, %v1839
    %v1846 = vadd.f32 %v1836, %v1840
    %s1847 = scalar_lea.vmem [#allocation7], 1024
    %v1848 = vld [vmem:[%s1847] sm:$0xff]
    %v1849 = vld [vmem:[%s1847 + $0x8] sm:$0xff]
    %v1850 = vld [vmem:[%s1847 + $0x10] sm:$0xff]
    %v1851 = vld [vmem:[%s1847 + $0x18] sm:$0xff]
    %v1852 = vld [vmem:[%s1847 + $0x20] sm:$0xff]
    %v1853 = vld [vmem:[%s1847 + $0x28] sm:$0xff]
    %v1854 = vld [vmem:[%s1847 + $0x30] sm:$0xff]
    %v1855 = vld [vmem:[%s1847 + $0x38] sm:$0xff]
    %v1856 = vld [vmem:[%s1847 + $0x40] sm:$0xff]
    %v1857 = vld [vmem:[%s1847 + $0x48] sm:$0xff]
    %v1858 = vld [vmem:[%s1847 + $0x50] sm:$0xff]
    %v1859 = vld [vmem:[%s1847 + $0x58] sm:$0xff]
    %v1860 = vld [vmem:[%s1847 + $0x60] sm:$0xff]
    %v1861 = vld [vmem:[%s1847 + $0x68] sm:$0xff]
    %v1862 = vld [vmem:[%s1847 + $0x70] sm:$0xff]
    %v1863 = vld [vmem:[%s1847 + $0x78] sm:$0xff]
    %v1864 = vld [vmem:[%s1847 + $0x80] sm:$0xff]
    %v1865 = vld [vmem:[%s1847 + $0x88] sm:$0xff]
    %v1866 = vld [vmem:[%s1847 + $0x90] sm:$0xff]
    %v1867 = vld [vmem:[%s1847 + $0x98] sm:$0xff]
    %v1868 = vld [vmem:[%s1847 + $0xa0] sm:$0xff]
    %v1869 = vld [vmem:[%s1847 + $0xa8] sm:$0xff]
    %v1870 = vld [vmem:[%s1847 + $0xb0] sm:$0xff]
    %v1871 = vld [vmem:[%s1847 + $0xb8] sm:$0xff]
    %v1872 = vld [vmem:[%s1847 + $0xc0] sm:$0xff]
    %v1873 = vld [vmem:[%s1847 + $0xc8] sm:$0xff]
    %v1874 = vld [vmem:[%s1847 + $0xd0] sm:$0xff]
    %v1875 = vld [vmem:[%s1847 + $0xd8] sm:$0xff]
    %v1876 = vld [vmem:[%s1847 + $0xe0] sm:$0xff]
    %v1877 = vld [vmem:[%s1847 + $0xe8] sm:$0xff]
    %v1878 = vld [vmem:[%s1847 + $0xf0] sm:$0xff]
    %v1879 = vld [vmem:[%s1847 + $0xf8] sm:$0xff]
    %v1880 = vld [vmem:[%s1847 + $0x100] sm:$0xff]
    %v1881 = vld [vmem:[%s1847 + $0x108] sm:$0xff]
    %v1882 = vld [vmem:[%s1847 + $0x110] sm:$0xff]
    %v1883 = vld [vmem:[%s1847 + $0x118] sm:$0xff]
    %v1884 = vld [vmem:[%s1847 + $0x120] sm:$0xff]
    %v1885 = vld [vmem:[%s1847 + $0x128] sm:$0xff]
    %v1886 = vld [vmem:[%s1847 + $0x130] sm:$0xff]
    %v1887 = vld [vmem:[%s1847 + $0x138] sm:$0xff]
    %v1888 = vld [vmem:[%s1847 + $0x140] sm:$0xff]
    %v1889 = vld [vmem:[%s1847 + $0x148] sm:$0xff]
    %v1890 = vld [vmem:[%s1847 + $0x150] sm:$0xff]
    %v1891 = vld [vmem:[%s1847 + $0x158] sm:$0xff]
    %v1892 = vld [vmem:[%s1847 + $0x160] sm:$0xff]
    %v1893 = vld [vmem:[%s1847 + $0x168] sm:$0xff]
    %v1894 = vld [vmem:[%s1847 + $0x170] sm:$0xff]
    %v1895 = vld [vmem:[%s1847 + $0x178] sm:$0xff]
    %v1896 = vld [vmem:[%s1847 + $0x180] sm:$0xff]
    %v1897 = vld [vmem:[%s1847 + $0x188] sm:$0xff]
    %v1898 = vld [vmem:[%s1847 + $0x190] sm:$0xff]
    %v1899 = vld [vmem:[%s1847 + $0x198] sm:$0xff]
    %v1900 = vld [vmem:[%s1847 + $0x1a0] sm:$0xff]
    %v1901 = vld [vmem:[%s1847 + $0x1a8] sm:$0xff]
    %v1902 = vld [vmem:[%s1847 + $0x1b0] sm:$0xff]
    %v1903 = vld [vmem:[%s1847 + $0x1b8] sm:$0xff]
    %v1904 = vld [vmem:[%s1847 + $0x1c0] sm:$0xff]
    %v1905 = vld [vmem:[%s1847 + $0x1c8] sm:$0xff]
    %v1906 = vld [vmem:[%s1847 + $0x1d0] sm:$0xff]
    %v1907 = vld [vmem:[%s1847 + $0x1d8] sm:$0xff]
    %v1908 = vld [vmem:[%s1847 + $0x1e0] sm:$0xff]
    %v1909 = vld [vmem:[%s1847 + $0x1e8] sm:$0xff]
    %v1910 = vld [vmem:[%s1847 + $0x1f0] sm:$0xff]
    %v1911 = vld [vmem:[%s1847 + $0x1f8] sm:$0xff]
    %v1912 = vld [vmem:[#allocation3] sm:$0xf0]
    %v1913 = vld [vmem:[#allocation3 + $0x8] sm:$0xf0]
    %v1914 = vld [vmem:[#allocation3 + $0x20] sm:$0xf]
    %v1915 = vld [vmem:[#allocation3 + $0x28] sm:$0xf]
    %s1916 = scalar_lea.vmem [#allocation7], 1536
    %v1917 = vld [vmem:[%s1916] sm:$0xff]
    %v1918 = vld [vmem:[%s1916 + $0x8] sm:$0xff]
    %v1919 = vld [vmem:[%s1916 + $0x10] sm:$0xff]
    %v1920 = vld [vmem:[%s1916 + $0x18] sm:$0xff]
    %v1921 = vld [vmem:[%s1916 + $0x20] sm:$0xff]
    %v1922 = vld [vmem:[%s1916 + $0x28] sm:$0xff]
    %v1923 = vld [vmem:[%s1916 + $0x30] sm:$0xff]
    %v1924 = vld [vmem:[%s1916 + $0x38] sm:$0xff]
    %v1925 = vld [vmem:[%s1916 + $0x40] sm:$0xff]
    %v1926 = vld [vmem:[%s1916 + $0x48] sm:$0xff]
    %v1927 = vld [vmem:[%s1916 + $0x50] sm:$0xff]
    %v1928 = vld [vmem:[%s1916 + $0x58] sm:$0xff]
    %v1929 = vld [vmem:[%s1916 + $0x60] sm:$0xff]
    %v1930 = vld [vmem:[%s1916 + $0x68] sm:$0xff]
    %v1931 = vld [vmem:[%s1916 + $0x70] sm:$0xff]
    %v1932 = vld [vmem:[%s1916 + $0x78] sm:$0xff]
    %v1933 = vld [vmem:[%s1916 + $0x80] sm:$0xff]
    %v1934 = vld [vmem:[%s1916 + $0x88] sm:$0xff]
    %v1935 = vld [vmem:[%s1916 + $0x90] sm:$0xff]
    %v1936 = vld [vmem:[%s1916 + $0x98] sm:$0xff]
    %v1937 = vld [vmem:[%s1916 + $0xa0] sm:$0xff]
    %v1938 = vld [vmem:[%s1916 + $0xa8] sm:$0xff]
    %v1939 = vld [vmem:[%s1916 + $0xb0] sm:$0xff]
    %v1940 = vld [vmem:[%s1916 + $0xb8] sm:$0xff]
    %v1941 = vld [vmem:[%s1916 + $0xc0] sm:$0xff]
    %v1942 = vld [vmem:[%s1916 + $0xc8] sm:$0xff]
    %v1943 = vld [vmem:[%s1916 + $0xd0] sm:$0xff]
    %v1944 = vld [vmem:[%s1916 + $0xd8] sm:$0xff]
    %v1945 = vld [vmem:[%s1916 + $0xe0] sm:$0xff]
    %v1946 = vld [vmem:[%s1916 + $0xe8] sm:$0xff]
    %v1947 = vld [vmem:[%s1916 + $0xf0] sm:$0xff]
    %v1948 = vld [vmem:[%s1916 + $0xf8] sm:$0xff]
    %v1949 = vld [vmem:[%s1916 + $0x100] sm:$0xff]
    %v1950 = vld [vmem:[%s1916 + $0x108] sm:$0xff]
    %v1951 = vld [vmem:[%s1916 + $0x110] sm:$0xff]
    %v1952 = vld [vmem:[%s1916 + $0x118] sm:$0xff]
    %v1953 = vld [vmem:[%s1916 + $0x120] sm:$0xff]
    %v1954 = vld [vmem:[%s1916 + $0x128] sm:$0xff]
    %v1955 = vld [vmem:[%s1916 + $0x130] sm:$0xff]
    %v1956 = vld [vmem:[%s1916 + $0x138] sm:$0xff]
    %v1957 = vld [vmem:[%s1916 + $0x140] sm:$0xff]
    %v1958 = vld [vmem:[%s1916 + $0x148] sm:$0xff]
    %v1959 = vld [vmem:[%s1916 + $0x150] sm:$0xff]
    %v1960 = vld [vmem:[%s1916 + $0x158] sm:$0xff]
    %v1961 = vld [vmem:[%s1916 + $0x160] sm:$0xff]
    %v1962 = vld [vmem:[%s1916 + $0x168] sm:$0xff]
    %v1963 = vld [vmem:[%s1916 + $0x170] sm:$0xff]
    %v1964 = vld [vmem:[%s1916 + $0x178] sm:$0xff]
    %v1965 = vld [vmem:[%s1916 + $0x180] sm:$0xff]
    %v1966 = vld [vmem:[%s1916 + $0x188] sm:$0xff]
    %v1967 = vld [vmem:[%s1916 + $0x190] sm:$0xff]
    %v1968 = vld [vmem:[%s1916 + $0x198] sm:$0xff]
    %v1969 = vld [vmem:[%s1916 + $0x1a0] sm:$0xff]
    %v1970 = vld [vmem:[%s1916 + $0x1a8] sm:$0xff]
    %v1971 = vld [vmem:[%s1916 + $0x1b0] sm:$0xff]
    %v1972 = vld [vmem:[%s1916 + $0x1b8] sm:$0xff]
    %v1973 = vld [vmem:[%s1916 + $0x1c0] sm:$0xff]
    %v1974 = vld [vmem:[%s1916 + $0x1c8] sm:$0xff]
    %v1975 = vld [vmem:[%s1916 + $0x1d0] sm:$0xff]
    %v1976 = vld [vmem:[%s1916 + $0x1d8] sm:$0xff]
    %v1977 = vld [vmem:[%s1916 + $0x1e0] sm:$0xff]
    %v1978 = vld [vmem:[%s1916 + $0x1e8] sm:$0xff]
    %v1979 = vld [vmem:[%s1916 + $0x1f0] sm:$0xff]
    %v1980 = vld [vmem:[%s1916 + $0x1f8] sm:$0xff]
    %v1985 = vrot.slane %v1912, 4
    %v1986 = vrot.slane %v1499, 4
    %v1987 = vsel %vm1090, %v1985, %v1986
    %v1988 = vrot.slane %v1913, 4
    %v1989 = vrot.slane %v1500, 4
    %v1990 = vsel %vm1090, %v1988, %v1989
    %v1991 = vrot.slane %v1914, 4
    %v1992 = vsel %vm1090, %v1986, %v1991
    %v1993 = vrot.slane %v1915, 4
    %v1994 = vsel %vm1090, %v1989, %v1993
    %1999 = vmatpush.msra.mxu0 %v1947
    %2000 = vmatpush.msra.mxu0 %v1945
    %2001 = vmatpush.msra.mxu0 %v1943
    %2002 = vmatpush.msra.mxu0 %v1941
    %2003 = vmatpush.msra.mxu0 %v1939
    %2004 = vmatpush.msra.mxu0 %v1937
    %2005 = vmatpush.msra.mxu0 %v1935
    %2006 = vmatpush.msra.mxu0 %v1933
    %2007 = vmatpush.msra.mxu0 %v1931
    %2008 = vmatpush.msra.mxu0 %v1929
    %2009 = vmatpush.msra.mxu0 %v1927
    %2010 = vmatpush.msra.mxu0 %v1925
    %2011 = vmatpush.msra.mxu0 %v1923
    %2012 = vmatpush.msra.mxu0 %v1921
    %2013 = vmatpush.msra.mxu0 %v1919
    %2014 = vmatpush.msra.mxu0 %v1917
    %2015 = vmatmul.f32.gmra.mxu0 %v1987
    %v2016 = vpop.f32.mrf.mxu0
    %v2017 = vadd.f32 0.0, %v2016
    %2018 = vmatmul.f32.gmra.mxu0 %v1992
    %v2019 = vpop.f32.mrf.mxu0
    %v2020 = vadd.f32 0.0, %v2019
    %2021 = vdwg.mxu0
    %2022 = vmatpush.msra.mxu0 %v1979
    %2023 = vmatpush.msra.mxu0 %v1977
    %2024 = vmatpush.msra.mxu0 %v1975
    %2025 = vmatpush.msra.mxu0 %v1973
    %2026 = vmatpush.msra.mxu0 %v1971
    %2027 = vmatpush.msra.mxu0 %v1969
    %2028 = vmatpush.msra.mxu0 %v1967
    %2029 = vmatpush.msra.mxu0 %v1965
    %2030 = vmatpush.msra.mxu0 %v1963
    %2031 = vmatpush.msra.mxu0 %v1961
    %2032 = vmatpush.msra.mxu0 %v1959
    %2033 = vmatpush.msra.mxu0 %v1957
    %2034 = vmatpush.msra.mxu0 %v1955
    %2035 = vmatpush.msra.mxu0 %v1953
    %2036 = vmatpush.msra.mxu0 %v1951
    %2037 = vmatpush.msra.mxu0 %v1949
    %2038 = vmatmul.f32.gmra.mxu0 %v1990
    %v2039 = vpop.f32.mrf.mxu0
    %v2040 = vadd.f32 %v2017, %v2039
    %2041 = vmatmul.f32.gmra.mxu0 %v1994
    %v2042 = vpop.f32.mrf.mxu0
    %v2043 = vadd.f32 %v2020, %v2042
    %2044 = vdwg.mxu0
    %2045 = vmatpush.msra.mxu0 %v1948
    %2046 = vmatpush.msra.mxu0 %v1946
    %2047 = vmatpush.msra.mxu0 %v1944
    %2048 = vmatpush.msra.mxu0 %v1942
    %2049 = vmatpush.msra.mxu0 %v1940
    %2050 = vmatpush.msra.mxu0 %v1938
    %2051 = vmatpush.msra.mxu0 %v1936
    %2052 = vmatpush.msra.mxu0 %v1934
    %2053 = vmatpush.msra.mxu0 %v1932
    %2054 = vmatpush.msra.mxu0 %v1930
    %2055 = vmatpush.msra.mxu0 %v1928
    %2056 = vmatpush.msra.mxu0 %v1926
    %2057 = vmatpush.msra.mxu0 %v1924
    %2058 = vmatpush.msra.mxu0 %v1922
    %2059 = vmatpush.msra.mxu0 %v1920
    %2060 = vmatpush.msra.mxu0 %v1918
    %2061 = vmatmul.f32.gmra.mxu0 %v1987
    %v2062 = vpop.f32.mrf.mxu0
    %v2063 = vadd.f32 0.0, %v2062
    %2064 = vmatmul.f32.gmra.mxu0 %v1992
    %v2065 = vpop.f32.mrf.mxu0
    %v2066 = vadd.f32 0.0, %v2065
    %2067 = vdwg.mxu0
    %2068 = vmatpush.msra.mxu0 %v1980
    %2069 = vmatpush.msra.mxu0 %v1978
    %2070 = vmatpush.msra.mxu0 %v1976
    %2071 = vmatpush.msra.mxu0 %v1974
    %2072 = vmatpush.msra.mxu0 %v1972
    %2073 = vmatpush.msra.mxu0 %v1970
    %2074 = vmatpush.msra.mxu0 %v1968
    %2075 = vmatpush.msra.mxu0 %v1966
    %2076 = vmatpush.msra.mxu0 %v1964
    %2077 = vmatpush.msra.mxu0 %v1962
    %2078 = vmatpush.msra.mxu0 %v1960
    %2079 = vmatpush.msra.mxu0 %v1958
    %2080 = vmatpush.msra.mxu0 %v1956
    %2081 = vmatpush.msra.mxu0 %v1954
    %2082 = vmatpush.msra.mxu0 %v1952
    %2083 = vmatpush.msra.mxu0 %v1950
    %2084 = vmatmul.f32.gmra.mxu0 %v1990
    %v2085 = vpop.f32.mrf.mxu0
    %v2086 = vadd.f32 %v2063, %v2085
    %2087 = vmatmul.f32.gmra.mxu0 %v1994
    %v2088 = vpop.f32.mrf.mxu0
    %v2089 = vadd.f32 %v2066, %v2088
    %2090 = vdwg.mxu0
    %2091 = vmatpush.msra.mxu0 %v1878
    %2092 = vmatpush.msra.mxu0 %v1876
    %2093 = vmatpush.msra.mxu0 %v1874
    %2094 = vmatpush.msra.mxu0 %v1872
    %2095 = vmatpush.msra.mxu0 %v1870
    %2096 = vmatpush.msra.mxu0 %v1868
    %2097 = vmatpush.msra.mxu0 %v1866
    %2098 = vmatpush.msra.mxu0 %v1864
    %2099 = vmatpush.msra.mxu0 %v1862
    %2100 = vmatpush.msra.mxu0 %v1860
    %2101 = vmatpush.msra.mxu0 %v1858
    %2102 = vmatpush.msra.mxu0 %v1856
    %2103 = vmatpush.msra.mxu0 %v1854
    %2104 = vmatpush.msra.mxu0 %v1852
    %2105 = vmatpush.msra.mxu0 %v1850
    %2106 = vmatpush.msra.mxu0 %v1848
    %2107 = vmatmul.f32.gmra.mxu0 %v1642
    %v2108 = vpop.f32.mrf.mxu0
    %v2109 = vadd.f32 %v2040, %v2108
    %2110 = vmatmul.f32.gmra.mxu0 %v1647
    %v2111 = vpop.f32.mrf.mxu0
    %v2112 = vadd.f32 %v2043, %v2111
    %2113 = vdwg.mxu0
    %2114 = vmatpush.msra.mxu0 %v1910
    %2115 = vmatpush.msra.mxu0 %v1908
    %2116 = vmatpush.msra.mxu0 %v1906
    %2117 = vmatpush.msra.mxu0 %v1904
    %2118 = vmatpush.msra.mxu0 %v1902
    %2119 = vmatpush.msra.mxu0 %v1900
    %2120 = vmatpush.msra.mxu0 %v1898
    %2121 = vmatpush.msra.mxu0 %v1896
    %2122 = vmatpush.msra.mxu0 %v1894
    %2123 = vmatpush.msra.mxu0 %v1892
    %2124 = vmatpush.msra.mxu0 %v1890
    %2125 = vmatpush.msra.mxu0 %v1888
    %2126 = vmatpush.msra.mxu0 %v1886
    %2127 = vmatpush.msra.mxu0 %v1884
    %2128 = vmatpush.msra.mxu0 %v1882
    %2129 = vmatpush.msra.mxu0 %v1880
    %2130 = vmatmul.f32.gmra.mxu0 %v1645
    %v2131 = vpop.f32.mrf.mxu0
    %v2132 = vadd.f32 %v2109, %v2131
    %2133 = vmatmul.f32.gmra.mxu0 %v1649
    %v2134 = vpop.f32.mrf.mxu0
    %v2135 = vadd.f32 %v2112, %v2134
    %2136 = vdwg.mxu0
    %2137 = vmatpush.msra.mxu0 %v1879
    %2138 = vmatpush.msra.mxu0 %v1877
    %2139 = vmatpush.msra.mxu0 %v1875
    %2140 = vmatpush.msra.mxu0 %v1873
    %2141 = vmatpush.msra.mxu0 %v1871
    %2142 = vmatpush.msra.mxu0 %v1869
    %2143 = vmatpush.msra.mxu0 %v1867
    %2144 = vmatpush.msra.mxu0 %v1865
    %2145 = vmatpush.msra.mxu0 %v1863
    %2146 = vmatpush.msra.mxu0 %v1861
    %2147 = vmatpush.msra.mxu0 %v1859
    %2148 = vmatpush.msra.mxu0 %v1857
    %2149 = vmatpush.msra.mxu0 %v1855
    %2150 = vmatpush.msra.mxu0 %v1853
    %2151 = vmatpush.msra.mxu0 %v1851
    %2152 = vmatpush.msra.mxu0 %v1849
    %2153 = vmatmul.f32.gmra.mxu0 %v1642
    %v2154 = vpop.f32.mrf.mxu0
    %v2155 = vadd.f32 %v2086, %v2154
    %2156 = vmatmul.f32.gmra.mxu0 %v1647
    %v2157 = vpop.f32.mrf.mxu0
    %v2158 = vadd.f32 %v2089, %v2157
    %2159 = vdwg.mxu0
    %2160 = vmatpush.msra.mxu0 %v1911
    %2161 = vmatpush.msra.mxu0 %v1909
    %2162 = vmatpush.msra.mxu0 %v1907
    %2163 = vmatpush.msra.mxu0 %v1905
    %2164 = vmatpush.msra.mxu0 %v1903
    %2165 = vmatpush.msra.mxu0 %v1901
    %2166 = vmatpush.msra.mxu0 %v1899
    %2167 = vmatpush.msra.mxu0 %v1897
    %2168 = vmatpush.msra.mxu0 %v1895
    %2169 = vmatpush.msra.mxu0 %v1893
    %2170 = vmatpush.msra.mxu0 %v1891
    %2171 = vmatpush.msra.mxu0 %v1889
    %2172 = vmatpush.msra.mxu0 %v1887
    %2173 = vmatpush.msra.mxu0 %v1885
    %2174 = vmatpush.msra.mxu0 %v1883
    %2175 = vmatpush.msra.mxu0 %v1881
    %2176 = vmatmul.f32.gmra.mxu0 %v1645
    %v2177 = vpop.f32.mrf.mxu0
    %v2178 = vadd.f32 %v2155, %v2177
    %2179 = vmatmul.f32.gmra.mxu0 %v1649
    %v2180 = vpop.f32.mrf.mxu0
    %v2181 = vadd.f32 %v2158, %v2180
    %2182 = vdwg.mxu0
    %v2183 = vadd.f32 %v2132, %v1839
    %v2184 = vadd.f32 %v2178, %v1840
    %v2185 = vadd.f32 %v2135, %v1839
    %v2186 = vadd.f32 %v2181, %v1840
    %v2187 = vld [vmem:[%s10] sm:$0x3]
    %v2188 = vld [vmem:[%s11] sm:$0x3]
    %v2189 = vmax.f32 %v1843, 0.0
    %v2190 = vmax.f32 %v1844, 0.0
    %v2191 = vmax.f32 %v1845, 0.0
    %v2192 = vmax.f32 %v1846, 0.0
    %v2193 = vmax.f32 %v2183, 0.0
    %v2194 = vmax.f32 %v2184, 0.0
    %v2195 = vmax.f32 %v2185, 0.0
    %v2196 = vmax.f32 %v2186, 0.0
    %v2197 = vadd.f32 %v2189, %v2191
    %v2198 = vrot.slane %v2197, 4
    %v2199 = vadd.f32 %v2197, %v2198
    %v2200 = vrot.slane %v2199, 2
    %v2201 = vadd.f32 %v2199, %v2200
    %v2202 = vrot.slane %v2201, 1
    %v2203 = vadd.f32 %v2201, %v2202
    %v2204 = vadd.f32 %v2190, %v2192
    %v2205 = vrot.slane %v2204, 4
    %v2206 = vadd.f32 %v2204, %v2205
    %v2207 = vrot.slane %v2206, 2
    %v2208 = vadd.f32 %v2206, %v2207
    %v2209 = vrot.slane %v2208, 1
    %v2210 = vadd.f32 %v2208, %v2209
    %v2211 = vadd.f32 %v2193, %v2195
    %v2212 = vrot.slane %v2211, 4
    %v2213 = vadd.f32 %v2211, %v2212
    %v2214 = vrot.slane %v2213, 2
    %v2215 = vadd.f32 %v2213, %v2214
    %v2216 = vrot.slane %v2215, 1
    %v2217 = vadd.f32 %v2215, %v2216
    %v2218 = vadd.f32 %v2194, %v2196
    %v2219 = vrot.slane %v2218, 4
    %v2220 = vadd.f32 %v2218, %v2219
    %v2221 = vrot.slane %v2220, 2
    %v2222 = vadd.f32 %v2220, %v2221
    %v2223 = vrot.slane %v2222, 1
    %v2224 = vadd.f32 %v2222, %v2223
    %v2225 = vadd.f32 %v2203, %v2217
    %v2226 = vadd.f32 %v2210, %v2224
    %2228 = vrot.lane.b32.xlu0 %v2225, 112
    %v2229 = vpop.permute.xlu0 %2228
    %v2231 = vadd.f32 %v2225, %v2229
    %2232 = vrot.lane.b32.xlu0 %v2225, 96
    %v2233 = vpop.permute.xlu0 %2232
    %v2235 = vadd.f32 %v2231, %v2233
    %2236 = vrot.lane.b32.xlu0 %v2225, 80
    %v2237 = vpop.permute.xlu0 %2236
    %v2239 = vadd.f32 %v2235, %v2237
    %2240 = vrot.lane.b32.xlu0 %v2225, 64
    %v2241 = vpop.permute.xlu0 %2240
    %v2243 = vadd.f32 %v2239, %v2241
    %2244 = vrot.lane.b32.xlu0 %v2225, 48
    %v2245 = vpop.permute.xlu0 %2244
    %v2247 = vadd.f32 %v2243, %v2245
    %2248 = vrot.lane.b32.xlu0 %v2225, 32
    %v2249 = vpop.permute.xlu0 %2248
    %v2251 = vadd.f32 %v2247, %v2249
    %2252 = vrot.lane.b32.xlu0 %v2225, 16
    %v2253 = vpop.permute.xlu0 %2252
    %v2255 = vadd.f32 %v2251, %v2253
    %v2256 = vadd.f32 %v2255, %v2226
    %2258 = vrot.lane.b32.xlu0 %v2226, 112
    %v2259 = vpop.permute.xlu0 %2258
    %v2261 = vadd.f32 %v2256, %v2259
    %2262 = vrot.lane.b32.xlu0 %v2226, 96
    %v2263 = vpop.permute.xlu0 %2262
    %v2265 = vadd.f32 %v2261, %v2263
    %2266 = vrot.lane.b32.xlu0 %v2226, 80
    %v2267 = vpop.permute.xlu0 %2266
    %v2269 = vadd.f32 %v2265, %v2267
    %2270 = vrot.lane.b32.xlu0 %v2226, 64
    %v2271 = vpop.permute.xlu0 %2270
    %v2273 = vadd.f32 %v2269, %v2271
    %2274 = vrot.lane.b32.xlu0 %v2226, 48
    %v2275 = vpop.permute.xlu0 %2274
    %v2277 = vadd.f32 %v2273, %v2275
    %2278 = vrot.lane.b32.xlu0 %v2226, 32
    %v2279 = vpop.permute.xlu0 %2278
    %v2281 = vadd.f32 %v2277, %v2279
    %2282 = vrot.lane.b32.xlu0 %v2226, 16
    %v2283 = vpop.permute.xlu0 %2282
    %v2285 = vadd.f32 %v2281, %v2283
    %v2286 = vrcp.pop 512.0
    %v2287 = vmul.f32 512.0, %v2286
    %v2288 = vsub.f32 1.0, %v2287
    %v2289 = vmul.f32 %v2286, %v2288
    %v2290 = vadd.f32 %v2286, %v2289
    %vm2291 = vweird.f32 %v2286
    %v2292 = vsel %vm2291, %v2286, %v2290
    %v2293 = vmul.f32 %v2285, %v2292
    %2295 = vrot.lane.b32.xlu0 %v2293, 16
    %v2296 = vpop.permute.xlu0 %2295
    %2298 = vrot.lane.b32.xlu0 %v2293, 32
    %v2299 = vpop.permute.xlu0 %2298
    %2301 = vrot.lane.b32.xlu0 %v2293, 48
    %v2302 = vpop.permute.xlu0 %2301
    %2304 = vrot.lane.b32.xlu0 %v2293, 64
    %v2305 = vpop.permute.xlu0 %2304
    %2307 = vrot.lane.b32.xlu0 %v2293, 80
    %v2308 = vpop.permute.xlu0 %2307
    %2310 = vrot.lane.b32.xlu0 %v2293, 96
    %v2311 = vpop.permute.xlu0 %2310
    %2313 = vrot.lane.b32.xlu0 %v2293, 112
    %v2314 = vpop.permute.xlu0 %2313
    %vm2316 = vcmask 130048
    %v2317 = vsel %vm2316, %v2293, %v2296
    %v2318 = vsel %vm122, %v2317, %v2299
    %vm2319 = vcmask 392192
    %v2320 = vsel %vm2319, %v2318, %v2302
    %v2321 = vsel %vm412, %v2320, %v2305
    %vm2322 = vcmask 654336
    %v2323 = vsel %vm2322, %v2321, %v2308
    %v2324 = vsel %vm1340, %v2323, %v2311
    %vm2325 = vcmask 916480
    %v2326 = vsel %vm2325, %v2324, %v2314
    %v2327 = vperm.slane %v2326, 0
    %v2328 = vsub.f32 %v2189, %v2327
    %v2329 = vsub.f32 %v2190, %v2327
    %v2330 = vsub.f32 %v2191, %v2327
    %v2331 = vsub.f32 %v2192, %v2327
    %v2332 = vmul.f32 %v2328, %v2328
    %v2333 = vmul.f32 %v2329, %v2329
    %v2334 = vmul.f32 %v2330, %v2330
    %v2335 = vmul.f32 %v2331, %v2331
    %v2336 = vadd.f32 %v2332, %v2334
    %v2337 = vrot.slane %v2336, 4
    %v2338 = vadd.f32 %v2336, %v2337
    %v2339 = vrot.slane %v2338, 2
    %v2340 = vadd.f32 %v2338, %v2339
    %v2341 = vrot.slane %v2340, 1
    %v2342 = vadd.f32 %v2340, %v2341
    %v2343 = vadd.f32 %v2333, %v2335
    %v2344 = vrot.slane %v2343, 4
    %v2345 = vadd.f32 %v2343, %v2344
    %v2346 = vrot.slane %v2345, 2
    %v2347 = vadd.f32 %v2345, %v2346
    %v2348 = vrot.slane %v2347, 1
    %v2349 = vadd.f32 %v2347, %v2348
    %v2350 = vsub.f32 %v2193, %v2327
    %v2351 = vsub.f32 %v2194, %v2327
    %v2352 = vsub.f32 %v2195, %v2327
    %v2353 = vsub.f32 %v2196, %v2327
    %v2354 = vmul.f32 %v2350, %v2350
    %v2355 = vmul.f32 %v2351, %v2351
    %v2356 = vmul.f32 %v2352, %v2352
    %v2357 = vmul.f32 %v2353, %v2353
    %v2358 = vadd.f32 %v2354, %v2356
    %v2359 = vrot.slane %v2358, 4
    %v2360 = vadd.f32 %v2358, %v2359
    %v2361 = vrot.slane %v2360, 2
    %v2362 = vadd.f32 %v2360, %v2361
    %v2363 = vrot.slane %v2362, 1
    %v2364 = vadd.f32 %v2362, %v2363
    %v2365 = vadd.f32 %v2355, %v2357
    %v2366 = vrot.slane %v2365, 4
    %v2367 = vadd.f32 %v2365, %v2366
    %v2368 = vrot.slane %v2367, 2
    %v2369 = vadd.f32 %v2367, %v2368
    %v2370 = vrot.slane %v2369, 1
    %v2371 = vadd.f32 %v2369, %v2370
    %v2372 = vadd.f32 %v2342, %v2364
    %v2373 = vadd.f32 %v2349, %v2371
    %2375 = vrot.lane.b32.xlu0 %v2372, 112
    %v2376 = vpop.permute.xlu0 %2375
    %v2378 = vadd.f32 %v2372, %v2376
    %2379 = vrot.lane.b32.xlu0 %v2372, 96
    %v2380 = vpop.permute.xlu0 %2379
    %v2382 = vadd.f32 %v2378, %v2380
    %2383 = vrot.lane.b32.xlu0 %v2372, 80
    %v2384 = vpop.permute.xlu0 %2383
    %v2386 = vadd.f32 %v2382, %v2384
    %2387 = vrot.lane.b32.xlu0 %v2372, 64
    %v2388 = vpop.permute.xlu0 %2387
    %v2390 = vadd.f32 %v2386, %v2388
    %2391 = vrot.lane.b32.xlu0 %v2372, 48
    %v2392 = vpop.permute.xlu0 %2391
    %v2394 = vadd.f32 %v2390, %v2392
    %2395 = vrot.lane.b32.xlu0 %v2372, 32
    %v2396 = vpop.permute.xlu0 %2395
    %v2398 = vadd.f32 %v2394, %v2396
    %2399 = vrot.lane.b32.xlu0 %v2372, 16
    %v2400 = vpop.permute.xlu0 %2399
    %v2402 = vadd.f32 %v2398, %v2400
    %v2403 = vadd.f32 %v2402, %v2373
    %2405 = vrot.lane.b32.xlu0 %v2373, 112
    %v2406 = vpop.permute.xlu0 %2405
    %v2408 = vadd.f32 %v2403, %v2406
    %2409 = vrot.lane.b32.xlu0 %v2373, 96
    %v2410 = vpop.permute.xlu0 %2409
    %v2412 = vadd.f32 %v2408, %v2410
    %2413 = vrot.lane.b32.xlu0 %v2373, 80
    %v2414 = vpop.permute.xlu0 %2413
    %v2416 = vadd.f32 %v2412, %v2414
    %2417 = vrot.lane.b32.xlu0 %v2373, 64
    %v2418 = vpop.permute.xlu0 %2417
    %v2420 = vadd.f32 %v2416, %v2418
    %2421 = vrot.lane.b32.xlu0 %v2373, 48
    %v2422 = vpop.permute.xlu0 %2421
    %v2424 = vadd.f32 %v2420, %v2422
    %2425 = vrot.lane.b32.xlu0 %v2373, 32
    %v2426 = vpop.permute.xlu0 %2425
    %v2428 = vadd.f32 %v2424, %v2426
    %2429 = vrot.lane.b32.xlu0 %v2373, 16
    %v2430 = vpop.permute.xlu0 %2429
    %v2432 = vadd.f32 %v2428, %v2430
    %v2433 = vmul.f32 %v2432, %v2292
    %v2434 = vadd.f32 %v2433, 1e-05
    %v2435 = vrsqrt.pop %v2434
    %v2436 = vmul.f32 %v2435, %v2434
    %v2437 = vmul.f32 %v2436, %v2435
    %v2438 = vmul.f32 0.5, %v2437
    %v2439 = vsub.f32 1.5, %v2438
    %v2440 = vmul.f32 %v2435, %v2439
    %vm2441 = vweird.f32 %v2434
    %vm2442 = vweird.f32 %v2435
    %vm2443 = vmor %vm2441, %vm2442
    %v2444 = vsel %vm2443, %v2435, %v2440
    %2446 = vrot.lane.b32.xlu0 %v2444, 16
    %v2447 = vpop.permute.xlu0 %2446
    %2449 = vrot.lane.b32.xlu0 %v2444, 32
    %v2450 = vpop.permute.xlu0 %2449
    %2452 = vrot.lane.b32.xlu0 %v2444, 48
    %v2453 = vpop.permute.xlu0 %2452
    %2455 = vrot.lane.b32.xlu0 %v2444, 64
    %v2456 = vpop.permute.xlu0 %2455
    %2458 = vrot.lane.b32.xlu0 %v2444, 80
    %v2459 = vpop.permute.xlu0 %2458
    %2461 = vrot.lane.b32.xlu0 %v2444, 96
    %v2462 = vpop.permute.xlu0 %2461
    %2464 = vrot.lane.b32.xlu0 %v2444, 112
    %v2465 = vpop.permute.xlu0 %2464
    %v2467 = vsel %vm2316, %v2444, %v2447
    %v2468 = vsel %vm122, %v2467, %v2450
    %v2469 = vsel %vm2319, %v2468, %v2453
    %v2470 = vsel %vm412, %v2469, %v2456
    %v2471 = vsel %vm2322, %v2470, %v2459
    %v2472 = vsel %vm1340, %v2471, %v2462
    %v2473 = vsel %vm2325, %v2472, %v2465
    %v2474 = vperm.slane %v2473, 0
    %v2475 = vmul.f32 %v2328, %v2474
    %v2476 = vmul.f32 %v2329, %v2474
    %v2477 = vmul.f32 %v2330, %v2474
    %v2478 = vmul.f32 %v2331, %v2474
    %v2480 = vperm.slane %v2187, 0
    %v2481 = vperm.slane %v2187, 1
    %v2484 = vmul.f32 %v2475, %v2480
    %v2485 = vmul.f32 %v2476, %v2481
    %v2486 = vmul.f32 %v2477, %v2480
    %v2487 = vmul.f32 %v2478, %v2481
    %v2489 = vperm.slane %v2188, 0
    %v2490 = vperm.slane %v2188, 1
    %v2493 = vadd.f32 %v2484, %v2489
    %v2494 = vadd.f32 %v2485, %v2490
    %v2495 = vadd.f32 %v2486, %v2489
    %v2496 = vadd.f32 %v2487, %v2490
    %v2497 = vmul.f32 %v2350, %v2474
    %v2498 = vmul.f32 %v2351, %v2474
    %v2499 = vmul.f32 %v2352, %v2474
    %v2500 = vmul.f32 %v2353, %v2474
    %v2501 = vmul.f32 %v2497, %v2480
    %v2502 = vmul.f32 %v2498, %v2481
    %v2503 = vmul.f32 %v2499, %v2480
    %v2504 = vmul.f32 %v2500, %v2481
    %v2505 = vadd.f32 %v2501, %v2489
    %v2506 = vadd.f32 %v2502, %v2490
    %v2507 = vadd.f32 %v2503, %v2489
    %v2508 = vadd.f32 %v2504, %v2490
    %2509 = vst [vmem:[#allocation4] sm:$0x3] %v2493
    %2510 = vst [vmem:[#allocation4 + $0x8] sm:$0x3] %v2494
    %v2513 = vrot.slane %v2493, 6
    %v2514 = vrot.slane %v2494, 6
    %2517 = vst [vmem:[#allocation4] sm:$0x30] %v2513
    %2518 = vst [vmem:[#allocation4 + $0x8] sm:$0x30] %v2514
    %v2519 = vrot.slane %v2493, 4
    %v2520 = vrot.slane %v2494, 4
    %2523 = vst [vmem:[#allocation4 + $0x10] sm:$0x3] %v2519
    %2524 = vst [vmem:[#allocation4 + $0x18] sm:$0x3] %v2520
    %v2525 = vrot.slane %v2493, 2
    %v2526 = vrot.slane %v2494, 2
    %2529 = vst [vmem:[#allocation4 + $0x10] sm:$0x30] %v2525
    %2530 = vst [vmem:[#allocation4 + $0x18] sm:$0x30] %v2526
    %2531 = vst [vmem:[#allocation4 + $0x20] sm:$0x3] %v2495
    %2532 = vst [vmem:[#allocation4 + $0x28] sm:$0x3] %v2496
    %v2535 = vrot.slane %v2495, 6
    %v2536 = vrot.slane %v2496, 6
    %2539 = vst [vmem:[#allocation4 + $0x20] sm:$0x30] %v2535
    %2540 = vst [vmem:[#allocation4 + $0x28] sm:$0x30] %v2536
    %v2541 = vrot.slane %v2495, 4
    %v2542 = vrot.slane %v2496, 4
    %2545 = vst [vmem:[#allocation4 + $0x30] sm:$0x3] %v2541
    %2546 = vst [vmem:[#allocation4 + $0x38] sm:$0x3] %v2542
    %v2547 = vrot.slane %v2495, 2
    %v2548 = vrot.slane %v2496, 2
    %2551 = vst [vmem:[#allocation4 + $0x30] sm:$0x30] %v2547
    %2552 = vst [vmem:[#allocation4 + $0x38] sm:$0x30] %v2548
    %v2555 = vrot.slane %v2505, 6
    %v2556 = vrot.slane %v2506, 6
    %2559 = vst [vmem:[#allocation4] sm:$0xc] %v2555
    %2560 = vst [vmem:[#allocation4 + $0x8] sm:$0xc] %v2556
    %v2561 = vrot.slane %v2505, 4
    %v2562 = vrot.slane %v2506, 4
    %2565 = vst [vmem:[#allocation4] sm:$0xc0] %v2561
    %2566 = vst [vmem:[#allocation4 + $0x8] sm:$0xc0] %v2562
    %v2567 = vrot.slane %v2505, 2
    %v2568 = vrot.slane %v2506, 2
    %2571 = vst [vmem:[#allocation4 + $0x10] sm:$0xc] %v2567
    %2572 = vst [vmem:[#allocation4 + $0x18] sm:$0xc] %v2568
    %2573 = vst [vmem:[#allocation4 + $0x10] sm:$0xc0] %v2505
    %2574 = vst [vmem:[#allocation4 + $0x18] sm:$0xc0] %v2506
    %v2577 = vrot.slane %v2507, 6
    %v2578 = vrot.slane %v2508, 6
    %2581 = vst [vmem:[#allocation4 + $0x20] sm:$0xc] %v2577
    %2582 = vst [vmem:[#allocation4 + $0x28] sm:$0xc] %v2578
    %v2583 = vrot.slane %v2507, 4
    %v2584 = vrot.slane %v2508, 4
    %2587 = vst [vmem:[#allocation4 + $0x20] sm:$0xc0] %v2583
    %2588 = vst [vmem:[#allocation4 + $0x28] sm:$0xc0] %v2584
    %v2589 = vrot.slane %v2507, 2
    %v2590 = vrot.slane %v2508, 2
    %2593 = vst [vmem:[#allocation4 + $0x30] sm:$0xc] %v2589
    %2594 = vst [vmem:[#allocation4 + $0x38] sm:$0xc] %v2590
    %2595 = vst [vmem:[#allocation4 + $0x30] sm:$0xc0] %v2507
    %2596 = vst [vmem:[#allocation4 + $0x38] sm:$0xc0] %v2508
    %v2597 = vld [vmem:[%s13] sm:$0x1]
    %v2598 = vld [vmem:[#allocation4] sm:$0xff]
    %v2599 = vld [vmem:[#allocation4 + $0x8] sm:$0xff]
    %v2600 = vld [vmem:[#allocation4 + $0x10] sm:$0xff]
    %v2601 = vld [vmem:[#allocation4 + $0x18] sm:$0xff]
    %v2602 = vld [vmem:[#allocation4 + $0x20] sm:$0xff]
    %v2603 = vld [vmem:[#allocation4 + $0x28] sm:$0xff]
    %v2604 = vld [vmem:[#allocation4 + $0x30] sm:$0xf]
    %v2605 = vld [vmem:[#allocation4 + $0x38] sm:$0xf]
    %v2606 = vld [vmem:[%s12] sm:$0xff]
    %v2607 = vld [vmem:[%s12 + $0x8] sm:$0xff]
    %v2608 = vld [vmem:[%s12 + $0x10] sm:$0xff]
    %v2609 = vld [vmem:[%s12 + $0x18] sm:$0xff]
    %v2610 = vld [vmem:[%s12 + $0x20] sm:$0xff]
    %v2611 = vld [vmem:[%s12 + $0x28] sm:$0xff]
    %v2612 = vld [vmem:[%s12 + $0x30] sm:$0xff]
    %v2613 = vld [vmem:[%s12 + $0x38] sm:$0xff]
    %v2614 = vld [vmem:[%s12 + $0x40] sm:$0xff]
    %v2615 = vld [vmem:[%s12 + $0x48] sm:$0xff]
    %v2616 = vld [vmem:[%s12 + $0x50] sm:$0xff]
    %v2617 = vld [vmem:[%s12 + $0x58] sm:$0xff]
    %v2618 = vld [vmem:[%s12 + $0x60] sm:$0xff]
    %v2619 = vld [vmem:[%s12 + $0x68] sm:$0xff]
    %v2620 = vld [vmem:[%s12 + $0x70] sm:$0xff]
    %v2621 = vld [vmem:[%s12 + $0x78] sm:$0xff]
    %v2622 = vld [vmem:[%s12 + $0x80] sm:$0xff]
    %v2623 = vld [vmem:[%s12 + $0x88] sm:$0xff]
    %v2624 = vld [vmem:[%s12 + $0x90] sm:$0xff]
    %v2625 = vld [vmem:[%s12 + $0x98] sm:$0xff]
    %v2626 = vld [vmem:[%s12 + $0xa0] sm:$0xff]
    %v2627 = vld [vmem:[%s12 + $0xa8] sm:$0xff]
    %v2628 = vld [vmem:[%s12 + $0xb0] sm:$0xff]
    %v2629 = vld [vmem:[%s12 + $0xb8] sm:$0xff]
    %v2630 = vld [vmem:[%s12 + $0xc0] sm:$0xff]
    %v2631 = vld [vmem:[%s12 + $0xc8] sm:$0xff]
    %v2632 = vld [vmem:[%s12 + $0xd0] sm:$0xff]
    %v2633 = vld [vmem:[%s12 + $0xd8] sm:$0xff]
    %v2634 = vld [vmem:[%s12 + $0xe0] sm:$0xff]
    %v2635 = vld [vmem:[%s12 + $0xe8] sm:$0xff]
    %v2636 = vld [vmem:[%s12 + $0xf0] sm:$0xff]
    %v2637 = vld [vmem:[%s12 + $0xf8] sm:$0xff]
    %v2638 = vld [vmem:[#allocation4] sm:$0xfc]
    %v2639 = vld [vmem:[#allocation4 + $0x8] sm:$0xfc]
    %v2640 = vld [vmem:[#allocation4 + $0x30] sm:$0x3f]
    %v2641 = vld [vmem:[#allocation4 + $0x38] sm:$0x3f]
    %s2642 = scalar_lea.vmem %s12, 256
    %v2643 = vld [vmem:[%s2642] sm:$0xff]
    %v2644 = vld [vmem:[%s2642 + $0x8] sm:$0xff]
    %v2645 = vld [vmem:[%s2642 + $0x10] sm:$0xff]
    %v2646 = vld [vmem:[%s2642 + $0x18] sm:$0xff]
    %v2647 = vld [vmem:[%s2642 + $0x20] sm:$0xff]
    %v2648 = vld [vmem:[%s2642 + $0x28] sm:$0xff]
    %v2649 = vld [vmem:[%s2642 + $0x30] sm:$0xff]
    %v2650 = vld [vmem:[%s2642 + $0x38] sm:$0xff]
    %v2651 = vld [vmem:[%s2642 + $0x40] sm:$0xff]
    %v2652 = vld [vmem:[%s2642 + $0x48] sm:$0xff]
    %v2653 = vld [vmem:[%s2642 + $0x50] sm:$0xff]
    %v2654 = vld [vmem:[%s2642 + $0x58] sm:$0xff]
    %v2655 = vld [vmem:[%s2642 + $0x60] sm:$0xff]
    %v2656 = vld [vmem:[%s2642 + $0x68] sm:$0xff]
    %v2657 = vld [vmem:[%s2642 + $0x70] sm:$0xff]
    %v2658 = vld [vmem:[%s2642 + $0x78] sm:$0xff]
    %v2659 = vld [vmem:[%s2642 + $0x80] sm:$0xff]
    %v2660 = vld [vmem:[%s2642 + $0x88] sm:$0xff]
    %v2661 = vld [vmem:[%s2642 + $0x90] sm:$0xff]
    %v2662 = vld [vmem:[%s2642 + $0x98] sm:$0xff]
    %v2663 = vld [vmem:[%s2642 + $0xa0] sm:$0xff]
    %v2664 = vld [vmem:[%s2642 + $0xa8] sm:$0xff]
    %v2665 = vld [vmem:[%s2642 + $0xb0] sm:$0xff]
    %v2666 = vld [vmem:[%s2642 + $0xb8] sm:$0xff]
    %v2667 = vld [vmem:[%s2642 + $0xc0] sm:$0xff]
    %v2668 = vld [vmem:[%s2642 + $0xc8] sm:$0xff]
    %v2669 = vld [vmem:[%s2642 + $0xd0] sm:$0xff]
    %v2670 = vld [vmem:[%s2642 + $0xd8] sm:$0xff]
    %v2671 = vld [vmem:[%s2642 + $0xe0] sm:$0xff]
    %v2672 = vld [vmem:[%s2642 + $0xe8] sm:$0xff]
    %v2673 = vld [vmem:[%s2642 + $0xf0] sm:$0xff]
    %v2674 = vld [vmem:[%s2642 + $0xf8] sm:$0xff]
    %v2683 = vrot.slane %v2638, 2
    %v2684 = vrot.slane %v2600, 2
    %v2685 = vsel %vm776, %v2683, %v2684
    %v2686 = vrot.slane %v2639, 2
    %v2687 = vrot.slane %v2601, 2
    %v2688 = vsel %vm776, %v2686, %v2687
    %v2689 = vrot.slane %v2602, 2
    %v2690 = vsel %vm776, %v2684, %v2689
    %v2691 = vrot.slane %v2603, 2
    %v2692 = vsel %vm776, %v2687, %v2691
    %v2693 = vrot.slane %v2640, 2
    %v2694 = vsel %vm776, %v2689, %v2693
    %v2695 = vrot.slane %v2641, 2
    %v2696 = vsel %vm776, %v2691, %v2695
    %2705 = vmatpush.msra.mxu0 %v2658
    %2706 = vmatpush.msra.mxu0 %v2657
    %2707 = vmatpush.msra.mxu0 %v2656
    %2708 = vmatpush.msra.mxu0 %v2655
    %2709 = vmatpush.msra.mxu0 %v2654
    %2710 = vmatpush.msra.mxu0 %v2653
    %2711 = vmatpush.msra.mxu0 %v2652
    %2712 = vmatpush.msra.mxu0 %v2651
    %2713 = vmatpush.msra.mxu0 %v2650
    %2714 = vmatpush.msra.mxu0 %v2649
    %2715 = vmatpush.msra.mxu0 %v2648
    %2716 = vmatpush.msra.mxu0 %v2647
    %2717 = vmatpush.msra.mxu0 %v2646
    %2718 = vmatpush.msra.mxu0 %v2645
    %2719 = vmatpush.msra.mxu0 %v2644
    %2720 = vmatpush.msra.mxu0 %v2643
    %2721 = vmatmul.f32.gmra.mxu0 %v2685
    %v2722 = vpop.f32.mrf.mxu0
    %v2723 = vadd.f32 0.0, %v2722
    %2724 = vmatmul.f32.gmra.mxu0 %v2690
    %v2725 = vpop.f32.mrf.mxu0
    %v2726 = vadd.f32 0.0, %v2725
    %2727 = vmatmul.f32.gmra.mxu0 %v2694
    %v2728 = vpop.f32.mrf.mxu0
    %v2729 = vadd.f32 0.0, %v2728
    %2730 = vmatmul.f32.gmra.mxu0 %v2693
    %v2731 = vpop.f32.mrf.mxu0
    %v2732 = vadd.f32 0.0, %v2731
    %2733 = vdwg.mxu0
    %2734 = vmatpush.msra.mxu0 %v2674
    %2735 = vmatpush.msra.mxu0 %v2673
    %2736 = vmatpush.msra.mxu0 %v2672
    %2737 = vmatpush.msra.mxu0 %v2671
    %2738 = vmatpush.msra.mxu0 %v2670
    %2739 = vmatpush.msra.mxu0 %v2669
    %2740 = vmatpush.msra.mxu0 %v2668
    %2741 = vmatpush.msra.mxu0 %v2667
    %2742 = vmatpush.msra.mxu0 %v2666
    %2743 = vmatpush.msra.mxu0 %v2665
    %2744 = vmatpush.msra.mxu0 %v2664
    %2745 = vmatpush.msra.mxu0 %v2663
    %2746 = vmatpush.msra.mxu0 %v2662
    %2747 = vmatpush.msra.mxu0 %v2661
    %2748 = vmatpush.msra.mxu0 %v2660
    %2749 = vmatpush.msra.mxu0 %v2659
    %2750 = vmatmul.f32.gmra.mxu0 %v2688
    %v2751 = vpop.f32.mrf.mxu0
    %v2752 = vadd.f32 %v2723, %v2751
    %2753 = vmatmul.f32.gmra.mxu0 %v2692
    %v2754 = vpop.f32.mrf.mxu0
    %v2755 = vadd.f32 %v2726, %v2754
    %2756 = vmatmul.f32.gmra.mxu0 %v2696
    %v2757 = vpop.f32.mrf.mxu0
    %v2758 = vadd.f32 %v2729, %v2757
    %2759 = vmatmul.f32.gmra.mxu0 %v2695
    %v2760 = vpop.f32.mrf.mxu0
    %v2761 = vadd.f32 %v2732, %v2760
    %2762 = vdwg.mxu0
    %2763 = vmatpush.msra.mxu0 %v2621
    %2764 = vmatpush.msra.mxu0 %v2620
    %2765 = vmatpush.msra.mxu0 %v2619
    %2766 = vmatpush.msra.mxu0 %v2618
    %2767 = vmatpush.msra.mxu0 %v2617
    %2768 = vmatpush.msra.mxu0 %v2616
    %2769 = vmatpush.msra.mxu0 %v2615
    %2770 = vmatpush.msra.mxu0 %v2614
    %2771 = vmatpush.msra.mxu0 %v2613
    %2772 = vmatpush.msra.mxu0 %v2612
    %2773 = vmatpush.msra.mxu0 %v2611
    %2774 = vmatpush.msra.mxu0 %v2610
    %2775 = vmatpush.msra.mxu0 %v2609
    %2776 = vmatpush.msra.mxu0 %v2608
    %2777 = vmatpush.msra.mxu0 %v2607
    %2778 = vmatpush.msra.mxu0 %v2606
    %2779 = vmatmul.f32.gmra.mxu0 %v2598
    %v2780 = vpop.f32.mrf.mxu0
    %v2781 = vadd.f32 %v2752, %v2780
    %2782 = vmatmul.f32.gmra.mxu0 %v2600
    %v2783 = vpop.f32.mrf.mxu0
    %v2784 = vadd.f32 %v2755, %v2783
    %2785 = vmatmul.f32.gmra.mxu0 %v2602
    %v2786 = vpop.f32.mrf.mxu0
    %v2787 = vadd.f32 %v2758, %v2786
    %2788 = vmatmul.f32.gmra.mxu0 %v2604
    %v2789 = vpop.f32.mrf.mxu0
    %v2790 = vadd.f32 %v2761, %v2789
    %2791 = vdwg.mxu0
    %2792 = vmatpush.msra.mxu0 %v2637
    %2793 = vmatpush.msra.mxu0 %v2636
    %2794 = vmatpush.msra.mxu0 %v2635
    %2795 = vmatpush.msra.mxu0 %v2634
    %2796 = vmatpush.msra.mxu0 %v2633
    %2797 = vmatpush.msra.mxu0 %v2632
    %2798 = vmatpush.msra.mxu0 %v2631
    %2799 = vmatpush.msra.mxu0 %v2630
    %2800 = vmatpush.msra.mxu0 %v2629
    %2801 = vmatpush.msra.mxu0 %v2628
    %2802 = vmatpush.msra.mxu0 %v2627
    %2803 = vmatpush.msra.mxu0 %v2626
    %2804 = vmatpush.msra.mxu0 %v2625
    %2805 = vmatpush.msra.mxu0 %v2624
    %2806 = vmatpush.msra.mxu0 %v2623
    %2807 = vmatpush.msra.mxu0 %v2622
    %2808 = vmatmul.f32.gmra.mxu0 %v2599
    %v2809 = vpop.f32.mrf.mxu0
    %v2810 = vadd.f32 %v2781, %v2809
    %2811 = vmatmul.f32.gmra.mxu0 %v2601
    %v2812 = vpop.f32.mrf.mxu0
    %v2813 = vadd.f32 %v2784, %v2812
    %2814 = vmatmul.f32.gmra.mxu0 %v2603
    %v2815 = vpop.f32.mrf.mxu0
    %v2816 = vadd.f32 %v2787, %v2815
    %2817 = vmatmul.f32.gmra.mxu0 %v2605
    %v2818 = vpop.f32.mrf.mxu0
    %v2819 = vadd.f32 %v2790, %v2818
    %2820 = vdwg.mxu0
    %v2822 = vperm.slane %v2597, 0
    %v2824 = vadd.f32 %v2810, %v2822
    %v2825 = vadd.f32 %v2813, %v2822
    %v2826 = vadd.f32 %v2816, %v2822
    %v2827 = vadd.f32 %v2819, %v2822
    %s2828 = scalar_lea.vmem %s12, 512
    %v2829 = vld [vmem:[%s2828] sm:$0xff]
    %v2830 = vld [vmem:[%s2828 + $0x8] sm:$0xff]
    %v2831 = vld [vmem:[%s2828 + $0x10] sm:$0xff]
    %v2832 = vld [vmem:[%s2828 + $0x18] sm:$0xff]
    %v2833 = vld [vmem:[%s2828 + $0x20] sm:$0xff]
    %v2834 = vld [vmem:[%s2828 + $0x28] sm:$0xff]
    %v2835 = vld [vmem:[%s2828 + $0x30] sm:$0xff]
    %v2836 = vld [vmem:[%s2828 + $0x38] sm:$0xff]
    %v2837 = vld [vmem:[%s2828 + $0x40] sm:$0xff]
    %v2838 = vld [vmem:[%s2828 + $0x48] sm:$0xff]
    %v2839 = vld [vmem:[%s2828 + $0x50] sm:$0xff]
    %v2840 = vld [vmem:[%s2828 + $0x58] sm:$0xff]
    %v2841 = vld [vmem:[%s2828 + $0x60] sm:$0xff]
    %v2842 = vld [vmem:[%s2828 + $0x68] sm:$0xff]
    %v2843 = vld [vmem:[%s2828 + $0x70] sm:$0xff]
    %v2844 = vld [vmem:[%s2828 + $0x78] sm:$0xff]
    %v2845 = vld [vmem:[%s2828 + $0x80] sm:$0xff]
    %v2846 = vld [vmem:[%s2828 + $0x88] sm:$0xff]
    %v2847 = vld [vmem:[%s2828 + $0x90] sm:$0xff]
    %v2848 = vld [vmem:[%s2828 + $0x98] sm:$0xff]
    %v2849 = vld [vmem:[%s2828 + $0xa0] sm:$0xff]
    %v2850 = vld [vmem:[%s2828 + $0xa8] sm:$0xff]
    %v2851 = vld [vmem:[%s2828 + $0xb0] sm:$0xff]
    %v2852 = vld [vmem:[%s2828 + $0xb8] sm:$0xff]
    %v2853 = vld [vmem:[%s2828 + $0xc0] sm:$0xff]
    %v2854 = vld [vmem:[%s2828 + $0xc8] sm:$0xff]
    %v2855 = vld [vmem:[%s2828 + $0xd0] sm:$0xff]
    %v2856 = vld [vmem:[%s2828 + $0xd8] sm:$0xff]
    %v2857 = vld [vmem:[%s2828 + $0xe0] sm:$0xff]
    %v2858 = vld [vmem:[%s2828 + $0xe8] sm:$0xff]
    %v2859 = vld [vmem:[%s2828 + $0xf0] sm:$0xff]
    %v2860 = vld [vmem:[%s2828 + $0xf8] sm:$0xff]
    %v2861 = vld [vmem:[#allocation4] sm:$0xf0]
    %v2862 = vld [vmem:[#allocation4 + $0x8] sm:$0xf0]
    %v2863 = vld [vmem:[#allocation4 + $0x30] sm:$0xff]
    %v2864 = vld [vmem:[#allocation4 + $0x38] sm:$0xff]
    %s2865 = scalar_lea.vmem %s12, 768
    %v2866 = vld [vmem:[%s2865] sm:$0xff]
    %v2867 = vld [vmem:[%s2865 + $0x8] sm:$0xff]
    %v2868 = vld [vmem:[%s2865 + $0x10] sm:$0xff]
    %v2869 = vld [vmem:[%s2865 + $0x18] sm:$0xff]
    %v2870 = vld [vmem:[%s2865 + $0x20] sm:$0xff]
    %v2871 = vld [vmem:[%s2865 + $0x28] sm:$0xff]
    %v2872 = vld [vmem:[%s2865 + $0x30] sm:$0xff]
    %v2873 = vld [vmem:[%s2865 + $0x38] sm:$0xff]
    %v2874 = vld [vmem:[%s2865 + $0x40] sm:$0xff]
    %v2875 = vld [vmem:[%s2865 + $0x48] sm:$0xff]
    %v2876 = vld [vmem:[%s2865 + $0x50] sm:$0xff]
    %v2877 = vld [vmem:[%s2865 + $0x58] sm:$0xff]
    %v2878 = vld [vmem:[%s2865 + $0x60] sm:$0xff]
    %v2879 = vld [vmem:[%s2865 + $0x68] sm:$0xff]
    %v2880 = vld [vmem:[%s2865 + $0x70] sm:$0xff]
    %v2881 = vld [vmem:[%s2865 + $0x78] sm:$0xff]
    %v2882 = vld [vmem:[%s2865 + $0x80] sm:$0xff]
    %v2883 = vld [vmem:[%s2865 + $0x88] sm:$0xff]
    %v2884 = vld [vmem:[%s2865 + $0x90] sm:$0xff]
    %v2885 = vld [vmem:[%s2865 + $0x98] sm:$0xff]
    %v2886 = vld [vmem:[%s2865 + $0xa0] sm:$0xff]
    %v2887 = vld [vmem:[%s2865 + $0xa8] sm:$0xff]
    %v2888 = vld [vmem:[%s2865 + $0xb0] sm:$0xff]
    %v2889 = vld [vmem:[%s2865 + $0xb8] sm:$0xff]
    %v2890 = vld [vmem:[%s2865 + $0xc0] sm:$0xff]
    %v2891 = vld [vmem:[%s2865 + $0xc8] sm:$0xff]
    %v2892 = vld [vmem:[%s2865 + $0xd0] sm:$0xff]
    %v2893 = vld [vmem:[%s2865 + $0xd8] sm:$0xff]
    %v2894 = vld [vmem:[%s2865 + $0xe0] sm:$0xff]
    %v2895 = vld [vmem:[%s2865 + $0xe8] sm:$0xff]
    %v2896 = vld [vmem:[%s2865 + $0xf0] sm:$0xff]
    %v2897 = vld [vmem:[%s2865 + $0xf8] sm:$0xff]
    %v2902 = vrot.slane %v2861, 4
    %v2903 = vrot.slane %v2600, 4
    %v2904 = vsel %vm1090, %v2902, %v2903
    %v2905 = vrot.slane %v2862, 4
    %v2906 = vrot.slane %v2601, 4
    %v2907 = vsel %vm1090, %v2905, %v2906
    %v2908 = vrot.slane %v2602, 4
    %v2909 = vsel %vm1090, %v2903, %v2908
    %v2910 = vrot.slane %v2603, 4
    %v2911 = vsel %vm1090, %v2906, %v2910
    %v2912 = vrot.slane %v2863, 4
    %v2913 = vsel %vm1090, %v2908, %v2912
    %v2914 = vrot.slane %v2864, 4
    %v2915 = vsel %vm1090, %v2910, %v2914
    %2924 = vmatpush.msra.mxu0 %v2881
    %2925 = vmatpush.msra.mxu0 %v2880
    %2926 = vmatpush.msra.mxu0 %v2879
    %2927 = vmatpush.msra.mxu0 %v2878
    %2928 = vmatpush.msra.mxu0 %v2877
    %2929 = vmatpush.msra.mxu0 %v2876
    %2930 = vmatpush.msra.mxu0 %v2875
    %2931 = vmatpush.msra.mxu0 %v2874
    %2932 = vmatpush.msra.mxu0 %v2873
    %2933 = vmatpush.msra.mxu0 %v2872
    %2934 = vmatpush.msra.mxu0 %v2871
    %2935 = vmatpush.msra.mxu0 %v2870
    %2936 = vmatpush.msra.mxu0 %v2869
    %2937 = vmatpush.msra.mxu0 %v2868
    %2938 = vmatpush.msra.mxu0 %v2867
    %2939 = vmatpush.msra.mxu0 %v2866
    %2940 = vmatmul.f32.gmra.mxu0 %v2904
    %v2941 = vpop.f32.mrf.mxu0
    %v2942 = vadd.f32 0.0, %v2941
    %2943 = vmatmul.f32.gmra.mxu0 %v2909
    %v2944 = vpop.f32.mrf.mxu0
    %v2945 = vadd.f32 0.0, %v2944
    %2946 = vmatmul.f32.gmra.mxu0 %v2913
    %v2947 = vpop.f32.mrf.mxu0
    %v2948 = vadd.f32 0.0, %v2947
    %2949 = vmatmul.f32.gmra.mxu0 %v2912
    %v2950 = vpop.f32.mrf.mxu0
    %v2951 = vadd.f32 0.0, %v2950
    %2952 = vdwg.mxu0
    %2953 = vmatpush.msra.mxu0 %v2897
    %2954 = vmatpush.msra.mxu0 %v2896
    %2955 = vmatpush.msra.mxu0 %v2895
    %2956 = vmatpush.msra.mxu0 %v2894
    %2957 = vmatpush.msra.mxu0 %v2893
    %2958 = vmatpush.msra.mxu0 %v2892
    %2959 = vmatpush.msra.mxu0 %v2891
    %2960 = vmatpush.msra.mxu0 %v2890
    %2961 = vmatpush.msra.mxu0 %v2889
    %2962 = vmatpush.msra.mxu0 %v2888
    %2963 = vmatpush.msra.mxu0 %v2887
    %2964 = vmatpush.msra.mxu0 %v2886
    %2965 = vmatpush.msra.mxu0 %v2885
    %2966 = vmatpush.msra.mxu0 %v2884
    %2967 = vmatpush.msra.mxu0 %v2883
    %2968 = vmatpush.msra.mxu0 %v2882
    %2969 = vmatmul.f32.gmra.mxu0 %v2907
    %v2970 = vpop.f32.mrf.mxu0
    %v2971 = vadd.f32 %v2942, %v2970
    %2972 = vmatmul.f32.gmra.mxu0 %v2911
    %v2973 = vpop.f32.mrf.mxu0
    %v2974 = vadd.f32 %v2945, %v2973
    %2975 = vmatmul.f32.gmra.mxu0 %v2915
    %v2976 = vpop.f32.mrf.mxu0
    %v2977 = vadd.f32 %v2948, %v2976
    %2978 = vmatmul.f32.gmra.mxu0 %v2914
    %v2979 = vpop.f32.mrf.mxu0
    %v2980 = vadd.f32 %v2951, %v2979
    %2981 = vdwg.mxu0
    %2982 = vmatpush.msra.mxu0 %v2844
    %2983 = vmatpush.msra.mxu0 %v2843
    %2984 = vmatpush.msra.mxu0 %v2842
    %2985 = vmatpush.msra.mxu0 %v2841
    %2986 = vmatpush.msra.mxu0 %v2840
    %2987 = vmatpush.msra.mxu0 %v2839
    %2988 = vmatpush.msra.mxu0 %v2838
    %2989 = vmatpush.msra.mxu0 %v2837
    %2990 = vmatpush.msra.mxu0 %v2836
    %2991 = vmatpush.msra.mxu0 %v2835
    %2992 = vmatpush.msra.mxu0 %v2834
    %2993 = vmatpush.msra.mxu0 %v2833
    %2994 = vmatpush.msra.mxu0 %v2832
    %2995 = vmatpush.msra.mxu0 %v2831
    %2996 = vmatpush.msra.mxu0 %v2830
    %2997 = vmatpush.msra.mxu0 %v2829
    %2998 = vmatmul.f32.gmra.mxu0 %v2685
    %v2999 = vpop.f32.mrf.mxu0
    %v3000 = vadd.f32 %v2971, %v2999
    %3001 = vmatmul.f32.gmra.mxu0 %v2690
    %v3002 = vpop.f32.mrf.mxu0
    %v3003 = vadd.f32 %v2974, %v3002
    %3004 = vmatmul.f32.gmra.mxu0 %v2694
    %v3005 = vpop.f32.mrf.mxu0
    %v3006 = vadd.f32 %v2977, %v3005
    %3007 = vmatmul.f32.gmra.mxu0 %v2693
    %v3008 = vpop.f32.mrf.mxu0
    %v3009 = vadd.f32 %v2980, %v3008
    %3010 = vdwg.mxu0
    %3011 = vmatpush.msra.mxu0 %v2860
    %3012 = vmatpush.msra.mxu0 %v2859
    %3013 = vmatpush.msra.mxu0 %v2858
    %3014 = vmatpush.msra.mxu0 %v2857
    %3015 = vmatpush.msra.mxu0 %v2856
    %3016 = vmatpush.msra.mxu0 %v2855
    %3017 = vmatpush.msra.mxu0 %v2854
    %3018 = vmatpush.msra.mxu0 %v2853
    %3019 = vmatpush.msra.mxu0 %v2852
    %3020 = vmatpush.msra.mxu0 %v2851
    %3021 = vmatpush.msra.mxu0 %v2850
    %3022 = vmatpush.msra.mxu0 %v2849
    %3023 = vmatpush.msra.mxu0 %v2848
    %3024 = vmatpush.msra.mxu0 %v2847
    %3025 = vmatpush.msra.mxu0 %v2846
    %3026 = vmatpush.msra.mxu0 %v2845
    %3027 = vmatmul.f32.gmra.mxu0 %v2688
    %v3028 = vpop.f32.mrf.mxu0
    %v3029 = vadd.f32 %v3000, %v3028
    %3030 = vmatmul.f32.gmra.mxu0 %v2692
    %v3031 = vpop.f32.mrf.mxu0
    %v3032 = vadd.f32 %v3003, %v3031
    %3033 = vmatmul.f32.gmra.mxu0 %v2696
    %v3034 = vpop.f32.mrf.mxu0
    %v3035 = vadd.f32 %v3006, %v3034
    %3036 = vmatmul.f32.gmra.mxu0 %v2695
    %v3037 = vpop.f32.mrf.mxu0
    %v3038 = vadd.f32 %v3009, %v3037
    %3039 = vdwg.mxu0
    %v3040 = vadd.f32 %v3029, %v2822
    %v3041 = vadd.f32 %v3032, %v2822
    %v3042 = vadd.f32 %v3035, %v2822
    %v3043 = vadd.f32 %v3038, %v2822
    %v3044 = vtanh.pop %v2824
    %v3045 = vtanh.pop %v2825
    %v3046 = vtanh.pop %v2826
    %v3047 = vtanh.pop %v2827
    %v3048 = vtanh.pop %v3040
    %v3049 = vtanh.pop %v3041
    %v3050 = vtanh.pop %v3042
    %v3051 = vtanh.pop %v3043
    %vm3052 = vcmask 680960
    %3053 = vst.msk [vmem:[%s14] sm:$0x3] %vm3052, %v3044
    %vm3054 = vcmask 683010
    %3055 = vst.msk [vmem:[%s14 + $0x2] sm:$0xc] %vm3054, %v3044
    %vm3056 = vcmask 685060
    %3057 = vst.msk [vmem:[%s14 + $0x4] sm:$0x30] %vm3056, %v3044
    %vm3058 = vcmask 687110
    %3059 = vst.msk [vmem:[%s14 + $0x6] sm:$0xc0] %vm3058, %v3044
    %3060 = vst.msk [vmem:[%s14 + $0x10] sm:$0x3] %vm3052, %v3045
    %3061 = vst.msk [vmem:[%s14 + $0x12] sm:$0xc] %vm3054, %v3045
    %3062 = vst.msk [vmem:[%s14 + $0x14] sm:$0x30] %vm3056, %v3045
    %3063 = vst.msk [vmem:[%s14 + $0x16] sm:$0xc0] %vm3058, %v3045
    %3064 = vst.msk [vmem:[%s14 + $0x20] sm:$0x3] %vm3052, %v3046
    %3065 = vst.msk [vmem:[%s14 + $0x22] sm:$0xc] %vm3054, %v3046
    %3066 = vst.msk [vmem:[%s14 + $0x24] sm:$0x30] %vm3056, %v3046
    %3067 = vst.msk [vmem:[%s14 + $0x26] sm:$0xc0] %vm3058, %v3046
    %3068 = vst.msk [vmem:[%s14 + $0x30] sm:$0x3] %vm3052, %v3047
    %3069 = vst.msk [vmem:[%s14 + $0x32] sm:$0xc] %vm3054, %v3047
    %3070 = vst.msk [vmem:[%s14 + $0x2] sm:$0x3] %vm3052, %v3048
    %3071 = vst.msk [vmem:[%s14 + $0x4] sm:$0xc] %vm3054, %v3048
    %3072 = vst.msk [vmem:[%s14 + $0x6] sm:$0x30] %vm3056, %v3048
    %3073 = vst.msk [vmem:[%s14 + $0x8] sm:$0xc0] %vm3058, %v3048
    %3074 = vst.msk [vmem:[%s14 + $0x12] sm:$0x3] %vm3052, %v3049
    %3075 = vst.msk [vmem:[%s14 + $0x14] sm:$0xc] %vm3054, %v3049
    %3076 = vst.msk [vmem:[%s14 + $0x16] sm:$0x30] %vm3056, %v3049
    %3077 = vst.msk [vmem:[%s14 + $0x18] sm:$0xc0] %vm3058, %v3049
    %3078 = vst.msk [vmem:[%s14 + $0x22] sm:$0x3] %vm3052, %v3050
    %3079 = vst.msk [vmem:[%s14 + $0x24] sm:$0xc] %vm3054, %v3050
    %3080 = vst.msk [vmem:[%s14 + $0x26] sm:$0x30] %vm3056, %v3050
    %3081 = vst.msk [vmem:[%s14 + $0x28] sm:$0xc0] %vm3058, %v3050
    %3082 = vst.msk [vmem:[%s14 + $0x32] sm:$0x3] %vm3052, %v3051
    %3083 = vst.msk [vmem:[%s14 + $0x34] sm:$0xc] %vm3054, %v3051
    // Predicated region
    $region66: #{generator_forward.1} parent=1 // pred_check
      _
    $region67: #{generator_forward.1} parent=1 // pred_check_branch
      %3085 = sbr.rel (0) target = $region69
    $region68: #{generator_forward.1} parent=1 // pred_region
      _
    $region69: #{generator_forward.1} parent=1 // pred_fallthru
      _
    // Predicated region
    $region70: #{generator_forward.1} parent=1 // pred_check
      _
    $region71: #{generator_forward.1} parent=1 // pred_check_branch
      %3087 = sbr.rel (0) target = $region73
    $region72: #{generator_forward.1} parent=1 // pred_region
      _
    $region73: #{generator_forward.1} parent=1 // pred_fallthru
      _
    %3088 = vsyncpa [#allocation6], 1
    %3089 = vsyncpa [#allocation8], 1

</llo_original>
